<compile_context>
chip_gen: v7x
topology: tpu7x:2x2x1
jax: 0.10.0
libtpu: 0.0.40
codegen_flags: <defaults>
</compile_context>

<pallas_src>
import jax
import jax.numpy as jnp
from jax import lax
from jax.experimental import pallas as pl
from jax.experimental.pallas import tpu as pltpu

K = 5  # conv kernel size for both conv layers


# ---------------------------------------------------------------------------
# Pallas kernels
# ---------------------------------------------------------------------------
def _conv_tanh_pool_kernel(p_ref, w_ref, b_ref, o_ref):
    # p_ref: (4, Bt*M, F) bf16 -- 4 pool-window offsets, batch folded into M
    # w_ref: (F, Cout)    bf16 -- conv weight reshaped for matmul
    # b_ref: (1, Cout)    f32
    # o_ref: (Bt*M, Cout) bf16 -- pooled, tanh-activated conv output
    w = w_ref[...]
    # max over the pool window BEFORE bias + tanh (exact since tanh is monotone):
    # one transcendental + one broadcast-add per output element instead of four.
    z = jnp.dot(p_ref[0], w, preferred_element_type=jnp.float32)
    for q in range(1, 4):  # static unroll over the remaining pool offsets
        z = jnp.maximum(z, jnp.dot(p_ref[q], w, preferred_element_type=jnp.float32))
    o_ref[...] = jnp.tanh(z + b_ref[...]).astype(o_ref.dtype)


def _fc_kernel(x_ref, w1_ref, b1_ref, w2_ref, b2_ref, y_ref, h_ref):
    # x_ref: (Bt, 400) bf16   w1_ref: (400,128) bf16   b1_ref: (1,128) f32
    # w2_ref: (128,128) bf16 (fc2 padded 100->128)     b2_ref: (1,128) f32
    # y_ref: (Bt,128) f32 padded logits                h_ref: (Bt,128) f32 hidden
    h = jnp.tanh(
        jnp.dot(x_ref[...], w1_ref[...], preferred_element_type=jnp.float32)
        + b1_ref[...]
    )
    h_ref[...] = h
    y_ref[...] = (
        jnp.dot(h.astype(w2_ref.dtype), w2_ref[...],
                preferred_element_type=jnp.float32)
        + b2_ref[...]
    )


# ---------------------------------------------------------------------------
# Glue: im2col with the (non-overlapping) 2x2 pool window as a leading axis
# ---------------------------------------------------------------------------
def _im2col_pool(f):
    # f: (N, H, W, C) -> (4, N*Po*Pw, C*K*K), Po=(H-K+1)//2, Pw=(W-K+1)//2.
    # Feature ordering matches weight.reshape(Cout, Cin*K*K): ci*K*K + kh*K + kw.
    N, H, W, C = f.shape
    OH, OW = H - K + 1, W - K + 1
    Po, Pw = OH // 2, OW // 2
    pats = []
    for di in range(2):
        for dj in range(2):
            cols = []
            for kh in range(K):
                for kw in range(K):
                    sub = f[:, di + kh: di + kh + 2 * Po: 2,
                              dj + kw: dj + kw + 2 * Pw: 2, :]    # (N,Po,Pw,C)
                    cols.append(sub)
            col = jnp.stack(cols, axis=-1)                         # (N,Po,Pw,C,K*K)
            pats.append(col.reshape(N * Po * Pw, C * K * K))
    return jnp.stack(pats, axis=0), Po, Pw


# ---------------------------------------------------------------------------
# Pallas-call wrappers
# ---------------------------------------------------------------------------
def _batch_tile(n, m, cap):
    # Largest divisor b of n with b <= cap and (b*m) % 8 == 0 (sublane-aligned
    # block rows).  Falls back to a full-array block, which is always legal.
    for b in range(min(n, cap), 0, -1):
        if n % b == 0 and (b * m) % 8 == 0:
            return b
    return n


def conv_tanh_pool(patches, w2d, b, m_per_img, cap):
    # patches: (4, N*M, F) bf16; w2d: (F, Cout) bf16; b: (1, Cout) f32
    # returns (N*M, Cout) bf16  (rows ordered (image, pooled position))
    _, nm, f_dim = patches.shape
    n = nm // m_per_img
    cout = w2d.shape[1]
    bt = _batch_tile(n, m_per_img, cap)
    rows = bt * m_per_img
    return pl.pallas_call(
        _conv_tanh_pool_kernel,
        out_shape=jax.ShapeDtypeStruct((nm, cout), jnp.bfloat16),
        grid=(n // bt,),
        in_specs=[
            pl.BlockSpec((4, rows, f_dim), lambda i: (0, i, 0)),
            pl.BlockSpec((f_dim, cout), lambda i: (0, 0)),
            pl.BlockSpec((1, cout), lambda i: (0, 0)),
        ],
        out_specs=pl.BlockSpec((rows, cout), lambda i: (i, 0)),
        compiler_params=pltpu.CompilerParams(dimension_semantics=("parallel",)),
    )(patches, w2d, b)


def fc_head(x, w1t, b1, w2p, b2p, cap=256):
    # x: (N, 400) bf16 -> (padded logits (N,128) f32, hidden (N,128) f32)
    n, f_in = x.shape
    bt = _batch_tile(n, 1, cap)
    return pl.pallas_call(
        _fc_kernel,
        out_shape=(
            jax.ShapeDtypeStruct((n, 128), jnp.float32),
            jax.ShapeDtypeStruct((n, 128), jnp.float32),
        ),
        grid=(n // bt,),
        in_specs=[
            pl.BlockSpec((bt, f_in), lambda i: (i, 0)),
            pl.BlockSpec((f_in, 128), lambda i: (0, 0)),
            pl.BlockSpec((1, 128), lambda i: (0, 0)),
            pl.BlockSpec((128, 128), lambda i: (0, 0)),
            pl.BlockSpec((1, 128), lambda i: (0, 0)),
        ],
        out_specs=(
            pl.BlockSpec((bt, 128), lambda i: (i, 0)),
            pl.BlockSpec((bt, 128), lambda i: (i, 0)),
        ),
        compiler_params=pltpu.CompilerParams(dimension_semantics=("parallel",)),
    )(x, w1t, b1, w2p, b2p)


# ---------------------------------------------------------------------------
# Model: parameters + forward
# ---------------------------------------------------------------------------
def init_params(key):
    ks = jax.random.split(key, 8)

    def u(k, shape, fan_in):
        bound = 1.0 / jnp.sqrt(jnp.float32(fan_in))
        return jax.random.uniform(k, shape, jnp.float32, -bound, bound)

    return dict(
        conv1_w=u(ks[0], (6, 3, K, K), 3 * K * K),
        conv1_b=u(ks[1], (6,), 3 * K * K),
        conv2_w=u(ks[2], (16, 6, K, K), 6 * K * K),
        conv2_b=u(ks[3], (16,), 6 * K * K),
        fc1_w=u(ks[4], (128, 16 * 5 * 5), 16 * 5 * 5),
        fc1_b=u(ks[5], (128,), 16 * 5 * 5),
        fc2_w=u(ks[6], (100, 128), 128),
        fc2_b=u(ks[7], (100,), 128),
    )


def _prep_kernel_params(p):
    # bf16 matmul operands (f32 accumulation in-kernel), f32 biases.
    w1 = p["conv1_w"].reshape(6, -1).T.astype(jnp.bfloat16)          # (75, 6)
    w2 = p["conv2_w"].reshape(16, -1).T.astype(jnp.bfloat16)         # (150, 16)
    # fc1 weight rows permuted from PyTorch (c,h,w) flatten order to NHWC
    # (h,w,c) order so the conv2 output never needs a transpose.
    wf1 = (p["fc1_w"].reshape(128, 16, 5, 5)
           .transpose(0, 2, 3, 1).reshape(128, 400).T
           .astype(jnp.bfloat16))                                    # (400, 128)
    # fc2 padded 100 -> 128 output lanes (sliced back outside the kernel).
    wf2 = jnp.zeros((128, 128), jnp.float32).at[:, :100].set(p["fc2_w"].T)
    bf2 = jnp.zeros((1, 128), jnp.float32).at[:, :100].set(p["fc2_b"][None, :])
    return dict(
        w1=w1, b1=p["conv1_b"][None, :],
        w2=w2, b2=p["conv2_b"][None, :],
        wf1=wf1, bf1=p["fc1_b"][None, :],
        wf2=wf2.astype(jnp.bfloat16), bf2=bf2,
    )


def net_forward(x_nchw, p):
    n = x_nchw.shape[0]
    kp = _prep_kernel_params(p)
    f = jnp.transpose(x_nchw, (0, 2, 3, 1)).astype(jnp.bfloat16)     # NCHW -> NHWC

    # conv1 + tanh + maxpool(2,2): (N,32,32,3) -> rows (N*196, 6)
    pat1, po1, pw1 = _im2col_pool(f)                                 # (4, N*196, 75)
    y1 = conv_tanh_pool(pat1, kp["w1"], kp["b1"], po1 * pw1, cap=32)
    f1 = y1.reshape(n, po1, pw1, 6)                                  # (N,14,14,6)

    # conv2 + tanh + maxpool(2,2): (N,14,14,6) -> rows (N*25, 16)
    pat2, po2, pw2 = _im2col_pool(f1)                                # (4, N*25, 150)
    y2 = conv_tanh_pool(pat2, kp["w2"], kp["b2"], po2 * pw2, cap=128)

    # NHWC flatten (fc1 weight was permuted to match) -> (N, 400); free reshape.
    feat = y2.reshape(n, po2 * pw2 * 16)

    logits_pad, h = fc_head(feat, kp["wf1"], kp["bf1"], kp["wf2"], kp["bf2"])
    return logits_pad[:, :100], h


# Pure-JAX f32 reference (mirrors the PyTorch forward exactly), for verification.
def net_forward_ref(x, p):
    dn = ("NCHW", "OIHW", "NCHW")
    y = lax.conv_general_dilated(x, p["conv1_w"], (1, 1), "VALID", dimension_numbers=dn)
    y = jnp.tanh(y + p["conv1_b"][None, :, None, None])
    y = lax.reduce_window(y, -jnp.inf, lax.max, (1, 1, 2, 2), (1, 1, 2, 2), "VALID")
    y = lax.conv_general_dilated(y, p["conv2_w"], (1, 1), "VALID", dimension_numbers=dn)
    y = jnp.tanh(y + p["conv2_b"][None, :, None, None])
    y = lax.reduce_window(y, -jnp.inf, lax.max, (1, 1, 2, 2), (1, 1, 2, 2), "VALID")
    feat = y.reshape(y.shape[0], -1)
    h = jnp.tanh(feat @ p["fc1_w"].T + p["fc1_b"])
    return h @ p["fc2_w"].T + p["fc2_b"], h


if __name__ == "__main__":
    key = jax.random.PRNGKey(0)
    kx, kp = jax.random.split(key)
    # CIFAR-style input: the module's view(-1, 16*5*5) requires 32x32 spatial.
    x = jax.random.normal(kx, (2, 3, 32, 32), dtype=jnp.float32)
    params = init_params(kp)

    logits, h = jax.jit(net_forward)(x, params)
    jax.block_until_ready((logits, h))

    assert logits.shape == (2, 100) and h.shape == (2, 128)

    ref_logits, ref_h = net_forward_ref(x, params)
    assert jnp.allclose(logits, ref_logits, atol=5e-2, rtol=0.0), "logits mismatch"
    assert jnp.allclose(h, ref_h, atol=5e-2, rtol=0.0), "hidden mismatch"

    print("KERNEL_OK")
</pallas_src>

<mosaic_0001>
module attributes {stable_mosaic.version = 11 : i64} {
  func.func @_conv_tanh_pool_kernel(%arg0: i32, %arg1: memref<4x392x75xbf16, #tpu.memory_space<vmem>>, %arg2: memref<75x6xbf16, #tpu.memory_space<vmem>>, %arg3: memref<1x6xf32, #tpu.memory_space<vmem>>, %arg4: memref<392x6xbf16, #tpu.memory_space<vmem>>) attributes {dimension_semantics = [#tpu.dimension_semantics<parallel>], iteration_bounds = array<i64: 1>, scalar_prefetch = 0 : i64, scratch_operands = 0 : i64, tpu.core_type = #tpu.core_type<tc>, window_params = [{transform_indices = @transform_0, window_bounds = array<i64: 4, 392, 75>}, {pipeline_mode = #tpu.pipeline_mode<synchronous>, transform_indices = @transform_1, window_bounds = array<i64: 75, 6>}, {pipeline_mode = #tpu.pipeline_mode<synchronous>, transform_indices = @transform_2, window_bounds = array<i64: 1, 6>}, {transform_indices = @transform_3, window_bounds = array<i64: 392, 6>}]} {
    %c0 = arith.constant 0 : index
    %c0_0 = arith.constant 0 : index
    %0 = vector.load %arg2[%c0, %c0_0] : memref<75x6xbf16, #tpu.memory_space<vmem>>, vector<75x6xbf16>
    %c0_1 = arith.constant 0 : index
    %c0_2 = arith.constant 0 : index
    %c0_3 = arith.constant 0 : index
    %1 = vector.load %arg1[%c0_1, %c0_2, %c0_3] : memref<4x392x75xbf16, #tpu.memory_space<vmem>>, vector<1x392x75xbf16>
    %2 = vector.shape_cast %1 : vector<1x392x75xbf16> to vector<392x75xbf16>
    %cst = arith.constant dense<0.000000e+00> : vector<392x6xf32>
    %3 = tpu.matmul %2, %0, %cst {dimension_numbers = #tpu.dot_dimension_numbers<[1], [0], [0], [1], [0, 0, 1, 1], [], []>} : vector<392x75xbf16>, vector<75x6xbf16>, vector<392x6xf32> -> vector<392x6xf32>
    %c1 = arith.constant 1 : index
    %c0_4 = arith.constant 0 : index
    %c0_5 = arith.constant 0 : index
    %4 = vector.load %arg1[%c1, %c0_4, %c0_5] : memref<4x392x75xbf16, #tpu.memory_space<vmem>>, vector<1x392x75xbf16>
    %5 = vector.shape_cast %4 : vector<1x392x75xbf16> to vector<392x75xbf16>
    %cst_6 = arith.constant dense<0.000000e+00> : vector<392x6xf32>
    %6 = tpu.matmul %5, %0, %cst_6 {dimension_numbers = #tpu.dot_dimension_numbers<[1], [0], [0], [1], [0, 0, 1, 1], [], []>} : vector<392x75xbf16>, vector<75x6xbf16>, vector<392x6xf32> -> vector<392x6xf32>
    %7 = arith.maximumf %3, %6 : vector<392x6xf32>
    %c2 = arith.constant 2 : index
    %c0_7 = arith.constant 0 : index
    %c0_8 = arith.constant 0 : index
    %8 = vector.load %arg1[%c2, %c0_7, %c0_8] : memref<4x392x75xbf16, #tpu.memory_space<vmem>>, vector<1x392x75xbf16>
    %9 = vector.shape_cast %8 : vector<1x392x75xbf16> to vector<392x75xbf16>
    %cst_9 = arith.constant dense<0.000000e+00> : vector<392x6xf32>
    %10 = tpu.matmul %9, %0, %cst_9 {dimension_numbers = #tpu.dot_dimension_numbers<[1], [0], [0], [1], [0, 0, 1, 1], [], []>} : vector<392x75xbf16>, vector<75x6xbf16>, vector<392x6xf32> -> vector<392x6xf32>
    %11 = arith.maximumf %7, %10 : vector<392x6xf32>
    %c3 = arith.constant 3 : index
    %c0_10 = arith.constant 0 : index
    %c0_11 = arith.constant 0 : index
    %12 = vector.load %arg1[%c3, %c0_10, %c0_11] : memref<4x392x75xbf16, #tpu.memory_space<vmem>>, vector<1x392x75xbf16>
    %13 = vector.shape_cast %12 : vector<1x392x75xbf16> to vector<392x75xbf16>
    %cst_12 = arith.constant dense<0.000000e+00> : vector<392x6xf32>
    %14 = tpu.matmul %13, %0, %cst_12 {dimension_numbers = #tpu.dot_dimension_numbers<[1], [0], [0], [1], [0, 0, 1, 1], [], []>} : vector<392x75xbf16>, vector<75x6xbf16>, vector<392x6xf32> -> vector<392x6xf32>
    %15 = arith.maximumf %11, %14 : vector<392x6xf32>
    %c0_13 = arith.constant 0 : index
    %c0_14 = arith.constant 0 : index
    %16 = vector.load %arg3[%c0_13, %c0_14] : memref<1x6xf32, #tpu.memory_space<vmem>>, vector<1x6xf32>
    %17 = vector.broadcast %16 : vector<1x6xf32> to vector<392x6xf32>
    %18 = arith.addf %15, %17 : vector<392x6xf32>
    %19 = math.tanh %18 : vector<392x6xf32>
    %20 = arith.truncf %19 : vector<392x6xf32> to vector<392x6xbf16>
    %c0_15 = arith.constant 0 : index
    %c0_16 = arith.constant 0 : index
    %21 = vector.load %arg4[%c0_15, %c0_16] : memref<392x6xbf16, #tpu.memory_space<vmem>>, vector<392x6xbf16>
    tpu.vector_store %arg4[%c0_15, %c0_16], %20 {strides = array<i32>} : memref<392x6xbf16, #tpu.memory_space<vmem>>, vector<392x6xbf16>,
    return
  }
  func.func @transform_0(%arg0: i32) -> (i32, i32, i32) {
    %c0_i32 = arith.constant 0 : i32
    %c0_i32_0 = arith.constant 0 : i32
    %c0_i32_1 = arith.constant 0 : i32
    return %c0_i32, %arg0, %c0_i32_0 : i32, i32, i32
  }
  func.func @transform_1(%arg0: i32) -> (i32, i32) {
    %c0_i32 = arith.constant 0 : i32
    %c0_i32_0 = arith.constant 0 : i32
    %c0_i32_1 = arith.constant 0 : i32
    return %c0_i32, %c0_i32_0 : i32, i32
  }
  func.func @transform_2(%arg0: i32) -> (i32, i32) {
    %c0_i32 = arith.constant 0 : i32
    %c0_i32_0 = arith.constant 0 : i32
    %c0_i32_1 = arith.constant 0 : i32
    return %c0_i32, %c0_i32_0 : i32, i32
  }
  func.func @transform_3(%arg0: i32) -> (i32, i32) {
    %c0_i32 = arith.constant 0 : i32
    %c0_i32_0 = arith.constant 0 : i32
    return %arg0, %c0_i32 : i32, i32
  }
}

module attributes {stable_mosaic.version = 11 : i64} {
  func.func @_conv_tanh_pool_kernel(%arg0: i32, %arg1: memref<4x50x150xbf16, #tpu.memory_space<vmem>>, %arg2: memref<150x16xbf16, #tpu.memory_space<vmem>>, %arg3: memref<1x16xf32, #tpu.memory_space<vmem>>, %arg4: memref<50x16xbf16, #tpu.memory_space<vmem>>) attributes {dimension_semantics = [#tpu.dimension_semantics<parallel>], iteration_bounds = array<i64: 1>, scalar_prefetch = 0 : i64, scratch_operands = 0 : i64, tpu.core_type = #tpu.core_type<tc>, window_params = [{transform_indices = @transform_0, window_bounds = array<i64: 4, 50, 150>}, {pipeline_mode = #tpu.pipeline_mode<synchronous>, transform_indices = @transform_1, window_bounds = array<i64: 150, 16>}, {pipeline_mode = #tpu.pipeline_mode<synchronous>, transform_indices = @transform_2, window_bounds = array<i64: 1, 16>}, {transform_indices = @transform_3, window_bounds = array<i64: 50, 16>}]} {
    %c0 = arith.constant 0 : index
    %c0_0 = arith.constant 0 : index
    %0 = vector.load %arg2[%c0, %c0_0] : memref<150x16xbf16, #tpu.memory_space<vmem>>, vector<150x16xbf16>
    %c0_1 = arith.constant 0 : index
    %c0_2 = arith.constant 0 : index
    %c0_3 = arith.constant 0 : index
    %1 = vector.load %arg1[%c0_1, %c0_2, %c0_3] : memref<4x50x150xbf16, #tpu.memory_space<vmem>>, vector<1x50x150xbf16>
    %2 = vector.shape_cast %1 : vector<1x50x150xbf16> to vector<50x150xbf16>
    %cst = arith.constant dense<0.000000e+00> : vector<50x16xf32>
    %3 = tpu.matmul %2, %0, %cst {dimension_numbers = #tpu.dot_dimension_numbers<[1], [0], [0], [1], [0, 0, 1, 1], [], []>} : vector<50x150xbf16>, vector<150x16xbf16>, vector<50x16xf32> -> vector<50x16xf32>
    %c1 = arith.constant 1 : index
    %c0_4 = arith.constant 0 : index
    %c0_5 = arith.constant 0 : index
    %4 = vector.load %arg1[%c1, %c0_4, %c0_5] : memref<4x50x150xbf16, #tpu.memory_space<vmem>>, vector<1x50x150xbf16>
    %5 = vector.shape_cast %4 : vector<1x50x150xbf16> to vector<50x150xbf16>
    %cst_6 = arith.constant dense<0.000000e+00> : vector<50x16xf32>
    %6 = tpu.matmul %5, %0, %cst_6 {dimension_numbers = #tpu.dot_dimension_numbers<[1], [0], [0], [1], [0, 0, 1, 1], [], []>} : vector<50x150xbf16>, vector<150x16xbf16>, vector<50x16xf32> -> vector<50x16xf32>
    %7 = arith.maximumf %3, %6 : vector<50x16xf32>
    %c2 = arith.constant 2 : index
    %c0_7 = arith.constant 0 : index
    %c0_8 = arith.constant 0 : index
    %8 = vector.load %arg1[%c2, %c0_7, %c0_8] : memref<4x50x150xbf16, #tpu.memory_space<vmem>>, vector<1x50x150xbf16>
    %9 = vector.shape_cast %8 : vector<1x50x150xbf16> to vector<50x150xbf16>
    %cst_9 = arith.constant dense<0.000000e+00> : vector<50x16xf32>
    %10 = tpu.matmul %9, %0, %cst_9 {dimension_numbers = #tpu.dot_dimension_numbers<[1], [0], [0], [1], [0, 0, 1, 1], [], []>} : vector<50x150xbf16>, vector<150x16xbf16>, vector<50x16xf32> -> vector<50x16xf32>
    %11 = arith.maximumf %7, %10 : vector<50x16xf32>
    %c3 = arith.constant 3 : index
    %c0_10 = arith.constant 0 : index
    %c0_11 = arith.constant 0 : index
    %12 = vector.load %arg1[%c3, %c0_10, %c0_11] : memref<4x50x150xbf16, #tpu.memory_space<vmem>>, vector<1x50x150xbf16>
    %13 = vector.shape_cast %12 : vector<1x50x150xbf16> to vector<50x150xbf16>
    %cst_12 = arith.constant dense<0.000000e+00> : vector<50x16xf32>
    %14 = tpu.matmul %13, %0, %cst_12 {dimension_numbers = #tpu.dot_dimension_numbers<[1], [0], [0], [1], [0, 0, 1, 1], [], []>} : vector<50x150xbf16>, vector<150x16xbf16>, vector<50x16xf32> -> vector<50x16xf32>
    %15 = arith.maximumf %11, %14 : vector<50x16xf32>
    %c0_13 = arith.constant 0 : index
    %c0_14 = arith.constant 0 : index
    %16 = vector.load %arg3[%c0_13, %c0_14] : memref<1x16xf32, #tpu.memory_space<vmem>>, vector<1x16xf32>
    %17 = vector.broadcast %16 : vector<1x16xf32> to vector<50x16xf32>
    %18 = arith.addf %15, %17 : vector<50x16xf32>
    %19 = math.tanh %18 : vector<50x16xf32>
    %20 = arith.truncf %19 : vector<50x16xf32> to vector<50x16xbf16>
    %c0_15 = arith.constant 0 : index
    %c0_16 = arith.constant 0 : index
    %21 = vector.load %arg4[%c0_15, %c0_16] : memref<50x16xbf16, #tpu.memory_space<vmem>>, vector<50x16xbf16>
    tpu.vector_store %arg4[%c0_15, %c0_16], %20 {strides = array<i32>} : memref<50x16xbf16, #tpu.memory_space<vmem>>, vector<50x16xbf16>,
    return
  }
  func.func @transform_0(%arg0: i32) -> (i32, i32, i32) {
    %c0_i32 = arith.constant 0 : i32
    %c0_i32_0 = arith.constant 0 : i32
    %c0_i32_1 = arith.constant 0 : i32
    return %c0_i32, %arg0, %c0_i32_0 : i32, i32, i32
  }
  func.func @transform_1(%arg0: i32) -> (i32, i32) {
    %c0_i32 = arith.constant 0 : i32
    %c0_i32_0 = arith.constant 0 : i32
    %c0_i32_1 = arith.constant 0 : i32
    return %c0_i32, %c0_i32_0 : i32, i32
  }
  func.func @transform_2(%arg0: i32) -> (i32, i32) {
    %c0_i32 = arith.constant 0 : i32
    %c0_i32_0 = arith.constant 0 : i32
    %c0_i32_1 = arith.constant 0 : i32
    return %c0_i32, %c0_i32_0 : i32, i32
  }
  func.func @transform_3(%arg0: i32) -> (i32, i32) {
    %c0_i32 = arith.constant 0 : i32
    %c0_i32_0 = arith.constant 0 : i32
    return %arg0, %c0_i32 : i32, i32
  }
}

module attributes {stable_mosaic.version = 11 : i64} {
  func.func @_fc_kernel(%arg0: i32, %arg1: memref<2x400xbf16, #tpu.memory_space<vmem>>, %arg2: memref<400x128xbf16, #tpu.memory_space<vmem>>, %arg3: memref<1x128xf32, #tpu.memory_space<vmem>>, %arg4: memref<128x128xbf16, #tpu.memory_space<vmem>>, %arg5: memref<1x128xf32, #tpu.memory_space<vmem>>, %arg6: memref<2x128xf32, #tpu.memory_space<vmem>>, %arg7: memref<2x128xf32, #tpu.memory_space<vmem>>) attributes {dimension_semantics = [#tpu.dimension_semantics<parallel>], iteration_bounds = array<i64: 1>, scalar_prefetch = 0 : i64, scratch_operands = 0 : i64, tpu.core_type = #tpu.core_type<tc>, window_params = [{transform_indices = @transform_0, window_bounds = array<i64: 2, 400>}, {pipeline_mode = #tpu.pipeline_mode<synchronous>, transform_indices = @transform_1, window_bounds = array<i64: 400, 128>}, {pipeline_mode = #tpu.pipeline_mode<synchronous>, transform_indices = @transform_2, window_bounds = array<i64: 1, 128>}, {pipeline_mode = #tpu.pipeline_mode<synchronous>, transform_indices = @transform_3, window_bounds = array<i64: 128, 128>}, {pipeline_mode = #tpu.pipeline_mode<synchronous>, transform_indices = @transform_4, window_bounds = array<i64: 1, 128>}, {transform_indices = @transform_5, window_bounds = array<i64: 2, 128>}, {transform_indices = @transform_6, window_bounds = array<i64: 2, 128>}]} {
    %c0 = arith.constant 0 : index
    %c0_0 = arith.constant 0 : index
    %0 = vector.load %arg1[%c0, %c0_0] : memref<2x400xbf16, #tpu.memory_space<vmem>>, vector<2x400xbf16>
    %c0_1 = arith.constant 0 : index
    %c0_2 = arith.constant 0 : index
    %1 = vector.load %arg2[%c0_1, %c0_2] : memref<400x128xbf16, #tpu.memory_space<vmem>>, vector<400x128xbf16>
    %cst = arith.constant dense<0.000000e+00> : vector<2x128xf32>
    %2 = tpu.matmul %0, %1, %cst {dimension_numbers = #tpu.dot_dimension_numbers<[1], [0], [0], [1], [0, 0, 1, 1], [], []>} : vector<2x400xbf16>, vector<400x128xbf16>, vector<2x128xf32> -> vector<2x128xf32>
    %c0_3 = arith.constant 0 : index
    %c0_4 = arith.constant 0 : index
    %3 = vector.load %arg3[%c0_3, %c0_4] : memref<1x128xf32, #tpu.memory_space<vmem>>, vector<1x128xf32>
    %4 = vector.broadcast %3 : vector<1x128xf32> to vector<2x128xf32>
    %5 = arith.addf %2, %4 : vector<2x128xf32>
    %6 = math.tanh %5 : vector<2x128xf32>
    %c0_5 = arith.constant 0 : index
    %c0_6 = arith.constant 0 : index
    %7 = vector.load %arg7[%c0_5, %c0_6] : memref<2x128xf32, #tpu.memory_space<vmem>>, vector<2x128xf32>
    tpu.vector_store %arg7[%c0_5, %c0_6], %6 {strides = array<i32>} : memref<2x128xf32, #tpu.memory_space<vmem>>, vector<2x128xf32>,
    %8 = arith.truncf %6 : vector<2x128xf32> to vector<2x128xbf16>
    %c0_7 = arith.constant 0 : index
    %c0_8 = arith.constant 0 : index
    %9 = vector.load %arg4[%c0_7, %c0_8] : memref<128x128xbf16, #tpu.memory_space<vmem>>, vector<128x128xbf16>
    %cst_9 = arith.constant dense<0.000000e+00> : vector<2x128xf32>
    %10 = tpu.matmul %8, %9, %cst_9 {dimension_numbers = #tpu.dot_dimension_numbers<[1], [0], [0], [1], [0, 0, 1, 1], [], []>} : vector<2x128xbf16>, vector<128x128xbf16>, vector<2x128xf32> -> vector<2x128xf32>
    %c0_10 = arith.constant 0 : index
    %c0_11 = arith.constant 0 : index
    %11 = vector.load %arg5[%c0_10, %c0_11] : memref<1x128xf32, #tpu.memory_space<vmem>>, vector<1x128xf32>
    %12 = vector.broadcast %11 : vector<1x128xf32> to vector<2x128xf32>
    %13 = arith.addf %10, %12 : vector<2x128xf32>
    %c0_12 = arith.constant 0 : index
    %c0_13 = arith.constant 0 : index
    %14 = vector.load %arg6[%c0_12, %c0_13] : memref<2x128xf32, #tpu.memory_space<vmem>>, vector<2x128xf32>
    tpu.vector_store %arg6[%c0_12, %c0_13], %13 {strides = array<i32>} : memref<2x128xf32, #tpu.memory_space<vmem>>, vector<2x128xf32>,
    return
  }
  func.func @transform_0(%arg0: i32) -> (i32, i32) {
    %c0_i32 = arith.constant 0 : i32
    %c0_i32_0 = arith.constant 0 : i32
    return %arg0, %c0_i32 : i32, i32
  }
  func.func @transform_1(%arg0: i32) -> (i32, i32) {
    %c0_i32 = arith.constant 0 : i32
    %c0_i32_0 = arith.constant 0 : i32
    %c0_i32_1 = arith.constant 0 : i32
    return %c0_i32, %c0_i32_0 : i32, i32
  }
  func.func @transform_2(%arg0: i32) -> (i32, i32) {
    %c0_i32 = arith.constant 0 : i32
    %c0_i32_0 = arith.constant 0 : i32
    %c0_i32_1 = arith.constant 0 : i32
    return %c0_i32, %c0_i32_0 : i32, i32
  }
  func.func @transform_3(%arg0: i32) -> (i32, i32) {
    %c0_i32 = arith.constant 0 : i32
    %c0_i32_0 = arith.constant 0 : i32
    %c0_i32_1 = arith.constant 0 : i32
    return %c0_i32, %c0_i32_0 : i32, i32
  }
  func.func @transform_4(%arg0: i32) -> (i32, i32) {
    %c0_i32 = arith.constant 0 : i32
    %c0_i32_0 = arith.constant 0 : i32
    %c0_i32_1 = arith.constant 0 : i32
    return %c0_i32, %c0_i32_0 : i32, i32
  }
  func.func @transform_5(%arg0: i32) -> (i32, i32) {
    %c0_i32 = arith.constant 0 : i32
    %c0_i32_0 = arith.constant 0 : i32
    return %arg0, %c0_i32 : i32, i32
  }
  func.func @transform_6(%arg0: i32) -> (i32, i32) {
    %c0_i32 = arith.constant 0 : i32
    %c0_i32_0 = arith.constant 0 : i32
    return %arg0, %c0_i32 : i32, i32
  }
}

</mosaic_0001>

<llo_original>
// kernel: net_forward.3
$region0: #{net_forward.3}
  #allocation0 [shape = 'u32[]', space=smem, size = 0x4, offset = 0x4, fixed_abs, tag = 'smem constant byte address 0x4 - core index']
  #allocation1 [shape = 'u32[144,128]{1,0:T(1,128)}', space=vmem, size = 0x12000, scoped, tag = 'internal scratch']
  %s0 = inlined_call_operand.vmem [shape: bf16[4,392,75], index: 0, kind: input, shape index: {}]
  %s1 = inlined_call_operand.vmem [shape: bf16[75,6], index: 1, kind: input, shape index: {}]
  %s2 = inlined_call_operand.vmem [shape: f32[1,6], index: 2, kind: input, shape index: {}]
  %s3 = inlined_call_operand.vmem [shape: bf16[392,6], index: 3, kind: output, shape index: {}]
  %s4 = sld [smem:[#allocation0]]
  $region22: #{net_forward.3} parent=0
    _
  %s6 = ssub.s32 1, %s4
  %s7 = scalar_select 0, %s6, %s4
  // Predicated region
  $region2: #{net_forward.3} parent=0 // pred_check
    _
  $region3: #{net_forward.3} parent=0 // pred_check_branch
    %9 = sbr.rel (0) target = $region5
  $region4: #{net_forward.3} parent=0 // pred_region
    _
  $region5: #{net_forward.3} parent=0 // pred_fallthru
    _
  // Predicated region
  $region6: #{net_forward.3} parent=0 // pred_check
    _
  $region7: #{net_forward.3} parent=0 // pred_check_branch
    %11 = sbr.rel (0) target = $region9
  $region8: #{net_forward.3} parent=0 // pred_region
    _
  $region9: #{net_forward.3} parent=0 // pred_fallthru
    _
  // Predicated region
  $region10: #{net_forward.3} parent=0 // pred_check
    _
  $region11: #{net_forward.3} parent=0 // pred_check_branch
    %13 = sbr.rel (0) target = $region13
  $region12: #{net_forward.3} parent=0 // pred_region
    _
  $region13: #{net_forward.3} parent=0 // pred_fallthru
    _
  %v15 = vld [vmem:[%s1] sm:$0xf]
  %v16 = vld [vmem:[%s1 + $0x4] sm:$0xf]
  %v17 = vld [vmem:[%s1 + $0x8] sm:$0xf]
  %v18 = vld [vmem:[%s1 + $0xc] sm:$0xf]
  %v19 = vld [vmem:[%s1 + $0x10] sm:$0xf]
  %v20 = vld [vmem:[%s1 + $0x14] sm:$0xf]
  %v21 = vld [vmem:[%s1 + $0x18] sm:$0xf]
  %v22 = vld [vmem:[%s1 + $0x1c] sm:$0xf]
  %v23 = vld [vmem:[%s1 + $0x20] sm:$0xf]
  %v24 = vld [vmem:[%s1 + $0x24] sm:$0x3]
  %v25 = vld [vmem:[%s0] sm:$0xf]
  %v26 = vld [vmem:[%s0 + $0x4] sm:$0xf]
  %v27 = vld [vmem:[%s0 + $0x8] sm:$0xf]
  %v28 = vld [vmem:[%s0 + $0xc] sm:$0xf]
  %v29 = vld [vmem:[%s0 + $0x10] sm:$0xf]
  %v30 = vld [vmem:[%s0 + $0x14] sm:$0xf]
  %v31 = vld [vmem:[%s0 + $0x18] sm:$0xf]
  %v32 = vld [vmem:[%s0 + $0x1c] sm:$0xf]
  %v33 = vld [vmem:[%s0 + $0x20] sm:$0xf]
  %v34 = vld [vmem:[%s0 + $0x24] sm:$0xf]
  %v35 = vld [vmem:[%s0 + $0x28] sm:$0xf]
  %v36 = vld [vmem:[%s0 + $0x2c] sm:$0xf]
  %v37 = vld [vmem:[%s0 + $0x30] sm:$0xf]
  %v38 = vld [vmem:[%s0 + $0x34] sm:$0xf]
  %v39 = vld [vmem:[%s0 + $0x38] sm:$0xf]
  %v40 = vld [vmem:[%s0 + $0x3c] sm:$0xf]
  %v41 = vld [vmem:[%s0 + $0x40] sm:$0xf]
  %v42 = vld [vmem:[%s0 + $0x44] sm:$0xf]
  %v43 = vld [vmem:[%s0 + $0x48] sm:$0xf]
  %v44 = vld [vmem:[%s0 + $0x4c] sm:$0xf]
  %v45 = vld [vmem:[%s0 + $0x50] sm:$0xf]
  %v46 = vld [vmem:[%s0 + $0x54] sm:$0xf]
  %v47 = vld [vmem:[%s0 + $0x58] sm:$0xf]
  %v48 = vld [vmem:[%s0 + $0x5c] sm:$0xf]
  %v49 = vld [vmem:[%s0 + $0x60] sm:$0xf]
  %v50 = vld [vmem:[%s0 + $0x64] sm:$0xf]
  %v51 = vld [vmem:[%s0 + $0x68] sm:$0xf]
  %v52 = vld [vmem:[%s0 + $0x6c] sm:$0xf]
  %v53 = vld [vmem:[%s0 + $0x70] sm:$0xf]
  %v54 = vld [vmem:[%s0 + $0x74] sm:$0xf]
  %v55 = vld [vmem:[%s0 + $0x78] sm:$0xf]
  %v56 = vld [vmem:[%s0 + $0x7c] sm:$0xf]
  %v57 = vld [vmem:[%s0 + $0x80] sm:$0xf]
  %v58 = vld [vmem:[%s0 + $0x84] sm:$0xf]
  %v59 = vld [vmem:[%s0 + $0x88] sm:$0xf]
  %v60 = vld [vmem:[%s0 + $0x8c] sm:$0xf]
  %v61 = vld [vmem:[%s0 + $0x90] sm:$0xf]
  %v62 = vld [vmem:[%s0 + $0x94] sm:$0xf]
  %v63 = vld [vmem:[%s0 + $0x98] sm:$0xf]
  %v64 = vld [vmem:[%s0 + $0x9c] sm:$0xf]
  %v65 = vld [vmem:[%s0 + $0xa0] sm:$0xf]
  %v66 = vld [vmem:[%s0 + $0xa4] sm:$0xf]
  %v67 = vld [vmem:[%s0 + $0xa8] sm:$0xf]
  %v68 = vld [vmem:[%s0 + $0xac] sm:$0xf]
  %v69 = vld [vmem:[%s0 + $0xb0] sm:$0xf]
  %v70 = vld [vmem:[%s0 + $0xb4] sm:$0xf]
  %v71 = vld [vmem:[%s0 + $0xb8] sm:$0xf]
  %v72 = vld [vmem:[%s0 + $0xbc] sm:$0xf]
  %v73 = vld [vmem:[%s0 + $0xc0] sm:$0xf]
  %v123 = vunpack.c.l.b16 %v25
  %v124 = vunpack.c.l.b16 %v26
  %v125 = vunpack.c.l.b16 %v27
  %v126 = vunpack.c.l.b16 %v28
  %v127 = vunpack.c.l.b16 %v29
  %v128 = vunpack.c.l.b16 %v30
  %v129 = vunpack.c.l.b16 %v31
  %v130 = vunpack.c.l.b16 %v32
  %v131 = vunpack.c.l.b16 %v33
  %v132 = vunpack.c.l.b16 %v34
  %v133 = vunpack.c.l.b16 %v35
  %v134 = vunpack.c.l.b16 %v36
  %v135 = vunpack.c.l.b16 %v37
  %v136 = vunpack.c.l.b16 %v38
  %v137 = vunpack.c.l.b16 %v39
  %v138 = vunpack.c.l.b16 %v40
  %v139 = vunpack.c.l.b16 %v41
  %v140 = vunpack.c.l.b16 %v42
  %v141 = vunpack.c.l.b16 %v43
  %v142 = vunpack.c.l.b16 %v44
  %v143 = vunpack.c.l.b16 %v45
  %v144 = vunpack.c.l.b16 %v46
  %v145 = vunpack.c.l.b16 %v47
  %v146 = vunpack.c.l.b16 %v48
  %v147 = vunpack.c.l.b16 %v49
  %v148 = vunpack.c.l.b16 %v50
  %v149 = vunpack.c.l.b16 %v51
  %v150 = vunpack.c.l.b16 %v52
  %v151 = vunpack.c.l.b16 %v53
  %v152 = vunpack.c.l.b16 %v54
  %v153 = vunpack.c.l.b16 %v55
  %v154 = vunpack.c.l.b16 %v56
  %v155 = vunpack.c.l.b16 %v57
  %v156 = vunpack.c.l.b16 %v58
  %v157 = vunpack.c.l.b16 %v59
  %v158 = vunpack.c.l.b16 %v60
  %v159 = vunpack.c.l.b16 %v61
  %v160 = vunpack.c.l.b16 %v62
  %v161 = vunpack.c.l.b16 %v63
  %v162 = vunpack.c.l.b16 %v64
  %v163 = vunpack.c.l.b16 %v65
  %v164 = vunpack.c.l.b16 %v66
  %v165 = vunpack.c.l.b16 %v67
  %v166 = vunpack.c.l.b16 %v68
  %v167 = vunpack.c.l.b16 %v69
  %v168 = vunpack.c.l.b16 %v70
  %v169 = vunpack.c.l.b16 %v71
  %v170 = vunpack.c.l.b16 %v72
  %v171 = vunpack.c.l.b16 %v73
  %v172 = vpack.c.b16 %v124, %v123
  %v173 = vpack.c.b16 %v126, %v125
  %v174 = vpack.c.b16 %v128, %v127
  %v175 = vpack.c.b16 %v130, %v129
  %v176 = vpack.c.b16 %v132, %v131
  %v177 = vpack.c.b16 %v134, %v133
  %v178 = vpack.c.b16 %v136, %v135
  %v179 = vpack.c.b16 %v138, %v137
  %v180 = vpack.c.b16 %v140, %v139
  %v181 = vpack.c.b16 %v142, %v141
  %v182 = vpack.c.b16 %v144, %v143
  %v183 = vpack.c.b16 %v146, %v145
  %v184 = vpack.c.b16 %v148, %v147
  %v185 = vpack.c.b16 %v150, %v149
  %v186 = vpack.c.b16 %v152, %v151
  %v187 = vpack.c.b16 %v154, %v153
  %v188 = vpack.c.b16 %v156, %v155
  %v189 = vpack.c.b16 %v158, %v157
  %v190 = vpack.c.b16 %v160, %v159
  %v191 = vpack.c.b16 %v162, %v161
  %v192 = vpack.c.b16 %v164, %v163
  %v193 = vpack.c.b16 %v166, %v165
  %v194 = vpack.c.b16 %v168, %v167
  %v195 = vpack.c.b16 %v170, %v169
  %v196 = vpack.c.b16 %v171, %v171
  %v207 = vunpack.c.l.b16 %v15
  %v208 = vunpack.c.l.b16 %v16
  %v209 = vunpack.c.l.b16 %v17
  %v210 = vunpack.c.l.b16 %v18
  %v211 = vunpack.c.l.b16 %v19
  %v212 = vunpack.c.l.b16 %v20
  %v213 = vunpack.c.l.b16 %v21
  %v214 = vunpack.c.l.b16 %v22
  %v215 = vunpack.c.l.b16 %v23
  %v216 = vunpack.c.l.b16 %v24
  %v217 = vpack.c.b16 %v208, %v207
  %v218 = vpack.c.b16 %v210, %v209
  %v219 = vpack.c.b16 %v212, %v211
  %v220 = vpack.c.b16 %v214, %v213
  %v221 = vpack.c.b16 %v216, %v215
  %vm226 = vcmask 613376
  %v228 = vsel %vm226, %v172, 0
  %v231 = vsel %vm226, %v173, 0
  %v234 = vsel %vm226, %v174, 0
  %v237 = vsel %vm226, %v175, 0
  %v240 = vsel %vm226, %v176, 0
  %v243 = vsel %vm226, %v177, 0
  %v246 = vsel %vm226, %v178, 0
  %v249 = vsel %vm226, %v179, 0
  %v252 = vsel %vm226, %v180, 0
  %v255 = vsel %vm226, %v181, 0
  %v258 = vsel %vm226, %v182, 0
  %v261 = vsel %vm226, %v183, 0
  %v264 = vsel %vm226, %v184, 0
  %v267 = vsel %vm226, %v185, 0
  %v270 = vsel %vm226, %v186, 0
  %v273 = vsel %vm226, %v187, 0
  %v276 = vsel %vm226, %v188, 0
  %v279 = vsel %vm226, %v189, 0
  %v282 = vsel %vm226, %v190, 0
  %v285 = vsel %vm226, %v191, 0
  %v288 = vsel %vm226, %v192, 0
  %v291 = vsel %vm226, %v193, 0
  %v294 = vsel %vm226, %v194, 0
  %v297 = vsel %vm226, %v195, 0
  %v300 = vsel %vm226, %v196, 0
  %vm302 = vcmask 1044480
  %vm303 = vcmask 1045504
  %v304 = vsel %vm302, 4294967295, 65535
  %v305 = vsel %vm303, %v304, 0
  %v307 = vand.u32 %v221, %v305
  %309 = vmatprep.subr.bf16.mxu0 0
  %310 = vmatpush1.bf16.msra.mxu0 %v217
  %311 = vmatprep.subr.bf16.mxu0 0
  %312 = vmatpush1.bf16.msra.mxu0 %v218
  %313 = vmatprep.subr.bf16.mxu0 0
  %314 = vmatpush1.bf16.msra.mxu0 %v219
  %315 = vmatprep.subr.bf16.mxu0 0
  %316 = vmatpush1.bf16.msra.mxu0 %v220
  %317 = vmatprep.subr.bf16.mxu0 0
  %318 = vmatpush1.bf16.msra.mxu0 %v307
  %319 = vmatprep.subr.bf16.mxu0 0
  %320 = vmatpush1.bf16.msra.mxu0 0
  %321 = vmatprep.subr.bf16.mxu0 0
  %322 = vmatpush1.bf16.msra.mxu0 0
  %323 = vmatprep.subr.bf16.mxu0 0
  %324 = vmatpush1.bf16.msra.mxu0 0
  %325 = vmatprep.subr.bf16.mxu0 0
  %326 = vmatpush1.bf16.msra.mxu0 0
  %327 = vmatprep.subr.bf16.mxu0 0
  %328 = vmatpush1.bf16.msra.mxu0 0
  %329 = vmatprep.subr.bf16.mxu0 0
  %330 = vmatpush1.bf16.msra.mxu0 0
  %331 = vmatprep.subr.bf16.mxu0 0
  %332 = vmatpush1.bf16.msra.mxu0 0
  %333 = vmatprep.subr.bf16.mxu0 0
  %334 = vmatpush1.bf16.msra.mxu0 0
  %335 = vmatprep.subr.bf16.mxu0 0
  %336 = vmatpush1.bf16.msra.mxu0 0
  %337 = vmatprep.subr.bf16.mxu0 0
  %338 = vmatpush1.bf16.msra.mxu0 0
  %339 = vmatprep.subr.bf16.mxu0 0
  %340 = vmatpush1.bf16.msra.mxu0 0
  %341 = vmatprep.mubr.bf16.mxu0 0
  %342 = vmatmul.mubr.bf16.gmra.mrb[0].mxu0 %v228
  %v343 = vpop.f32.mrb[0].mxu0
  %v344 = vadd.f32 0.0, %v343
  %v345 = vpop.f32.mrb[0].mxu0
  %v346 = vpop.f32.mrb[0].mxu0
  %v347 = vadd.f32 0.0, %v346
  %v348 = vpop.f32.mrb[0].mxu0
  %349 = vmatprep.mubr.bf16.mxu0 0
  %350 = vmatmul.mubr.bf16.gmra.mrb[0].mxu0 %v231
  %v351 = vpop.f32.mrb[0].mxu0
  %v352 = vadd.f32 0.0, %v351
  %v353 = vpop.f32.mrb[0].mxu0
  %v354 = vpop.f32.mrb[0].mxu0
  %v355 = vadd.f32 0.0, %v354
  %v356 = vpop.f32.mrb[0].mxu0
  %357 = vmatprep.mubr.bf16.mxu0 0
  %358 = vmatmul.mubr.bf16.gmra.mrb[0].mxu0 %v234
  %v359 = vpop.f32.mrb[0].mxu0
  %v360 = vadd.f32 0.0, %v359
  %v361 = vpop.f32.mrb[0].mxu0
  %v362 = vpop.f32.mrb[0].mxu0
  %v363 = vadd.f32 0.0, %v362
  %v364 = vpop.f32.mrb[0].mxu0
  %365 = vmatprep.mubr.bf16.mxu0 0
  %366 = vmatmul.mubr.bf16.gmra.mrb[0].mxu0 %v237
  %v367 = vpop.f32.mrb[0].mxu0
  %v368 = vadd.f32 0.0, %v367
  %v369 = vpop.f32.mrb[0].mxu0
  %v370 = vpop.f32.mrb[0].mxu0
  %v371 = vadd.f32 0.0, %v370
  %v372 = vpop.f32.mrb[0].mxu0
  %373 = vmatprep.mubr.bf16.mxu0 0
  %374 = vmatmul.mubr.bf16.gmra.mrb[0].mxu0 %v240
  %v375 = vpop.f32.mrb[0].mxu0
  %v376 = vadd.f32 0.0, %v375
  %v377 = vpop.f32.mrb[0].mxu0
  %v378 = vpop.f32.mrb[0].mxu0
  %v379 = vadd.f32 0.0, %v378
  %v380 = vpop.f32.mrb[0].mxu0
  %381 = vmatprep.mubr.bf16.mxu0 0
  %382 = vmatmul.mubr.bf16.gmra.mrb[0].mxu0 %v243
  %v383 = vpop.f32.mrb[0].mxu0
  %v384 = vadd.f32 0.0, %v383
  %v385 = vpop.f32.mrb[0].mxu0
  %v386 = vpop.f32.mrb[0].mxu0
  %v387 = vadd.f32 0.0, %v386
  %v388 = vpop.f32.mrb[0].mxu0
  %389 = vmatprep.mubr.bf16.mxu0 0
  %390 = vmatmul.mubr.bf16.gmra.mrb[0].mxu0 %v246
  %v391 = vpop.f32.mrb[0].mxu0
  %v392 = vadd.f32 0.0, %v391
  %v393 = vpop.f32.mrb[0].mxu0
  %v394 = vpop.f32.mrb[0].mxu0
  %v395 = vadd.f32 0.0, %v394
  %v396 = vpop.f32.mrb[0].mxu0
  %397 = vmatprep.mubr.bf16.mxu0 0
  %398 = vmatmul.mubr.bf16.gmra.mrb[0].mxu0 %v249
  %v399 = vpop.f32.mrb[0].mxu0
  %v400 = vadd.f32 0.0, %v399
  %v401 = vpop.f32.mrb[0].mxu0
  %v402 = vpop.f32.mrb[0].mxu0
  %v403 = vadd.f32 0.0, %v402
  %v404 = vpop.f32.mrb[0].mxu0
  %405 = vmatprep.mubr.bf16.mxu0 0
  %406 = vmatmul.mubr.bf16.gmra.mrb[0].mxu0 %v252
  %v407 = vpop.f32.mrb[0].mxu0
  %v408 = vadd.f32 0.0, %v407
  %v409 = vpop.f32.mrb[0].mxu0
  %v410 = vpop.f32.mrb[0].mxu0
  %v411 = vadd.f32 0.0, %v410
  %v412 = vpop.f32.mrb[0].mxu0
  %413 = vmatprep.mubr.bf16.mxu0 0
  %414 = vmatmul.mubr.bf16.gmra.mrb[0].mxu0 %v255
  %v415 = vpop.f32.mrb[0].mxu0
  %v416 = vadd.f32 0.0, %v415
  %v417 = vpop.f32.mrb[0].mxu0
  %v418 = vpop.f32.mrb[0].mxu0
  %v419 = vadd.f32 0.0, %v418
  %v420 = vpop.f32.mrb[0].mxu0
  %421 = vmatprep.mubr.bf16.mxu0 0
  %422 = vmatmul.mubr.bf16.gmra.mrb[0].mxu0 %v258
  %v423 = vpop.f32.mrb[0].mxu0
  %v424 = vadd.f32 0.0, %v423
  %v425 = vpop.f32.mrb[0].mxu0
  %v426 = vpop.f32.mrb[0].mxu0
  %v427 = vadd.f32 0.0, %v426
  %v428 = vpop.f32.mrb[0].mxu0
  %429 = vmatprep.mubr.bf16.mxu0 0
  %430 = vmatmul.mubr.bf16.gmra.mrb[0].mxu0 %v261
  %v431 = vpop.f32.mrb[0].mxu0
  %v432 = vadd.f32 0.0, %v431
  %v433 = vpop.f32.mrb[0].mxu0
  %v434 = vpop.f32.mrb[0].mxu0
  %v435 = vadd.f32 0.0, %v434
  %v436 = vpop.f32.mrb[0].mxu0
  %437 = vmatprep.mubr.bf16.mxu0 0
  %438 = vmatmul.mubr.bf16.gmra.mrb[0].mxu0 %v264
  %v439 = vpop.f32.mrb[0].mxu0
  %v440 = vadd.f32 0.0, %v439
  %v441 = vpop.f32.mrb[0].mxu0
  %v442 = vpop.f32.mrb[0].mxu0
  %v443 = vadd.f32 0.0, %v442
  %v444 = vpop.f32.mrb[0].mxu0
  %445 = vmatprep.mubr.bf16.mxu0 0
  %446 = vmatmul.mubr.bf16.gmra.mrb[0].mxu0 %v267
  %v447 = vpop.f32.mrb[0].mxu0
  %v448 = vadd.f32 0.0, %v447
  %v449 = vpop.f32.mrb[0].mxu0
  %v450 = vpop.f32.mrb[0].mxu0
  %v451 = vadd.f32 0.0, %v450
  %v452 = vpop.f32.mrb[0].mxu0
  %453 = vmatprep.mubr.bf16.mxu0 0
  %454 = vmatmul.mubr.bf16.gmra.mrb[0].mxu0 %v270
  %v455 = vpop.f32.mrb[0].mxu0
  %v456 = vadd.f32 0.0, %v455
  %v457 = vpop.f32.mrb[0].mxu0
  %v458 = vpop.f32.mrb[0].mxu0
  %v459 = vadd.f32 0.0, %v458
  %v460 = vpop.f32.mrb[0].mxu0
  %461 = vmatprep.mubr.bf16.mxu0 0
  %462 = vmatmul.mubr.bf16.gmra.mrb[0].mxu0 %v273
  %v463 = vpop.f32.mrb[0].mxu0
  %v464 = vadd.f32 0.0, %v463
  %v465 = vpop.f32.mrb[0].mxu0
  %v466 = vpop.f32.mrb[0].mxu0
  %v467 = vadd.f32 0.0, %v466
  %v468 = vpop.f32.mrb[0].mxu0
  %469 = vmatprep.mubr.bf16.mxu0 0
  %470 = vmatmul.mubr.bf16.gmra.mrb[0].mxu0 %v276
  %v471 = vpop.f32.mrb[0].mxu0
  %v472 = vadd.f32 0.0, %v471
  %v473 = vpop.f32.mrb[0].mxu0
  %v474 = vpop.f32.mrb[0].mxu0
  %v475 = vadd.f32 0.0, %v474
  %v476 = vpop.f32.mrb[0].mxu0
  %477 = vmatprep.mubr.bf16.mxu0 0
  %478 = vmatmul.mubr.bf16.gmra.mrb[0].mxu0 %v279
  %v479 = vpop.f32.mrb[0].mxu0
  %v480 = vadd.f32 0.0, %v479
  %v481 = vpop.f32.mrb[0].mxu0
  %v482 = vpop.f32.mrb[0].mxu0
  %v483 = vadd.f32 0.0, %v482
  %v484 = vpop.f32.mrb[0].mxu0
  %485 = vmatprep.mubr.bf16.mxu0 0
  %486 = vmatmul.mubr.bf16.gmra.mrb[0].mxu0 %v282
  %v487 = vpop.f32.mrb[0].mxu0
  %v488 = vadd.f32 0.0, %v487
  %v489 = vpop.f32.mrb[0].mxu0
  %v490 = vpop.f32.mrb[0].mxu0
  %v491 = vadd.f32 0.0, %v490
  %v492 = vpop.f32.mrb[0].mxu0
  %493 = vmatprep.mubr.bf16.mxu0 0
  %494 = vmatmul.mubr.bf16.gmra.mrb[0].mxu0 %v285
  %v495 = vpop.f32.mrb[0].mxu0
  %v496 = vadd.f32 0.0, %v495
  %v497 = vpop.f32.mrb[0].mxu0
  %v498 = vpop.f32.mrb[0].mxu0
  %v499 = vadd.f32 0.0, %v498
  %v500 = vpop.f32.mrb[0].mxu0
  %501 = vmatprep.mubr.bf16.mxu0 0
  %502 = vmatmul.mubr.bf16.gmra.mrb[0].mxu0 %v288
  %v503 = vpop.f32.mrb[0].mxu0
  %v504 = vadd.f32 0.0, %v503
  %v505 = vpop.f32.mrb[0].mxu0
  %v506 = vpop.f32.mrb[0].mxu0
  %v507 = vadd.f32 0.0, %v506
  %v508 = vpop.f32.mrb[0].mxu0
  %509 = vmatprep.mubr.bf16.mxu0 0
  %510 = vmatmul.mubr.bf16.gmra.mrb[0].mxu0 %v291
  %v511 = vpop.f32.mrb[0].mxu0
  %v512 = vadd.f32 0.0, %v511
  %v513 = vpop.f32.mrb[0].mxu0
  %v514 = vpop.f32.mrb[0].mxu0
  %v515 = vadd.f32 0.0, %v514
  %v516 = vpop.f32.mrb[0].mxu0
  %517 = vmatprep.mubr.bf16.mxu0 0
  %518 = vmatmul.mubr.bf16.gmra.mrb[0].mxu0 %v294
  %v519 = vpop.f32.mrb[0].mxu0
  %v520 = vadd.f32 0.0, %v519
  %v521 = vpop.f32.mrb[0].mxu0
  %v522 = vpop.f32.mrb[0].mxu0
  %v523 = vadd.f32 0.0, %v522
  %v524 = vpop.f32.mrb[0].mxu0
  %525 = vmatprep.mubr.bf16.mxu0 0
  %526 = vmatmul.mubr.bf16.gmra.mrb[0].mxu0 %v297
  %v527 = vpop.f32.mrb[0].mxu0
  %v528 = vadd.f32 0.0, %v527
  %v529 = vpop.f32.mrb[0].mxu0
  %v530 = vpop.f32.mrb[0].mxu0
  %v531 = vadd.f32 0.0, %v530
  %v532 = vpop.f32.mrb[0].mxu0
  %533 = vmatprep.mubr.bf16.mxu0 0
  %534 = vmatmul.mubr.bf16.gmra.mrb[0].mxu0 %v300
  %v535 = vpop.f32.mrb[0].mxu0
  %v536 = vadd.f32 0.0, %v535
  %v537 = vpop.f32.mrb[0].mxu0
  %v538 = vpop.f32.mrb[0].mxu0
  %v539 = vpop.f32.mrb[0].mxu0
  %540 = vdwg.mxu0
  %s541 = scalar_lea.vmem %s0, 196
  %v542 = vld [vmem:[%s541] sm:$0xf]
  %v543 = vld [vmem:[%s541 + $0x4] sm:$0xf]
  %v544 = vld [vmem:[%s541 + $0x8] sm:$0xf]
  %v545 = vld [vmem:[%s541 + $0xc] sm:$0xf]
  %v546 = vld [vmem:[%s541 + $0x10] sm:$0xf]
  %v547 = vld [vmem:[%s541 + $0x14] sm:$0xf]
  %v548 = vld [vmem:[%s541 + $0x18] sm:$0xf]
  %v549 = vld [vmem:[%s541 + $0x1c] sm:$0xf]
  %v550 = vld [vmem:[%s541 + $0x20] sm:$0xf]
  %v551 = vld [vmem:[%s541 + $0x24] sm:$0xf]
  %v552 = vld [vmem:[%s541 + $0x28] sm:$0xf]
  %v553 = vld [vmem:[%s541 + $0x2c] sm:$0xf]
  %v554 = vld [vmem:[%s541 + $0x30] sm:$0xf]
  %v555 = vld [vmem:[%s541 + $0x34] sm:$0xf]
  %v556 = vld [vmem:[%s541 + $0x38] sm:$0xf]
  %v557 = vld [vmem:[%s541 + $0x3c] sm:$0xf]
  %v558 = vld [vmem:[%s541 + $0x40] sm:$0xf]
  %v559 = vld [vmem:[%s541 + $0x44] sm:$0xf]
  %v560 = vld [vmem:[%s541 + $0x48] sm:$0xf]
  %v561 = vld [vmem:[%s541 + $0x4c] sm:$0xf]
  %v562 = vld [vmem:[%s541 + $0x50] sm:$0xf]
  %v563 = vld [vmem:[%s541 + $0x54] sm:$0xf]
  %v564 = vld [vmem:[%s541 + $0x58] sm:$0xf]
  %v565 = vld [vmem:[%s541 + $0x5c] sm:$0xf]
  %v566 = vld [vmem:[%s541 + $0x60] sm:$0xf]
  %v567 = vld [vmem:[%s541 + $0x64] sm:$0xf]
  %v568 = vld [vmem:[%s541 + $0x68] sm:$0xf]
  %v569 = vld [vmem:[%s541 + $0x6c] sm:$0xf]
  %v570 = vld [vmem:[%s541 + $0x70] sm:$0xf]
  %v571 = vld [vmem:[%s541 + $0x74] sm:$0xf]
  %v572 = vld [vmem:[%s541 + $0x78] sm:$0xf]
  %v573 = vld [vmem:[%s541 + $0x7c] sm:$0xf]
  %v574 = vld [vmem:[%s541 + $0x80] sm:$0xf]
  %v575 = vld [vmem:[%s541 + $0x84] sm:$0xf]
  %v576 = vld [vmem:[%s541 + $0x88] sm:$0xf]
  %v577 = vld [vmem:[%s541 + $0x8c] sm:$0xf]
  %v578 = vld [vmem:[%s541 + $0x90] sm:$0xf]
  %v579 = vld [vmem:[%s541 + $0x94] sm:$0xf]
  %v580 = vld [vmem:[%s541 + $0x98] sm:$0xf]
  %v581 = vld [vmem:[%s541 + $0x9c] sm:$0xf]
  %v582 = vld [vmem:[%s541 + $0xa0] sm:$0xf]
  %v583 = vld [vmem:[%s541 + $0xa4] sm:$0xf]
  %v584 = vld [vmem:[%s541 + $0xa8] sm:$0xf]
  %v585 = vld [vmem:[%s541 + $0xac] sm:$0xf]
  %v586 = vld [vmem:[%s541 + $0xb0] sm:$0xf]
  %v587 = vld [vmem:[%s541 + $0xb4] sm:$0xf]
  %v588 = vld [vmem:[%s541 + $0xb8] sm:$0xf]
  %v589 = vld [vmem:[%s541 + $0xbc] sm:$0xf]
  %v590 = vld [vmem:[%s541 + $0xc0] sm:$0xf]
  %v640 = vunpack.c.l.b16 %v542
  %v641 = vunpack.c.l.b16 %v543
  %v642 = vunpack.c.l.b16 %v544
  %v643 = vunpack.c.l.b16 %v545
  %v644 = vunpack.c.l.b16 %v546
  %v645 = vunpack.c.l.b16 %v547
  %v646 = vunpack.c.l.b16 %v548
  %v647 = vunpack.c.l.b16 %v549
  %v648 = vunpack.c.l.b16 %v550
  %v649 = vunpack.c.l.b16 %v551
  %v650 = vunpack.c.l.b16 %v552
  %v651 = vunpack.c.l.b16 %v553
  %v652 = vunpack.c.l.b16 %v554
  %v653 = vunpack.c.l.b16 %v555
  %v654 = vunpack.c.l.b16 %v556
  %v655 = vunpack.c.l.b16 %v557
  %v656 = vunpack.c.l.b16 %v558
  %v657 = vunpack.c.l.b16 %v559
  %v658 = vunpack.c.l.b16 %v560
  %v659 = vunpack.c.l.b16 %v561
  %v660 = vunpack.c.l.b16 %v562
  %v661 = vunpack.c.l.b16 %v563
  %v662 = vunpack.c.l.b16 %v564
  %v663 = vunpack.c.l.b16 %v565
  %v664 = vunpack.c.l.b16 %v566
  %v665 = vunpack.c.l.b16 %v567
  %v666 = vunpack.c.l.b16 %v568
  %v667 = vunpack.c.l.b16 %v569
  %v668 = vunpack.c.l.b16 %v570
  %v669 = vunpack.c.l.b16 %v571
  %v670 = vunpack.c.l.b16 %v572
  %v671 = vunpack.c.l.b16 %v573
  %v672 = vunpack.c.l.b16 %v574
  %v673 = vunpack.c.l.b16 %v575
  %v674 = vunpack.c.l.b16 %v576
  %v675 = vunpack.c.l.b16 %v577
  %v676 = vunpack.c.l.b16 %v578
  %v677 = vunpack.c.l.b16 %v579
  %v678 = vunpack.c.l.b16 %v580
  %v679 = vunpack.c.l.b16 %v581
  %v680 = vunpack.c.l.b16 %v582
  %v681 = vunpack.c.l.b16 %v583
  %v682 = vunpack.c.l.b16 %v584
  %v683 = vunpack.c.l.b16 %v585
  %v684 = vunpack.c.l.b16 %v586
  %v685 = vunpack.c.l.b16 %v587
  %v686 = vunpack.c.l.b16 %v588
  %v687 = vunpack.c.l.b16 %v589
  %v688 = vunpack.c.l.b16 %v590
  %v689 = vpack.c.b16 %v641, %v640
  %v690 = vpack.c.b16 %v643, %v642
  %v691 = vpack.c.b16 %v645, %v644
  %v692 = vpack.c.b16 %v647, %v646
  %v693 = vpack.c.b16 %v649, %v648
  %v694 = vpack.c.b16 %v651, %v650
  %v695 = vpack.c.b16 %v653, %v652
  %v696 = vpack.c.b16 %v655, %v654
  %v697 = vpack.c.b16 %v657, %v656
  %v698 = vpack.c.b16 %v659, %v658
  %v699 = vpack.c.b16 %v661, %v660
  %v700 = vpack.c.b16 %v663, %v662
  %v701 = vpack.c.b16 %v665, %v664
  %v702 = vpack.c.b16 %v667, %v666
  %v703 = vpack.c.b16 %v669, %v668
  %v704 = vpack.c.b16 %v671, %v670
  %v705 = vpack.c.b16 %v673, %v672
  %v706 = vpack.c.b16 %v675, %v674
  %v707 = vpack.c.b16 %v677, %v676
  %v708 = vpack.c.b16 %v679, %v678
  %v709 = vpack.c.b16 %v681, %v680
  %v710 = vpack.c.b16 %v683, %v682
  %v711 = vpack.c.b16 %v685, %v684
  %v712 = vpack.c.b16 %v687, %v686
  %v713 = vpack.c.b16 %v688, %v688
  %v715 = vsel %vm226, %v689, 0
  %v718 = vsel %vm226, %v690, 0
  %v721 = vsel %vm226, %v691, 0
  %v724 = vsel %vm226, %v692, 0
  %v727 = vsel %vm226, %v693, 0
  %v730 = vsel %vm226, %v694, 0
  %v733 = vsel %vm226, %v695, 0
  %v736 = vsel %vm226, %v696, 0
  %v739 = vsel %vm226, %v697, 0
  %v742 = vsel %vm226, %v698, 0
  %v745 = vsel %vm226, %v699, 0
  %v748 = vsel %vm226, %v700, 0
  %v751 = vsel %vm226, %v701, 0
  %v754 = vsel %vm226, %v702, 0
  %v757 = vsel %vm226, %v703, 0
  %v760 = vsel %vm226, %v704, 0
  %v763 = vsel %vm226, %v705, 0
  %v766 = vsel %vm226, %v706, 0
  %v769 = vsel %vm226, %v707, 0
  %v772 = vsel %vm226, %v708, 0
  %v775 = vsel %vm226, %v709, 0
  %v778 = vsel %vm226, %v710, 0
  %v781 = vsel %vm226, %v711, 0
  %v784 = vsel %vm226, %v712, 0
  %v787 = vsel %vm226, %v713, 0
  %789 = vmatprep.subr.bf16.mxu0 0
  %790 = vmatpush1.bf16.msra.mxu0 %v217
  %791 = vmatprep.subr.bf16.mxu0 0
  %792 = vmatpush1.bf16.msra.mxu0 %v218
  %793 = vmatprep.subr.bf16.mxu0 0
  %794 = vmatpush1.bf16.msra.mxu0 %v219
  %795 = vmatprep.subr.bf16.mxu0 0
  %796 = vmatpush1.bf16.msra.mxu0 %v220
  %797 = vmatprep.subr.bf16.mxu0 0
  %798 = vmatpush1.bf16.msra.mxu0 %v307
  %799 = vmatprep.subr.bf16.mxu0 0
  %800 = vmatpush1.bf16.msra.mxu0 0
  %801 = vmatprep.subr.bf16.mxu0 0
  %802 = vmatpush1.bf16.msra.mxu0 0
  %803 = vmatprep.subr.bf16.mxu0 0
  %804 = vmatpush1.bf16.msra.mxu0 0
  %805 = vmatprep.subr.bf16.mxu0 0
  %806 = vmatpush1.bf16.msra.mxu0 0
  %807 = vmatprep.subr.bf16.mxu0 0
  %808 = vmatpush1.bf16.msra.mxu0 0
  %809 = vmatprep.subr.bf16.mxu0 0
  %810 = vmatpush1.bf16.msra.mxu0 0
  %811 = vmatprep.subr.bf16.mxu0 0
  %812 = vmatpush1.bf16.msra.mxu0 0
  %813 = vmatprep.subr.bf16.mxu0 0
  %814 = vmatpush1.bf16.msra.mxu0 0
  %815 = vmatprep.subr.bf16.mxu0 0
  %816 = vmatpush1.bf16.msra.mxu0 0
  %817 = vmatprep.subr.bf16.mxu0 0
  %818 = vmatpush1.bf16.msra.mxu0 0
  %819 = vmatprep.subr.bf16.mxu0 0
  %820 = vmatpush1.bf16.msra.mxu0 0
  %821 = vmatprep.mubr.bf16.mxu0 0
  %822 = vmatmul.mubr.bf16.gmra.mrb[0].mxu0 %v715
  %v823 = vpop.f32.mrb[0].mxu0
  %v824 = vadd.f32 0.0, %v823
  %v825 = vpop.f32.mrb[0].mxu0
  %v826 = vpop.f32.mrb[0].mxu0
  %v827 = vadd.f32 0.0, %v826
  %v828 = vpop.f32.mrb[0].mxu0
  %829 = vmatprep.mubr.bf16.mxu0 0
  %830 = vmatmul.mubr.bf16.gmra.mrb[0].mxu0 %v718
  %v831 = vpop.f32.mrb[0].mxu0
  %v832 = vadd.f32 0.0, %v831
  %v833 = vpop.f32.mrb[0].mxu0
  %v834 = vpop.f32.mrb[0].mxu0
  %v835 = vadd.f32 0.0, %v834
  %v836 = vpop.f32.mrb[0].mxu0
  %837 = vmatprep.mubr.bf16.mxu0 0
  %838 = vmatmul.mubr.bf16.gmra.mrb[0].mxu0 %v721
  %v839 = vpop.f32.mrb[0].mxu0
  %v840 = vadd.f32 0.0, %v839
  %v841 = vpop.f32.mrb[0].mxu0
  %v842 = vpop.f32.mrb[0].mxu0
  %v843 = vadd.f32 0.0, %v842
  %v844 = vpop.f32.mrb[0].mxu0
  %845 = vmatprep.mubr.bf16.mxu0 0
  %846 = vmatmul.mubr.bf16.gmra.mrb[0].mxu0 %v724
  %v847 = vpop.f32.mrb[0].mxu0
  %v848 = vadd.f32 0.0, %v847
  %v849 = vpop.f32.mrb[0].mxu0
  %v850 = vpop.f32.mrb[0].mxu0
  %v851 = vadd.f32 0.0, %v850
  %v852 = vpop.f32.mrb[0].mxu0
  %853 = vmatprep.mubr.bf16.mxu0 0
  %854 = vmatmul.mubr.bf16.gmra.mrb[0].mxu0 %v727
  %v855 = vpop.f32.mrb[0].mxu0
  %v856 = vadd.f32 0.0, %v855
  %v857 = vpop.f32.mrb[0].mxu0
  %v858 = vpop.f32.mrb[0].mxu0
  %v859 = vadd.f32 0.0, %v858
  %v860 = vpop.f32.mrb[0].mxu0
  %861 = vmatprep.mubr.bf16.mxu0 0
  %862 = vmatmul.mubr.bf16.gmra.mrb[0].mxu0 %v730
  %v863 = vpop.f32.mrb[0].mxu0
  %v864 = vadd.f32 0.0, %v863
  %v865 = vpop.f32.mrb[0].mxu0
  %v866 = vpop.f32.mrb[0].mxu0
  %v867 = vadd.f32 0.0, %v866
  %v868 = vpop.f32.mrb[0].mxu0
  %869 = vmatprep.mubr.bf16.mxu0 0
  %870 = vmatmul.mubr.bf16.gmra.mrb[0].mxu0 %v733
  %v871 = vpop.f32.mrb[0].mxu0
  %v872 = vadd.f32 0.0, %v871
  %v873 = vpop.f32.mrb[0].mxu0
  %v874 = vpop.f32.mrb[0].mxu0
  %v875 = vadd.f32 0.0, %v874
  %v876 = vpop.f32.mrb[0].mxu0
  %877 = vmatprep.mubr.bf16.mxu0 0
  %878 = vmatmul.mubr.bf16.gmra.mrb[0].mxu0 %v736
  %v879 = vpop.f32.mrb[0].mxu0
  %v880 = vadd.f32 0.0, %v879
  %v881 = vpop.f32.mrb[0].mxu0
  %v882 = vpop.f32.mrb[0].mxu0
  %v883 = vadd.f32 0.0, %v882
  %v884 = vpop.f32.mrb[0].mxu0
  %885 = vmatprep.mubr.bf16.mxu0 0
  %886 = vmatmul.mubr.bf16.gmra.mrb[0].mxu0 %v739
  %v887 = vpop.f32.mrb[0].mxu0
  %v888 = vadd.f32 0.0, %v887
  %v889 = vpop.f32.mrb[0].mxu0
  %v890 = vpop.f32.mrb[0].mxu0
  %v891 = vadd.f32 0.0, %v890
  %v892 = vpop.f32.mrb[0].mxu0
  %893 = vmatprep.mubr.bf16.mxu0 0
  %894 = vmatmul.mubr.bf16.gmra.mrb[0].mxu0 %v742
  %v895 = vpop.f32.mrb[0].mxu0
  %v896 = vadd.f32 0.0, %v895
  %v897 = vpop.f32.mrb[0].mxu0
  %v898 = vpop.f32.mrb[0].mxu0
  %v899 = vadd.f32 0.0, %v898
  %v900 = vpop.f32.mrb[0].mxu0
  %901 = vmatprep.mubr.bf16.mxu0 0
  %902 = vmatmul.mubr.bf16.gmra.mrb[0].mxu0 %v745
  %v903 = vpop.f32.mrb[0].mxu0
  %v904 = vadd.f32 0.0, %v903
  %v905 = vpop.f32.mrb[0].mxu0
  %v906 = vpop.f32.mrb[0].mxu0
  %v907 = vadd.f32 0.0, %v906
  %v908 = vpop.f32.mrb[0].mxu0
  %909 = vmatprep.mubr.bf16.mxu0 0
  %910 = vmatmul.mubr.bf16.gmra.mrb[0].mxu0 %v748
  %v911 = vpop.f32.mrb[0].mxu0
  %v912 = vadd.f32 0.0, %v911
  %v913 = vpop.f32.mrb[0].mxu0
  %v914 = vpop.f32.mrb[0].mxu0
  %v915 = vadd.f32 0.0, %v914
  %v916 = vpop.f32.mrb[0].mxu0
  %917 = vmatprep.mubr.bf16.mxu0 0
  %918 = vmatmul.mubr.bf16.gmra.mrb[0].mxu0 %v751
  %v919 = vpop.f32.mrb[0].mxu0
  %v920 = vadd.f32 0.0, %v919
  %v921 = vpop.f32.mrb[0].mxu0
  %v922 = vpop.f32.mrb[0].mxu0
  %v923 = vadd.f32 0.0, %v922
  %v924 = vpop.f32.mrb[0].mxu0
  %925 = vmatprep.mubr.bf16.mxu0 0
  %926 = vmatmul.mubr.bf16.gmra.mrb[0].mxu0 %v754
  %v927 = vpop.f32.mrb[0].mxu0
  %v928 = vadd.f32 0.0, %v927
  %v929 = vpop.f32.mrb[0].mxu0
  %v930 = vpop.f32.mrb[0].mxu0
  %v931 = vadd.f32 0.0, %v930
  %v932 = vpop.f32.mrb[0].mxu0
  %933 = vmatprep.mubr.bf16.mxu0 0
  %934 = vmatmul.mubr.bf16.gmra.mrb[0].mxu0 %v757
  %v935 = vpop.f32.mrb[0].mxu0
  %v936 = vadd.f32 0.0, %v935
  %v937 = vpop.f32.mrb[0].mxu0
  %v938 = vpop.f32.mrb[0].mxu0
  %v939 = vadd.f32 0.0, %v938
  %v940 = vpop.f32.mrb[0].mxu0
  %941 = vmatprep.mubr.bf16.mxu0 0
  %942 = vmatmul.mubr.bf16.gmra.mrb[0].mxu0 %v760
  %v943 = vpop.f32.mrb[0].mxu0
  %v944 = vadd.f32 0.0, %v943
  %v945 = vpop.f32.mrb[0].mxu0
  %v946 = vpop.f32.mrb[0].mxu0
  %v947 = vadd.f32 0.0, %v946
  %v948 = vpop.f32.mrb[0].mxu0
  %949 = vmatprep.mubr.bf16.mxu0 0
  %950 = vmatmul.mubr.bf16.gmra.mrb[0].mxu0 %v763
  %v951 = vpop.f32.mrb[0].mxu0
  %v952 = vadd.f32 0.0, %v951
  %v953 = vpop.f32.mrb[0].mxu0
  %v954 = vpop.f32.mrb[0].mxu0
  %v955 = vadd.f32 0.0, %v954
  %v956 = vpop.f32.mrb[0].mxu0
  %957 = vmatprep.mubr.bf16.mxu0 0
  %958 = vmatmul.mubr.bf16.gmra.mrb[0].mxu0 %v766
  %v959 = vpop.f32.mrb[0].mxu0
  %v960 = vadd.f32 0.0, %v959
  %v961 = vpop.f32.mrb[0].mxu0
  %v962 = vpop.f32.mrb[0].mxu0
  %v963 = vadd.f32 0.0, %v962
  %v964 = vpop.f32.mrb[0].mxu0
  %965 = vmatprep.mubr.bf16.mxu0 0
  %966 = vmatmul.mubr.bf16.gmra.mrb[0].mxu0 %v769
  %v967 = vpop.f32.mrb[0].mxu0
  %v968 = vadd.f32 0.0, %v967
  %v969 = vpop.f32.mrb[0].mxu0
  %v970 = vpop.f32.mrb[0].mxu0
  %v971 = vadd.f32 0.0, %v970
  %v972 = vpop.f32.mrb[0].mxu0
  %973 = vmatprep.mubr.bf16.mxu0 0
  %974 = vmatmul.mubr.bf16.gmra.mrb[0].mxu0 %v772
  %v975 = vpop.f32.mrb[0].mxu0
  %v976 = vadd.f32 0.0, %v975
  %v977 = vpop.f32.mrb[0].mxu0
  %v978 = vpop.f32.mrb[0].mxu0
  %v979 = vadd.f32 0.0, %v978
  %v980 = vpop.f32.mrb[0].mxu0
  %981 = vmatprep.mubr.bf16.mxu0 0
  %982 = vmatmul.mubr.bf16.gmra.mrb[0].mxu0 %v775
  %v983 = vpop.f32.mrb[0].mxu0
  %v984 = vadd.f32 0.0, %v983
  %v985 = vpop.f32.mrb[0].mxu0
  %v986 = vpop.f32.mrb[0].mxu0
  %v987 = vadd.f32 0.0, %v986
  %v988 = vpop.f32.mrb[0].mxu0
  %989 = vmatprep.mubr.bf16.mxu0 0
  %990 = vmatmul.mubr.bf16.gmra.mrb[0].mxu0 %v778
  %v991 = vpop.f32.mrb[0].mxu0
  %v992 = vadd.f32 0.0, %v991
  %v993 = vpop.f32.mrb[0].mxu0
  %v994 = vpop.f32.mrb[0].mxu0
  %v995 = vadd.f32 0.0, %v994
  %v996 = vpop.f32.mrb[0].mxu0
  %997 = vmatprep.mubr.bf16.mxu0 0
  %998 = vmatmul.mubr.bf16.gmra.mrb[0].mxu0 %v781
  %v999 = vpop.f32.mrb[0].mxu0
  %v1000 = vadd.f32 0.0, %v999
  %v1001 = vpop.f32.mrb[0].mxu0
  %v1002 = vpop.f32.mrb[0].mxu0
  %v1003 = vadd.f32 0.0, %v1002
  %v1004 = vpop.f32.mrb[0].mxu0
  %1005 = vmatprep.mubr.bf16.mxu0 0
  %1006 = vmatmul.mubr.bf16.gmra.mrb[0].mxu0 %v784
  %v1007 = vpop.f32.mrb[0].mxu0
  %v1008 = vadd.f32 0.0, %v1007
  %v1009 = vpop.f32.mrb[0].mxu0
  %v1010 = vpop.f32.mrb[0].mxu0
  %v1011 = vadd.f32 0.0, %v1010
  %v1012 = vpop.f32.mrb[0].mxu0
  %1013 = vmatprep.mubr.bf16.mxu0 0
  %1014 = vmatmul.mubr.bf16.gmra.mrb[0].mxu0 %v787
  %v1015 = vpop.f32.mrb[0].mxu0
  %v1016 = vadd.f32 0.0, %v1015
  %v1017 = vpop.f32.mrb[0].mxu0
  %v1018 = vpop.f32.mrb[0].mxu0
  %v1019 = vpop.f32.mrb[0].mxu0
  %1020 = vdwg.mxu0
  %v1021 = vmax.f32 %v344, %v824
  %v1022 = vmax.f32 %v347, %v827
  %v1023 = vmax.f32 %v352, %v832
  %v1024 = vmax.f32 %v355, %v835
  %v1025 = vmax.f32 %v360, %v840
  %v1026 = vmax.f32 %v363, %v843
  %v1027 = vmax.f32 %v368, %v848
  %v1028 = vmax.f32 %v371, %v851
  %v1029 = vmax.f32 %v376, %v856
  %v1030 = vmax.f32 %v379, %v859
  %v1031 = vmax.f32 %v384, %v864
  %v1032 = vmax.f32 %v387, %v867
  %v1033 = vmax.f32 %v392, %v872
  %v1034 = vmax.f32 %v395, %v875
  %v1035 = vmax.f32 %v400, %v880
  %v1036 = vmax.f32 %v403, %v883
  %v1037 = vmax.f32 %v408, %v888
  %v1038 = vmax.f32 %v411, %v891
  %v1039 = vmax.f32 %v416, %v896
  %v1040 = vmax.f32 %v419, %v899
  %v1041 = vmax.f32 %v424, %v904
  %v1042 = vmax.f32 %v427, %v907
  %v1043 = vmax.f32 %v432, %v912
  %v1044 = vmax.f32 %v435, %v915
  %v1045 = vmax.f32 %v440, %v920
  %v1046 = vmax.f32 %v443, %v923
  %v1047 = vmax.f32 %v448, %v928
  %v1048 = vmax.f32 %v451, %v931
  %v1049 = vmax.f32 %v456, %v936
  %v1050 = vmax.f32 %v459, %v939
  %v1051 = vmax.f32 %v464, %v944
  %v1052 = vmax.f32 %v467, %v947
  %v1053 = vmax.f32 %v472, %v952
  %v1054 = vmax.f32 %v475, %v955
  %v1055 = vmax.f32 %v480, %v960
  %v1056 = vmax.f32 %v483, %v963
  %v1057 = vmax.f32 %v488, %v968
  %v1058 = vmax.f32 %v491, %v971
  %v1059 = vmax.f32 %v496, %v976
  %v1060 = vmax.f32 %v499, %v979
  %v1061 = vmax.f32 %v504, %v984
  %v1062 = vmax.f32 %v507, %v987
  %v1063 = vmax.f32 %v512, %v992
  %v1064 = vmax.f32 %v515, %v995
  %v1065 = vmax.f32 %v520, %v1000
  %v1066 = vmax.f32 %v523, %v1003
  %v1067 = vmax.f32 %v528, %v1008
  %v1068 = vmax.f32 %v531, %v1011
  %v1069 = vmax.f32 %v536, %v1016
  %s1070 = scalar_lea.vmem %s0, 392
  %v1071 = vld [vmem:[%s1070] sm:$0xf]
  %v1072 = vld [vmem:[%s1070 + $0x4] sm:$0xf]
  %v1073 = vld [vmem:[%s1070 + $0x8] sm:$0xf]
  %v1074 = vld [vmem:[%s1070 + $0xc] sm:$0xf]
  %v1075 = vld [vmem:[%s1070 + $0x10] sm:$0xf]
  %v1076 = vld [vmem:[%s1070 + $0x14] sm:$0xf]
  %v1077 = vld [vmem:[%s1070 + $0x18] sm:$0xf]
  %v1078 = vld [vmem:[%s1070 + $0x1c] sm:$0xf]
  %v1079 = vld [vmem:[%s1070 + $0x20] sm:$0xf]
  %v1080 = vld [vmem:[%s1070 + $0x24] sm:$0xf]
  %v1081 = vld [vmem:[%s1070 + $0x28] sm:$0xf]
  %v1082 = vld [vmem:[%s1070 + $0x2c] sm:$0xf]
  %v1083 = vld [vmem:[%s1070 + $0x30] sm:$0xf]
  %v1084 = vld [vmem:[%s1070 + $0x34] sm:$0xf]
  %v1085 = vld [vmem:[%s1070 + $0x38] sm:$0xf]
  %v1086 = vld [vmem:[%s1070 + $0x3c] sm:$0xf]
  %v1087 = vld [vmem:[%s1070 + $0x40] sm:$0xf]
  %v1088 = vld [vmem:[%s1070 + $0x44] sm:$0xf]
  %v1089 = vld [vmem:[%s1070 + $0x48] sm:$0xf]
  %v1090 = vld [vmem:[%s1070 + $0x4c] sm:$0xf]
  %v1091 = vld [vmem:[%s1070 + $0x50] sm:$0xf]
  %v1092 = vld [vmem:[%s1070 + $0x54] sm:$0xf]
  %v1093 = vld [vmem:[%s1070 + $0x58] sm:$0xf]
  %v1094 = vld [vmem:[%s1070 + $0x5c] sm:$0xf]
  %v1095 = vld [vmem:[%s1070 + $0x60] sm:$0xf]
  %v1096 = vld [vmem:[%s1070 + $0x64] sm:$0xf]
  %v1097 = vld [vmem:[%s1070 + $0x68] sm:$0xf]
  %v1098 = vld [vmem:[%s1070 + $0x6c] sm:$0xf]
  %v1099 = vld [vmem:[%s1070 + $0x70] sm:$0xf]
  %v1100 = vld [vmem:[%s1070 + $0x74] sm:$0xf]
  %v1101 = vld [vmem:[%s1070 + $0x78] sm:$0xf]
  %v1102 = vld [vmem:[%s1070 + $0x7c] sm:$0xf]
  %v1103 = vld [vmem:[%s1070 + $0x80] sm:$0xf]
  %v1104 = vld [vmem:[%s1070 + $0x84] sm:$0xf]
  %v1105 = vld [vmem:[%s1070 + $0x88] sm:$0xf]
  %v1106 = vld [vmem:[%s1070 + $0x8c] sm:$0xf]
  %v1107 = vld [vmem:[%s1070 + $0x90] sm:$0xf]
  %v1108 = vld [vmem:[%s1070 + $0x94] sm:$0xf]
  %v1109 = vld [vmem:[%s1070 + $0x98] sm:$0xf]
  %v1110 = vld [vmem:[%s1070 + $0x9c] sm:$0xf]
  %v1111 = vld [vmem:[%s1070 + $0xa0] sm:$0xf]
  %v1112 = vld [vmem:[%s1070 + $0xa4] sm:$0xf]
  %v1113 = vld [vmem:[%s1070 + $0xa8] sm:$0xf]
  %v1114 = vld [vmem:[%s1070 + $0xac] sm:$0xf]
  %v1115 = vld [vmem:[%s1070 + $0xb0] sm:$0xf]
  %v1116 = vld [vmem:[%s1070 + $0xb4] sm:$0xf]
  %v1117 = vld [vmem:[%s1070 + $0xb8] sm:$0xf]
  %v1118 = vld [vmem:[%s1070 + $0xbc] sm:$0xf]
  %v1119 = vld [vmem:[%s1070 + $0xc0] sm:$0xf]
  %v1169 = vunpack.c.l.b16 %v1071
  %v1170 = vunpack.c.l.b16 %v1072
  %v1171 = vunpack.c.l.b16 %v1073
  %v1172 = vunpack.c.l.b16 %v1074
  %v1173 = vunpack.c.l.b16 %v1075
  %v1174 = vunpack.c.l.b16 %v1076
  %v1175 = vunpack.c.l.b16 %v1077
  %v1176 = vunpack.c.l.b16 %v1078
  %v1177 = vunpack.c.l.b16 %v1079
  %v1178 = vunpack.c.l.b16 %v1080
  %v1179 = vunpack.c.l.b16 %v1081
  %v1180 = vunpack.c.l.b16 %v1082
  %v1181 = vunpack.c.l.b16 %v1083
  %v1182 = vunpack.c.l.b16 %v1084
  %v1183 = vunpack.c.l.b16 %v1085
  %v1184 = vunpack.c.l.b16 %v1086
  %v1185 = vunpack.c.l.b16 %v1087
  %v1186 = vunpack.c.l.b16 %v1088
  %v1187 = vunpack.c.l.b16 %v1089
  %v1188 = vunpack.c.l.b16 %v1090
  %v1189 = vunpack.c.l.b16 %v1091
  %v1190 = vunpack.c.l.b16 %v1092
  %v1191 = vunpack.c.l.b16 %v1093
  %v1192 = vunpack.c.l.b16 %v1094
  %v1193 = vunpack.c.l.b16 %v1095
  %v1194 = vunpack.c.l.b16 %v1096
  %v1195 = vunpack.c.l.b16 %v1097
  %v1196 = vunpack.c.l.b16 %v1098
  %v1197 = vunpack.c.l.b16 %v1099
  %v1198 = vunpack.c.l.b16 %v1100
  %v1199 = vunpack.c.l.b16 %v1101
  %v1200 = vunpack.c.l.b16 %v1102
  %v1201 = vunpack.c.l.b16 %v1103
  %v1202 = vunpack.c.l.b16 %v1104
  %v1203 = vunpack.c.l.b16 %v1105
  %v1204 = vunpack.c.l.b16 %v1106
  %v1205 = vunpack.c.l.b16 %v1107
  %v1206 = vunpack.c.l.b16 %v1108
  %v1207 = vunpack.c.l.b16 %v1109
  %v1208 = vunpack.c.l.b16 %v1110
  %v1209 = vunpack.c.l.b16 %v1111
  %v1210 = vunpack.c.l.b16 %v1112
  %v1211 = vunpack.c.l.b16 %v1113
  %v1212 = vunpack.c.l.b16 %v1114
  %v1213 = vunpack.c.l.b16 %v1115
  %v1214 = vunpack.c.l.b16 %v1116
  %v1215 = vunpack.c.l.b16 %v1117
  %v1216 = vunpack.c.l.b16 %v1118
  %v1217 = vunpack.c.l.b16 %v1119
  %v1218 = vpack.c.b16 %v1170, %v1169
  %v1219 = vpack.c.b16 %v1172, %v1171
  %v1220 = vpack.c.b16 %v1174, %v1173
  %v1221 = vpack.c.b16 %v1176, %v1175
  %v1222 = vpack.c.b16 %v1178, %v1177
  %v1223 = vpack.c.b16 %v1180, %v1179
  %v1224 = vpack.c.b16 %v1182, %v1181
  %v1225 = vpack.c.b16 %v1184, %v1183
  %v1226 = vpack.c.b16 %v1186, %v1185
  %v1227 = vpack.c.b16 %v1188, %v1187
  %v1228 = vpack.c.b16 %v1190, %v1189
  %v1229 = vpack.c.b16 %v1192, %v1191
  %v1230 = vpack.c.b16 %v1194, %v1193
  %v1231 = vpack.c.b16 %v1196, %v1195
  %v1232 = vpack.c.b16 %v1198, %v1197
  %v1233 = vpack.c.b16 %v1200, %v1199
  %v1234 = vpack.c.b16 %v1202, %v1201
  %v1235 = vpack.c.b16 %v1204, %v1203
  %v1236 = vpack.c.b16 %v1206, %v1205
  %v1237 = vpack.c.b16 %v1208, %v1207
  %v1238 = vpack.c.b16 %v1210, %v1209
  %v1239 = vpack.c.b16 %v1212, %v1211
  %v1240 = vpack.c.b16 %v1214, %v1213
  %v1241 = vpack.c.b16 %v1216, %v1215
  %v1242 = vpack.c.b16 %v1217, %v1217
  %v1244 = vsel %vm226, %v1218, 0
  %v1247 = vsel %vm226, %v1219, 0
  %v1250 = vsel %vm226, %v1220, 0
  %v1253 = vsel %vm226, %v1221, 0
  %v1256 = vsel %vm226, %v1222, 0
  %v1259 = vsel %vm226, %v1223, 0
  %v1262 = vsel %vm226, %v1224, 0
  %v1265 = vsel %vm226, %v1225, 0
  %v1268 = vsel %vm226, %v1226, 0
  %v1271 = vsel %vm226, %v1227, 0
  %v1274 = vsel %vm226, %v1228, 0
  %v1277 = vsel %vm226, %v1229, 0
  %v1280 = vsel %vm226, %v1230, 0
  %v1283 = vsel %vm226, %v1231, 0
  %v1286 = vsel %vm226, %v1232, 0
  %v1289 = vsel %vm226, %v1233, 0
  %v1292 = vsel %vm226, %v1234, 0
  %v1295 = vsel %vm226, %v1235, 0
  %v1298 = vsel %vm226, %v1236, 0
  %v1301 = vsel %vm226, %v1237, 0
  %v1304 = vsel %vm226, %v1238, 0
  %v1307 = vsel %vm226, %v1239, 0
  %v1310 = vsel %vm226, %v1240, 0
  %v1313 = vsel %vm226, %v1241, 0
  %v1316 = vsel %vm226, %v1242, 0
  %1318 = vmatprep.subr.bf16.mxu0 0
  %1319 = vmatpush1.bf16.msra.mxu0 %v217
  %1320 = vmatprep.subr.bf16.mxu0 0
  %1321 = vmatpush1.bf16.msra.mxu0 %v218
  %1322 = vmatprep.subr.bf16.mxu0 0
  %1323 = vmatpush1.bf16.msra.mxu0 %v219
  %1324 = vmatprep.subr.bf16.mxu0 0
  %1325 = vmatpush1.bf16.msra.mxu0 %v220
  %1326 = vmatprep.subr.bf16.mxu0 0
  %1327 = vmatpush1.bf16.msra.mxu0 %v307
  %1328 = vmatprep.subr.bf16.mxu0 0
  %1329 = vmatpush1.bf16.msra.mxu0 0
  %1330 = vmatprep.subr.bf16.mxu0 0
  %1331 = vmatpush1.bf16.msra.mxu0 0
  %1332 = vmatprep.subr.bf16.mxu0 0
  %1333 = vmatpush1.bf16.msra.mxu0 0
  %1334 = vmatprep.subr.bf16.mxu0 0
  %1335 = vmatpush1.bf16.msra.mxu0 0
  %1336 = vmatprep.subr.bf16.mxu0 0
  %1337 = vmatpush1.bf16.msra.mxu0 0
  %1338 = vmatprep.subr.bf16.mxu0 0
  %1339 = vmatpush1.bf16.msra.mxu0 0
  %1340 = vmatprep.subr.bf16.mxu0 0
  %1341 = vmatpush1.bf16.msra.mxu0 0
  %1342 = vmatprep.subr.bf16.mxu0 0
  %1343 = vmatpush1.bf16.msra.mxu0 0
  %1344 = vmatprep.subr.bf16.mxu0 0
  %1345 = vmatpush1.bf16.msra.mxu0 0
  %1346 = vmatprep.subr.bf16.mxu0 0
  %1347 = vmatpush1.bf16.msra.mxu0 0
  %1348 = vmatprep.subr.bf16.mxu0 0
  %1349 = vmatpush1.bf16.msra.mxu0 0
  %1350 = vmatprep.mubr.bf16.mxu0 0
  %1351 = vmatmul.mubr.bf16.gmra.mrb[0].mxu0 %v1244
  %v1352 = vpop.f32.mrb[0].mxu0
  %v1353 = vadd.f32 0.0, %v1352
  %v1354 = vpop.f32.mrb[0].mxu0
  %v1355 = vpop.f32.mrb[0].mxu0
  %v1356 = vadd.f32 0.0, %v1355
  %v1357 = vpop.f32.mrb[0].mxu0
  %1358 = vmatprep.mubr.bf16.mxu0 0
  %1359 = vmatmul.mubr.bf16.gmra.mrb[0].mxu0 %v1247
  %v1360 = vpop.f32.mrb[0].mxu0
  %v1361 = vadd.f32 0.0, %v1360
  %v1362 = vpop.f32.mrb[0].mxu0
  %v1363 = vpop.f32.mrb[0].mxu0
  %v1364 = vadd.f32 0.0, %v1363
  %v1365 = vpop.f32.mrb[0].mxu0
  %1366 = vmatprep.mubr.bf16.mxu0 0
  %1367 = vmatmul.mubr.bf16.gmra.mrb[0].mxu0 %v1250
  %v1368 = vpop.f32.mrb[0].mxu0
  %v1369 = vadd.f32 0.0, %v1368
  %v1370 = vpop.f32.mrb[0].mxu0
  %v1371 = vpop.f32.mrb[0].mxu0
  %v1372 = vadd.f32 0.0, %v1371
  %v1373 = vpop.f32.mrb[0].mxu0
  %1374 = vmatprep.mubr.bf16.mxu0 0
  %1375 = vmatmul.mubr.bf16.gmra.mrb[0].mxu0 %v1253
  %v1376 = vpop.f32.mrb[0].mxu0
  %v1377 = vadd.f32 0.0, %v1376
  %v1378 = vpop.f32.mrb[0].mxu0
  %v1379 = vpop.f32.mrb[0].mxu0
  %v1380 = vadd.f32 0.0, %v1379
  %v1381 = vpop.f32.mrb[0].mxu0
  %1382 = vmatprep.mubr.bf16.mxu0 0
  %1383 = vmatmul.mubr.bf16.gmra.mrb[0].mxu0 %v1256
  %v1384 = vpop.f32.mrb[0].mxu0
  %v1385 = vadd.f32 0.0, %v1384
  %v1386 = vpop.f32.mrb[0].mxu0
  %v1387 = vpop.f32.mrb[0].mxu0
  %v1388 = vadd.f32 0.0, %v1387
  %v1389 = vpop.f32.mrb[0].mxu0
  %1390 = vmatprep.mubr.bf16.mxu0 0
  %1391 = vmatmul.mubr.bf16.gmra.mrb[0].mxu0 %v1259
  %v1392 = vpop.f32.mrb[0].mxu0
  %v1393 = vadd.f32 0.0, %v1392
  %v1394 = vpop.f32.mrb[0].mxu0
  %v1395 = vpop.f32.mrb[0].mxu0
  %v1396 = vadd.f32 0.0, %v1395
  %v1397 = vpop.f32.mrb[0].mxu0
  %1398 = vmatprep.mubr.bf16.mxu0 0
  %1399 = vmatmul.mubr.bf16.gmra.mrb[0].mxu0 %v1262
  %v1400 = vpop.f32.mrb[0].mxu0
  %v1401 = vadd.f32 0.0, %v1400
  %v1402 = vpop.f32.mrb[0].mxu0
  %v1403 = vpop.f32.mrb[0].mxu0
  %v1404 = vadd.f32 0.0, %v1403
  %v1405 = vpop.f32.mrb[0].mxu0
  %1406 = vmatprep.mubr.bf16.mxu0 0
  %1407 = vmatmul.mubr.bf16.gmra.mrb[0].mxu0 %v1265
  %v1408 = vpop.f32.mrb[0].mxu0
  %v1409 = vadd.f32 0.0, %v1408
  %v1410 = vpop.f32.mrb[0].mxu0
  %v1411 = vpop.f32.mrb[0].mxu0
  %v1412 = vadd.f32 0.0, %v1411
  %v1413 = vpop.f32.mrb[0].mxu0
  %1414 = vmatprep.mubr.bf16.mxu0 0
  %1415 = vmatmul.mubr.bf16.gmra.mrb[0].mxu0 %v1268
  %v1416 = vpop.f32.mrb[0].mxu0
  %v1417 = vadd.f32 0.0, %v1416
  %v1418 = vpop.f32.mrb[0].mxu0
  %v1419 = vpop.f32.mrb[0].mxu0
  %v1420 = vadd.f32 0.0, %v1419
  %v1421 = vpop.f32.mrb[0].mxu0
  %1422 = vmatprep.mubr.bf16.mxu0 0
  %1423 = vmatmul.mubr.bf16.gmra.mrb[0].mxu0 %v1271
  %v1424 = vpop.f32.mrb[0].mxu0
  %v1425 = vadd.f32 0.0, %v1424
  %v1426 = vpop.f32.mrb[0].mxu0
  %v1427 = vpop.f32.mrb[0].mxu0
  %v1428 = vadd.f32 0.0, %v1427
  %v1429 = vpop.f32.mrb[0].mxu0
  %1430 = vmatprep.mubr.bf16.mxu0 0
  %1431 = vmatmul.mubr.bf16.gmra.mrb[0].mxu0 %v1274
  %v1432 = vpop.f32.mrb[0].mxu0
  %v1433 = vadd.f32 0.0, %v1432
  %v1434 = vpop.f32.mrb[0].mxu0
  %v1435 = vpop.f32.mrb[0].mxu0
  %v1436 = vadd.f32 0.0, %v1435
  %v1437 = vpop.f32.mrb[0].mxu0
  %1438 = vmatprep.mubr.bf16.mxu0 0
  %1439 = vmatmul.mubr.bf16.gmra.mrb[0].mxu0 %v1277
  %v1440 = vpop.f32.mrb[0].mxu0
  %v1441 = vadd.f32 0.0, %v1440
  %v1442 = vpop.f32.mrb[0].mxu0
  %v1443 = vpop.f32.mrb[0].mxu0
  %v1444 = vadd.f32 0.0, %v1443
  %v1445 = vpop.f32.mrb[0].mxu0
  %1446 = vmatprep.mubr.bf16.mxu0 0
  %1447 = vmatmul.mubr.bf16.gmra.mrb[0].mxu0 %v1280
  %v1448 = vpop.f32.mrb[0].mxu0
  %v1449 = vadd.f32 0.0, %v1448
  %v1450 = vpop.f32.mrb[0].mxu0
  %v1451 = vpop.f32.mrb[0].mxu0
  %v1452 = vadd.f32 0.0, %v1451
  %v1453 = vpop.f32.mrb[0].mxu0
  %1454 = vmatprep.mubr.bf16.mxu0 0
  %1455 = vmatmul.mubr.bf16.gmra.mrb[0].mxu0 %v1283
  %v1456 = vpop.f32.mrb[0].mxu0
  %v1457 = vadd.f32 0.0, %v1456
  %v1458 = vpop.f32.mrb[0].mxu0
  %v1459 = vpop.f32.mrb[0].mxu0
  %v1460 = vadd.f32 0.0, %v1459
  %v1461 = vpop.f32.mrb[0].mxu0
  %1462 = vmatprep.mubr.bf16.mxu0 0
  %1463 = vmatmul.mubr.bf16.gmra.mrb[0].mxu0 %v1286
  %v1464 = vpop.f32.mrb[0].mxu0
  %v1465 = vadd.f32 0.0, %v1464
  %v1466 = vpop.f32.mrb[0].mxu0
  %v1467 = vpop.f32.mrb[0].mxu0
  %v1468 = vadd.f32 0.0, %v1467
  %v1469 = vpop.f32.mrb[0].mxu0
  %1470 = vmatprep.mubr.bf16.mxu0 0
  %1471 = vmatmul.mubr.bf16.gmra.mrb[0].mxu0 %v1289
  %v1472 = vpop.f32.mrb[0].mxu0
  %v1473 = vadd.f32 0.0, %v1472
  %v1474 = vpop.f32.mrb[0].mxu0
  %v1475 = vpop.f32.mrb[0].mxu0
  %v1476 = vadd.f32 0.0, %v1475
  %v1477 = vpop.f32.mrb[0].mxu0
  %1478 = vmatprep.mubr.bf16.mxu0 0
  %1479 = vmatmul.mubr.bf16.gmra.mrb[0].mxu0 %v1292
  %v1480 = vpop.f32.mrb[0].mxu0
  %v1481 = vadd.f32 0.0, %v1480
  %v1482 = vpop.f32.mrb[0].mxu0
  %v1483 = vpop.f32.mrb[0].mxu0
  %v1484 = vadd.f32 0.0, %v1483
  %v1485 = vpop.f32.mrb[0].mxu0
  %1486 = vmatprep.mubr.bf16.mxu0 0
  %1487 = vmatmul.mubr.bf16.gmra.mrb[0].mxu0 %v1295
  %v1488 = vpop.f32.mrb[0].mxu0
  %v1489 = vadd.f32 0.0, %v1488
  %v1490 = vpop.f32.mrb[0].mxu0
  %v1491 = vpop.f32.mrb[0].mxu0
  %v1492 = vadd.f32 0.0, %v1491
  %v1493 = vpop.f32.mrb[0].mxu0
  %1494 = vmatprep.mubr.bf16.mxu0 0
  %1495 = vmatmul.mubr.bf16.gmra.mrb[0].mxu0 %v1298
  %v1496 = vpop.f32.mrb[0].mxu0
  %v1497 = vadd.f32 0.0, %v1496
  %v1498 = vpop.f32.mrb[0].mxu0
  %v1499 = vpop.f32.mrb[0].mxu0
  %v1500 = vadd.f32 0.0, %v1499
  %v1501 = vpop.f32.mrb[0].mxu0
  %1502 = vmatprep.mubr.bf16.mxu0 0
  %1503 = vmatmul.mubr.bf16.gmra.mrb[0].mxu0 %v1301
  %v1504 = vpop.f32.mrb[0].mxu0
  %v1505 = vadd.f32 0.0, %v1504
  %v1506 = vpop.f32.mrb[0].mxu0
  %v1507 = vpop.f32.mrb[0].mxu0
  %v1508 = vadd.f32 0.0, %v1507
  %v1509 = vpop.f32.mrb[0].mxu0
  %1510 = vmatprep.mubr.bf16.mxu0 0
  %1511 = vmatmul.mubr.bf16.gmra.mrb[0].mxu0 %v1304
  %v1512 = vpop.f32.mrb[0].mxu0
  %v1513 = vadd.f32 0.0, %v1512
  %v1514 = vpop.f32.mrb[0].mxu0
  %v1515 = vpop.f32.mrb[0].mxu0
  %v1516 = vadd.f32 0.0, %v1515
  %v1517 = vpop.f32.mrb[0].mxu0
  %1518 = vmatprep.mubr.bf16.mxu0 0
  %1519 = vmatmul.mubr.bf16.gmra.mrb[0].mxu0 %v1307
  %v1520 = vpop.f32.mrb[0].mxu0
  %v1521 = vadd.f32 0.0, %v1520
  %v1522 = vpop.f32.mrb[0].mxu0
  %v1523 = vpop.f32.mrb[0].mxu0
  %v1524 = vadd.f32 0.0, %v1523
  %v1525 = vpop.f32.mrb[0].mxu0
  %1526 = vmatprep.mubr.bf16.mxu0 0
  %1527 = vmatmul.mubr.bf16.gmra.mrb[0].mxu0 %v1310
  %v1528 = vpop.f32.mrb[0].mxu0
  %v1529 = vadd.f32 0.0, %v1528
  %v1530 = vpop.f32.mrb[0].mxu0
  %v1531 = vpop.f32.mrb[0].mxu0
  %v1532 = vadd.f32 0.0, %v1531
  %v1533 = vpop.f32.mrb[0].mxu0
  %1534 = vmatprep.mubr.bf16.mxu0 0
  %1535 = vmatmul.mubr.bf16.gmra.mrb[0].mxu0 %v1313
  %v1536 = vpop.f32.mrb[0].mxu0
  %v1537 = vadd.f32 0.0, %v1536
  %v1538 = vpop.f32.mrb[0].mxu0
  %v1539 = vpop.f32.mrb[0].mxu0
  %v1540 = vadd.f32 0.0, %v1539
  %v1541 = vpop.f32.mrb[0].mxu0
  %1542 = vmatprep.mubr.bf16.mxu0 0
  %1543 = vmatmul.mubr.bf16.gmra.mrb[0].mxu0 %v1316
  %v1544 = vpop.f32.mrb[0].mxu0
  %v1545 = vadd.f32 0.0, %v1544
  %v1546 = vpop.f32.mrb[0].mxu0
  %v1547 = vpop.f32.mrb[0].mxu0
  %v1548 = vpop.f32.mrb[0].mxu0
  %1549 = vdwg.mxu0
  %v1550 = vmax.f32 %v1021, %v1353
  %v1551 = vmax.f32 %v1022, %v1356
  %v1552 = vmax.f32 %v1023, %v1361
  %v1553 = vmax.f32 %v1024, %v1364
  %v1554 = vmax.f32 %v1025, %v1369
  %v1555 = vmax.f32 %v1026, %v1372
  %v1556 = vmax.f32 %v1027, %v1377
  %v1557 = vmax.f32 %v1028, %v1380
  %v1558 = vmax.f32 %v1029, %v1385
  %v1559 = vmax.f32 %v1030, %v1388
  %v1560 = vmax.f32 %v1031, %v1393
  %v1561 = vmax.f32 %v1032, %v1396
  %v1562 = vmax.f32 %v1033, %v1401
  %v1563 = vmax.f32 %v1034, %v1404
  %v1564 = vmax.f32 %v1035, %v1409
  %v1565 = vmax.f32 %v1036, %v1412
  %v1566 = vmax.f32 %v1037, %v1417
  %v1567 = vmax.f32 %v1038, %v1420
  %v1568 = vmax.f32 %v1039, %v1425
  %v1569 = vmax.f32 %v1040, %v1428
  %v1570 = vmax.f32 %v1041, %v1433
  %v1571 = vmax.f32 %v1042, %v1436
  %v1572 = vmax.f32 %v1043, %v1441
  %v1573 = vmax.f32 %v1044, %v1444
  %v1574 = vmax.f32 %v1045, %v1449
  %v1575 = vmax.f32 %v1046, %v1452
  %v1576 = vmax.f32 %v1047, %v1457
  %v1577 = vmax.f32 %v1048, %v1460
  %v1578 = vmax.f32 %v1049, %v1465
  %v1579 = vmax.f32 %v1050, %v1468
  %v1580 = vmax.f32 %v1051, %v1473
  %v1581 = vmax.f32 %v1052, %v1476
  %v1582 = vmax.f32 %v1053, %v1481
  %v1583 = vmax.f32 %v1054, %v1484
  %v1584 = vmax.f32 %v1055, %v1489
  %v1585 = vmax.f32 %v1056, %v1492
  %v1586 = vmax.f32 %v1057, %v1497
  %v1587 = vmax.f32 %v1058, %v1500
  %v1588 = vmax.f32 %v1059, %v1505
  %v1589 = vmax.f32 %v1060, %v1508
  %v1590 = vmax.f32 %v1061, %v1513
  %v1591 = vmax.f32 %v1062, %v1516
  %v1592 = vmax.f32 %v1063, %v1521
  %v1593 = vmax.f32 %v1064, %v1524
  %v1594 = vmax.f32 %v1065, %v1529
  %v1595 = vmax.f32 %v1066, %v1532
  %v1596 = vmax.f32 %v1067, %v1537
  %v1597 = vmax.f32 %v1068, %v1540
  %v1598 = vmax.f32 %v1069, %v1545
  %s1599 = scalar_lea.vmem %s0, 588
  %v1600 = vld [vmem:[%s1599] sm:$0xf]
  %v1601 = vld [vmem:[%s1599 + $0x4] sm:$0xf]
  %v1602 = vld [vmem:[%s1599 + $0x8] sm:$0xf]
  %v1603 = vld [vmem:[%s1599 + $0xc] sm:$0xf]
  %v1604 = vld [vmem:[%s1599 + $0x10] sm:$0xf]
  %v1605 = vld [vmem:[%s1599 + $0x14] sm:$0xf]
  %v1606 = vld [vmem:[%s1599 + $0x18] sm:$0xf]
  %v1607 = vld [vmem:[%s1599 + $0x1c] sm:$0xf]
  %v1608 = vld [vmem:[%s1599 + $0x20] sm:$0xf]
  %v1609 = vld [vmem:[%s1599 + $0x24] sm:$0xf]
  %v1610 = vld [vmem:[%s1599 + $0x28] sm:$0xf]
  %v1611 = vld [vmem:[%s1599 + $0x2c] sm:$0xf]
  %v1612 = vld [vmem:[%s1599 + $0x30] sm:$0xf]
  %v1613 = vld [vmem:[%s1599 + $0x34] sm:$0xf]
  %v1614 = vld [vmem:[%s1599 + $0x38] sm:$0xf]
  %v1615 = vld [vmem:[%s1599 + $0x3c] sm:$0xf]
  %v1616 = vld [vmem:[%s1599 + $0x40] sm:$0xf]
  %v1617 = vld [vmem:[%s1599 + $0x44] sm:$0xf]
  %v1618 = vld [vmem:[%s1599 + $0x48] sm:$0xf]
  %v1619 = vld [vmem:[%s1599 + $0x4c] sm:$0xf]
  %v1620 = vld [vmem:[%s1599 + $0x50] sm:$0xf]
  %v1621 = vld [vmem:[%s1599 + $0x54] sm:$0xf]
  %v1622 = vld [vmem:[%s1599 + $0x58] sm:$0xf]
  %v1623 = vld [vmem:[%s1599 + $0x5c] sm:$0xf]
  %v1624 = vld [vmem:[%s1599 + $0x60] sm:$0xf]
  %v1625 = vld [vmem:[%s1599 + $0x64] sm:$0xf]
  %v1626 = vld [vmem:[%s1599 + $0x68] sm:$0xf]
  %v1627 = vld [vmem:[%s1599 + $0x6c] sm:$0xf]
  %v1628 = vld [vmem:[%s1599 + $0x70] sm:$0xf]
  %v1629 = vld [vmem:[%s1599 + $0x74] sm:$0xf]
  %v1630 = vld [vmem:[%s1599 + $0x78] sm:$0xf]
  %v1631 = vld [vmem:[%s1599 + $0x7c] sm:$0xf]
  %v1632 = vld [vmem:[%s1599 + $0x80] sm:$0xf]
  %v1633 = vld [vmem:[%s1599 + $0x84] sm:$0xf]
  %v1634 = vld [vmem:[%s1599 + $0x88] sm:$0xf]
  %v1635 = vld [vmem:[%s1599 + $0x8c] sm:$0xf]
  %v1636 = vld [vmem:[%s1599 + $0x90] sm:$0xf]
  %v1637 = vld [vmem:[%s1599 + $0x94] sm:$0xf]
  %v1638 = vld [vmem:[%s1599 + $0x98] sm:$0xf]
  %v1639 = vld [vmem:[%s1599 + $0x9c] sm:$0xf]
  %v1640 = vld [vmem:[%s1599 + $0xa0] sm:$0xf]
  %v1641 = vld [vmem:[%s1599 + $0xa4] sm:$0xf]
  %v1642 = vld [vmem:[%s1599 + $0xa8] sm:$0xf]
  %v1643 = vld [vmem:[%s1599 + $0xac] sm:$0xf]
  %v1644 = vld [vmem:[%s1599 + $0xb0] sm:$0xf]
  %v1645 = vld [vmem:[%s1599 + $0xb4] sm:$0xf]
  %v1646 = vld [vmem:[%s1599 + $0xb8] sm:$0xf]
  %v1647 = vld [vmem:[%s1599 + $0xbc] sm:$0xf]
  %v1648 = vld [vmem:[%s1599 + $0xc0] sm:$0xf]
  %v1698 = vunpack.c.l.b16 %v1600
  %v1699 = vunpack.c.l.b16 %v1601
  %v1700 = vunpack.c.l.b16 %v1602
  %v1701 = vunpack.c.l.b16 %v1603
  %v1702 = vunpack.c.l.b16 %v1604
  %v1703 = vunpack.c.l.b16 %v1605
  %v1704 = vunpack.c.l.b16 %v1606
  %v1705 = vunpack.c.l.b16 %v1607
  %v1706 = vunpack.c.l.b16 %v1608
  %v1707 = vunpack.c.l.b16 %v1609
  %v1708 = vunpack.c.l.b16 %v1610
  %v1709 = vunpack.c.l.b16 %v1611
  %v1710 = vunpack.c.l.b16 %v1612
  %v1711 = vunpack.c.l.b16 %v1613
  %v1712 = vunpack.c.l.b16 %v1614
  %v1713 = vunpack.c.l.b16 %v1615
  %v1714 = vunpack.c.l.b16 %v1616
  %v1715 = vunpack.c.l.b16 %v1617
  %v1716 = vunpack.c.l.b16 %v1618
  %v1717 = vunpack.c.l.b16 %v1619
  %v1718 = vunpack.c.l.b16 %v1620
  %v1719 = vunpack.c.l.b16 %v1621
  %v1720 = vunpack.c.l.b16 %v1622
  %v1721 = vunpack.c.l.b16 %v1623
  %v1722 = vunpack.c.l.b16 %v1624
  %v1723 = vunpack.c.l.b16 %v1625
  %v1724 = vunpack.c.l.b16 %v1626
  %v1725 = vunpack.c.l.b16 %v1627
  %v1726 = vunpack.c.l.b16 %v1628
  %v1727 = vunpack.c.l.b16 %v1629
  %v1728 = vunpack.c.l.b16 %v1630
  %v1729 = vunpack.c.l.b16 %v1631
  %v1730 = vunpack.c.l.b16 %v1632
  %v1731 = vunpack.c.l.b16 %v1633
  %v1732 = vunpack.c.l.b16 %v1634
  %v1733 = vunpack.c.l.b16 %v1635
  %v1734 = vunpack.c.l.b16 %v1636
  %v1735 = vunpack.c.l.b16 %v1637
  %v1736 = vunpack.c.l.b16 %v1638
  %v1737 = vunpack.c.l.b16 %v1639
  %v1738 = vunpack.c.l.b16 %v1640
  %v1739 = vunpack.c.l.b16 %v1641
  %v1740 = vunpack.c.l.b16 %v1642
  %v1741 = vunpack.c.l.b16 %v1643
  %v1742 = vunpack.c.l.b16 %v1644
  %v1743 = vunpack.c.l.b16 %v1645
  %v1744 = vunpack.c.l.b16 %v1646
  %v1745 = vunpack.c.l.b16 %v1647
  %v1746 = vunpack.c.l.b16 %v1648
  %v1747 = vpack.c.b16 %v1699, %v1698
  %v1748 = vpack.c.b16 %v1701, %v1700
  %v1749 = vpack.c.b16 %v1703, %v1702
  %v1750 = vpack.c.b16 %v1705, %v1704
  %v1751 = vpack.c.b16 %v1707, %v1706
  %v1752 = vpack.c.b16 %v1709, %v1708
  %v1753 = vpack.c.b16 %v1711, %v1710
  %v1754 = vpack.c.b16 %v1713, %v1712
  %v1755 = vpack.c.b16 %v1715, %v1714
  %v1756 = vpack.c.b16 %v1717, %v1716
  %v1757 = vpack.c.b16 %v1719, %v1718
  %v1758 = vpack.c.b16 %v1721, %v1720
  %v1759 = vpack.c.b16 %v1723, %v1722
  %v1760 = vpack.c.b16 %v1725, %v1724
  %v1761 = vpack.c.b16 %v1727, %v1726
  %v1762 = vpack.c.b16 %v1729, %v1728
  %v1763 = vpack.c.b16 %v1731, %v1730
  %v1764 = vpack.c.b16 %v1733, %v1732
  %v1765 = vpack.c.b16 %v1735, %v1734
  %v1766 = vpack.c.b16 %v1737, %v1736
  %v1767 = vpack.c.b16 %v1739, %v1738
  %v1768 = vpack.c.b16 %v1741, %v1740
  %v1769 = vpack.c.b16 %v1743, %v1742
  %v1770 = vpack.c.b16 %v1745, %v1744
  %v1771 = vpack.c.b16 %v1746, %v1746
  %v1773 = vsel %vm226, %v1747, 0
  %v1776 = vsel %vm226, %v1748, 0
  %v1779 = vsel %vm226, %v1749, 0
  %v1782 = vsel %vm226, %v1750, 0
  %v1785 = vsel %vm226, %v1751, 0
  %v1788 = vsel %vm226, %v1752, 0
  %v1791 = vsel %vm226, %v1753, 0
  %v1794 = vsel %vm226, %v1754, 0
  %v1797 = vsel %vm226, %v1755, 0
  %v1800 = vsel %vm226, %v1756, 0
  %v1803 = vsel %vm226, %v1757, 0
  %v1806 = vsel %vm226, %v1758, 0
  %v1809 = vsel %vm226, %v1759, 0
  %v1812 = vsel %vm226, %v1760, 0
  %v1815 = vsel %vm226, %v1761, 0
  %v1818 = vsel %vm226, %v1762, 0
  %v1821 = vsel %vm226, %v1763, 0
  %v1824 = vsel %vm226, %v1764, 0
  %v1827 = vsel %vm226, %v1765, 0
  %v1830 = vsel %vm226, %v1766, 0
  %v1833 = vsel %vm226, %v1767, 0
  %v1836 = vsel %vm226, %v1768, 0
  %v1839 = vsel %vm226, %v1769, 0
  %v1842 = vsel %vm226, %v1770, 0
  %v1845 = vsel %vm226, %v1771, 0
  %1847 = vmatprep.subr.bf16.mxu0 0
  %1848 = vmatpush1.bf16.msra.mxu0 %v217
  %1849 = vmatprep.subr.bf16.mxu0 0
  %1850 = vmatpush1.bf16.msra.mxu0 %v218
  %1851 = vmatprep.subr.bf16.mxu0 0
  %1852 = vmatpush1.bf16.msra.mxu0 %v219
  %1853 = vmatprep.subr.bf16.mxu0 0
  %1854 = vmatpush1.bf16.msra.mxu0 %v220
  %1855 = vmatprep.subr.bf16.mxu0 0
  %1856 = vmatpush1.bf16.msra.mxu0 %v307
  %1857 = vmatprep.subr.bf16.mxu0 0
  %1858 = vmatpush1.bf16.msra.mxu0 0
  %1859 = vmatprep.subr.bf16.mxu0 0
  %1860 = vmatpush1.bf16.msra.mxu0 0
  %1861 = vmatprep.subr.bf16.mxu0 0
  %1862 = vmatpush1.bf16.msra.mxu0 0
  %1863 = vmatprep.subr.bf16.mxu0 0
  %1864 = vmatpush1.bf16.msra.mxu0 0
  %1865 = vmatprep.subr.bf16.mxu0 0
  %1866 = vmatpush1.bf16.msra.mxu0 0
  %1867 = vmatprep.subr.bf16.mxu0 0
  %1868 = vmatpush1.bf16.msra.mxu0 0
  %1869 = vmatprep.subr.bf16.mxu0 0
  %1870 = vmatpush1.bf16.msra.mxu0 0
  %1871 = vmatprep.subr.bf16.mxu0 0
  %1872 = vmatpush1.bf16.msra.mxu0 0
  %1873 = vmatprep.subr.bf16.mxu0 0
  %1874 = vmatpush1.bf16.msra.mxu0 0
  %1875 = vmatprep.subr.bf16.mxu0 0
  %1876 = vmatpush1.bf16.msra.mxu0 0
  %1877 = vmatprep.subr.bf16.mxu0 0
  %1878 = vmatpush1.bf16.msra.mxu0 0
  %1879 = vmatprep.mubr.bf16.mxu0 0
  %1880 = vmatmul.mubr.bf16.gmra.mrb[0].mxu0 %v1773
  %v1881 = vpop.f32.mrb[0].mxu0
  %v1882 = vadd.f32 0.0, %v1881
  %v1883 = vpop.f32.mrb[0].mxu0
  %v1884 = vpop.f32.mrb[0].mxu0
  %v1885 = vadd.f32 0.0, %v1884
  %v1886 = vpop.f32.mrb[0].mxu0
  %1887 = vmatprep.mubr.bf16.mxu0 0
  %1888 = vmatmul.mubr.bf16.gmra.mrb[0].mxu0 %v1776
  %v1889 = vpop.f32.mrb[0].mxu0
  %v1890 = vadd.f32 0.0, %v1889
  %v1891 = vpop.f32.mrb[0].mxu0
  %v1892 = vpop.f32.mrb[0].mxu0
  %v1893 = vadd.f32 0.0, %v1892
  %v1894 = vpop.f32.mrb[0].mxu0
  %1895 = vmatprep.mubr.bf16.mxu0 0
  %1896 = vmatmul.mubr.bf16.gmra.mrb[0].mxu0 %v1779
  %v1897 = vpop.f32.mrb[0].mxu0
  %v1898 = vadd.f32 0.0, %v1897
  %v1899 = vpop.f32.mrb[0].mxu0
  %v1900 = vpop.f32.mrb[0].mxu0
  %v1901 = vadd.f32 0.0, %v1900
  %v1902 = vpop.f32.mrb[0].mxu0
  %1903 = vmatprep.mubr.bf16.mxu0 0
  %1904 = vmatmul.mubr.bf16.gmra.mrb[0].mxu0 %v1782
  %v1905 = vpop.f32.mrb[0].mxu0
  %v1906 = vadd.f32 0.0, %v1905
  %v1907 = vpop.f32.mrb[0].mxu0
  %v1908 = vpop.f32.mrb[0].mxu0
  %v1909 = vadd.f32 0.0, %v1908
  %v1910 = vpop.f32.mrb[0].mxu0
  %1911 = vmatprep.mubr.bf16.mxu0 0
  %1912 = vmatmul.mubr.bf16.gmra.mrb[0].mxu0 %v1785
  %v1913 = vpop.f32.mrb[0].mxu0
  %v1914 = vadd.f32 0.0, %v1913
  %v1915 = vpop.f32.mrb[0].mxu0
  %v1916 = vpop.f32.mrb[0].mxu0
  %v1917 = vadd.f32 0.0, %v1916
  %v1918 = vpop.f32.mrb[0].mxu0
  %1919 = vmatprep.mubr.bf16.mxu0 0
  %1920 = vmatmul.mubr.bf16.gmra.mrb[0].mxu0 %v1788
  %v1921 = vpop.f32.mrb[0].mxu0
  %v1922 = vadd.f32 0.0, %v1921
  %v1923 = vpop.f32.mrb[0].mxu0
  %v1924 = vpop.f32.mrb[0].mxu0
  %v1925 = vadd.f32 0.0, %v1924
  %v1926 = vpop.f32.mrb[0].mxu0
  %1927 = vmatprep.mubr.bf16.mxu0 0
  %1928 = vmatmul.mubr.bf16.gmra.mrb[0].mxu0 %v1791
  %v1929 = vpop.f32.mrb[0].mxu0
  %v1930 = vadd.f32 0.0, %v1929
  %v1931 = vpop.f32.mrb[0].mxu0
  %v1932 = vpop.f32.mrb[0].mxu0
  %v1933 = vadd.f32 0.0, %v1932
  %v1934 = vpop.f32.mrb[0].mxu0
  %1935 = vmatprep.mubr.bf16.mxu0 0
  %1936 = vmatmul.mubr.bf16.gmra.mrb[0].mxu0 %v1794
  %v1937 = vpop.f32.mrb[0].mxu0
  %v1938 = vadd.f32 0.0, %v1937
  %v1939 = vpop.f32.mrb[0].mxu0
  %v1940 = vpop.f32.mrb[0].mxu0
  %v1941 = vadd.f32 0.0, %v1940
  %v1942 = vpop.f32.mrb[0].mxu0
  %1943 = vmatprep.mubr.bf16.mxu0 0
  %1944 = vmatmul.mubr.bf16.gmra.mrb[0].mxu0 %v1797
  %v1945 = vpop.f32.mrb[0].mxu0
  %v1946 = vadd.f32 0.0, %v1945
  %v1947 = vpop.f32.mrb[0].mxu0
  %v1948 = vpop.f32.mrb[0].mxu0
  %v1949 = vadd.f32 0.0, %v1948
  %v1950 = vpop.f32.mrb[0].mxu0
  %1951 = vmatprep.mubr.bf16.mxu0 0
  %1952 = vmatmul.mubr.bf16.gmra.mrb[0].mxu0 %v1800
  %v1953 = vpop.f32.mrb[0].mxu0
  %v1954 = vadd.f32 0.0, %v1953
  %v1955 = vpop.f32.mrb[0].mxu0
  %v1956 = vpop.f32.mrb[0].mxu0
  %v1957 = vadd.f32 0.0, %v1956
  %v1958 = vpop.f32.mrb[0].mxu0
  %1959 = vmatprep.mubr.bf16.mxu0 0
  %1960 = vmatmul.mubr.bf16.gmra.mrb[0].mxu0 %v1803
  %v1961 = vpop.f32.mrb[0].mxu0
  %v1962 = vadd.f32 0.0, %v1961
  %v1963 = vpop.f32.mrb[0].mxu0
  %v1964 = vpop.f32.mrb[0].mxu0
  %v1965 = vadd.f32 0.0, %v1964
  %v1966 = vpop.f32.mrb[0].mxu0
  %1967 = vmatprep.mubr.bf16.mxu0 0
  %1968 = vmatmul.mubr.bf16.gmra.mrb[0].mxu0 %v1806
  %v1969 = vpop.f32.mrb[0].mxu0
  %v1970 = vadd.f32 0.0, %v1969
  %v1971 = vpop.f32.mrb[0].mxu0
  %v1972 = vpop.f32.mrb[0].mxu0
  %v1973 = vadd.f32 0.0, %v1972
  %v1974 = vpop.f32.mrb[0].mxu0
  %1975 = vmatprep.mubr.bf16.mxu0 0
  %1976 = vmatmul.mubr.bf16.gmra.mrb[0].mxu0 %v1809
  %v1977 = vpop.f32.mrb[0].mxu0
  %v1978 = vadd.f32 0.0, %v1977
  %v1979 = vpop.f32.mrb[0].mxu0
  %v1980 = vpop.f32.mrb[0].mxu0
  %v1981 = vadd.f32 0.0, %v1980
  %v1982 = vpop.f32.mrb[0].mxu0
  %1983 = vmatprep.mubr.bf16.mxu0 0
  %1984 = vmatmul.mubr.bf16.gmra.mrb[0].mxu0 %v1812
  %v1985 = vpop.f32.mrb[0].mxu0
  %v1986 = vadd.f32 0.0, %v1985
  %v1987 = vpop.f32.mrb[0].mxu0
  %v1988 = vpop.f32.mrb[0].mxu0
  %v1989 = vadd.f32 0.0, %v1988
  %v1990 = vpop.f32.mrb[0].mxu0
  %1991 = vmatprep.mubr.bf16.mxu0 0
  %1992 = vmatmul.mubr.bf16.gmra.mrb[0].mxu0 %v1815
  %v1993 = vpop.f32.mrb[0].mxu0
  %v1994 = vadd.f32 0.0, %v1993
  %v1995 = vpop.f32.mrb[0].mxu0
  %v1996 = vpop.f32.mrb[0].mxu0
  %v1997 = vadd.f32 0.0, %v1996
  %v1998 = vpop.f32.mrb[0].mxu0
  %1999 = vmatprep.mubr.bf16.mxu0 0
  %2000 = vmatmul.mubr.bf16.gmra.mrb[0].mxu0 %v1818
  %v2001 = vpop.f32.mrb[0].mxu0
  %v2002 = vadd.f32 0.0, %v2001
  %v2003 = vpop.f32.mrb[0].mxu0
  %v2004 = vpop.f32.mrb[0].mxu0
  %v2005 = vadd.f32 0.0, %v2004
  %v2006 = vpop.f32.mrb[0].mxu0
  %2007 = vmatprep.mubr.bf16.mxu0 0
  %2008 = vmatmul.mubr.bf16.gmra.mrb[0].mxu0 %v1821
  %v2009 = vpop.f32.mrb[0].mxu0
  %v2010 = vadd.f32 0.0, %v2009
  %v2011 = vpop.f32.mrb[0].mxu0
  %v2012 = vpop.f32.mrb[0].mxu0
  %v2013 = vadd.f32 0.0, %v2012
  %v2014 = vpop.f32.mrb[0].mxu0
  %2015 = vmatprep.mubr.bf16.mxu0 0
  %2016 = vmatmul.mubr.bf16.gmra.mrb[0].mxu0 %v1824
  %v2017 = vpop.f32.mrb[0].mxu0
  %v2018 = vadd.f32 0.0, %v2017
  %v2019 = vpop.f32.mrb[0].mxu0
  %v2020 = vpop.f32.mrb[0].mxu0
  %v2021 = vadd.f32 0.0, %v2020
  %v2022 = vpop.f32.mrb[0].mxu0
  %2023 = vmatprep.mubr.bf16.mxu0 0
  %2024 = vmatmul.mubr.bf16.gmra.mrb[0].mxu0 %v1827
  %v2025 = vpop.f32.mrb[0].mxu0
  %v2026 = vadd.f32 0.0, %v2025
  %v2027 = vpop.f32.mrb[0].mxu0
  %v2028 = vpop.f32.mrb[0].mxu0
  %v2029 = vadd.f32 0.0, %v2028
  %v2030 = vpop.f32.mrb[0].mxu0
  %2031 = vmatprep.mubr.bf16.mxu0 0
  %2032 = vmatmul.mubr.bf16.gmra.mrb[0].mxu0 %v1830
  %v2033 = vpop.f32.mrb[0].mxu0
  %v2034 = vadd.f32 0.0, %v2033
  %v2035 = vpop.f32.mrb[0].mxu0
  %v2036 = vpop.f32.mrb[0].mxu0
  %v2037 = vadd.f32 0.0, %v2036
  %v2038 = vpop.f32.mrb[0].mxu0
  %2039 = vmatprep.mubr.bf16.mxu0 0
  %2040 = vmatmul.mubr.bf16.gmra.mrb[0].mxu0 %v1833
  %v2041 = vpop.f32.mrb[0].mxu0
  %v2042 = vadd.f32 0.0, %v2041
  %v2043 = vpop.f32.mrb[0].mxu0
  %v2044 = vpop.f32.mrb[0].mxu0
  %v2045 = vadd.f32 0.0, %v2044
  %v2046 = vpop.f32.mrb[0].mxu0
  %2047 = vmatprep.mubr.bf16.mxu0 0
  %2048 = vmatmul.mubr.bf16.gmra.mrb[0].mxu0 %v1836
  %v2049 = vpop.f32.mrb[0].mxu0
  %v2050 = vadd.f32 0.0, %v2049
  %v2051 = vpop.f32.mrb[0].mxu0
  %v2052 = vpop.f32.mrb[0].mxu0
  %v2053 = vadd.f32 0.0, %v2052
  %v2054 = vpop.f32.mrb[0].mxu0
  %2055 = vmatprep.mubr.bf16.mxu0 0
  %2056 = vmatmul.mubr.bf16.gmra.mrb[0].mxu0 %v1839
  %v2057 = vpop.f32.mrb[0].mxu0
  %v2058 = vadd.f32 0.0, %v2057
  %v2059 = vpop.f32.mrb[0].mxu0
  %v2060 = vpop.f32.mrb[0].mxu0
  %v2061 = vadd.f32 0.0, %v2060
  %v2062 = vpop.f32.mrb[0].mxu0
  %2063 = vmatprep.mubr.bf16.mxu0 0
  %2064 = vmatmul.mubr.bf16.gmra.mrb[0].mxu0 %v1842
  %v2065 = vpop.f32.mrb[0].mxu0
  %v2066 = vadd.f32 0.0, %v2065
  %v2067 = vpop.f32.mrb[0].mxu0
  %v2068 = vpop.f32.mrb[0].mxu0
  %v2069 = vadd.f32 0.0, %v2068
  %v2070 = vpop.f32.mrb[0].mxu0
  %2071 = vmatprep.mubr.bf16.mxu0 0
  %2072 = vmatmul.mubr.bf16.gmra.mrb[0].mxu0 %v1845
  %v2073 = vpop.f32.mrb[0].mxu0
  %v2074 = vadd.f32 0.0, %v2073
  %v2075 = vpop.f32.mrb[0].mxu0
  %v2076 = vpop.f32.mrb[0].mxu0
  %v2077 = vpop.f32.mrb[0].mxu0
  %2078 = vdwg.mxu0
  %v2079 = vmax.f32 %v1550, %v1882
  %v2080 = vmax.f32 %v1551, %v1885
  %v2081 = vmax.f32 %v1552, %v1890
  %v2082 = vmax.f32 %v1553, %v1893
  %v2083 = vmax.f32 %v1554, %v1898
  %v2084 = vmax.f32 %v1555, %v1901
  %v2085 = vmax.f32 %v1556, %v1906
  %v2086 = vmax.f32 %v1557, %v1909
  %v2087 = vmax.f32 %v1558, %v1914
  %v2088 = vmax.f32 %v1559, %v1917
  %v2089 = vmax.f32 %v1560, %v1922
  %v2090 = vmax.f32 %v1561, %v1925
  %v2091 = vmax.f32 %v1562, %v1930
  %v2092 = vmax.f32 %v1563, %v1933
  %v2093 = vmax.f32 %v1564, %v1938
  %v2094 = vmax.f32 %v1565, %v1941
  %v2095 = vmax.f32 %v1566, %v1946
  %v2096 = vmax.f32 %v1567, %v1949
  %v2097 = vmax.f32 %v1568, %v1954
  %v2098 = vmax.f32 %v1569, %v1957
  %v2099 = vmax.f32 %v1570, %v1962
  %v2100 = vmax.f32 %v1571, %v1965
  %v2101 = vmax.f32 %v1572, %v1970
  %v2102 = vmax.f32 %v1573, %v1973
  %v2103 = vmax.f32 %v1574, %v1978
  %v2104 = vmax.f32 %v1575, %v1981
  %v2105 = vmax.f32 %v1576, %v1986
  %v2106 = vmax.f32 %v1577, %v1989
  %v2107 = vmax.f32 %v1578, %v1994
  %v2108 = vmax.f32 %v1579, %v1997
  %v2109 = vmax.f32 %v1580, %v2002
  %v2110 = vmax.f32 %v1581, %v2005
  %v2111 = vmax.f32 %v1582, %v2010
  %v2112 = vmax.f32 %v1583, %v2013
  %v2113 = vmax.f32 %v1584, %v2018
  %v2114 = vmax.f32 %v1585, %v2021
  %v2115 = vmax.f32 %v1586, %v2026
  %v2116 = vmax.f32 %v1587, %v2029
  %v2117 = vmax.f32 %v1588, %v2034
  %v2118 = vmax.f32 %v1589, %v2037
  %v2119 = vmax.f32 %v1590, %v2042
  %v2120 = vmax.f32 %v1591, %v2045
  %v2121 = vmax.f32 %v1592, %v2050
  %v2122 = vmax.f32 %v1593, %v2053
  %v2123 = vmax.f32 %v1594, %v2058
  %v2124 = vmax.f32 %v1595, %v2061
  %v2125 = vmax.f32 %v1596, %v2066
  %v2126 = vmax.f32 %v1597, %v2069
  %v2127 = vmax.f32 %v1598, %v2074
  %v2128 = vld [vmem:[%s2] sm:$0x1]
  %v2130 = vlaneseq
  %v2131 = vshrl.u32 %v2130, 7
  %v2132 = vsub.s32 0, %v2131
  %v2133 = vrot.slane %v2128, %v2132
  %v2135 = vadd.f32 %v2079, %v2133
  %v2136 = vadd.f32 %v2080, %v2133
  %v2137 = vadd.f32 %v2081, %v2133
  %v2138 = vadd.f32 %v2082, %v2133
  %v2139 = vadd.f32 %v2083, %v2133
  %v2140 = vadd.f32 %v2084, %v2133
  %v2141 = vadd.f32 %v2085, %v2133
  %v2142 = vadd.f32 %v2086, %v2133
  %v2143 = vadd.f32 %v2087, %v2133
  %v2144 = vadd.f32 %v2088, %v2133
  %v2145 = vadd.f32 %v2089, %v2133
  %v2146 = vadd.f32 %v2090, %v2133
  %v2147 = vadd.f32 %v2091, %v2133
  %v2148 = vadd.f32 %v2092, %v2133
  %v2149 = vadd.f32 %v2093, %v2133
  %v2150 = vadd.f32 %v2094, %v2133
  %v2151 = vadd.f32 %v2095, %v2133
  %v2152 = vadd.f32 %v2096, %v2133
  %v2153 = vadd.f32 %v2097, %v2133
  %v2154 = vadd.f32 %v2098, %v2133
  %v2155 = vadd.f32 %v2099, %v2133
  %v2156 = vadd.f32 %v2100, %v2133
  %v2157 = vadd.f32 %v2101, %v2133
  %v2158 = vadd.f32 %v2102, %v2133
  %v2159 = vadd.f32 %v2103, %v2133
  %v2160 = vadd.f32 %v2104, %v2133
  %v2161 = vadd.f32 %v2105, %v2133
  %v2162 = vadd.f32 %v2106, %v2133
  %v2163 = vadd.f32 %v2107, %v2133
  %v2164 = vadd.f32 %v2108, %v2133
  %v2165 = vadd.f32 %v2109, %v2133
  %v2166 = vadd.f32 %v2110, %v2133
  %v2167 = vadd.f32 %v2111, %v2133
  %v2168 = vadd.f32 %v2112, %v2133
  %v2169 = vadd.f32 %v2113, %v2133
  %v2170 = vadd.f32 %v2114, %v2133
  %v2171 = vadd.f32 %v2115, %v2133
  %v2172 = vadd.f32 %v2116, %v2133
  %v2173 = vadd.f32 %v2117, %v2133
  %v2174 = vadd.f32 %v2118, %v2133
  %v2175 = vadd.f32 %v2119, %v2133
  %v2176 = vadd.f32 %v2120, %v2133
  %v2177 = vadd.f32 %v2121, %v2133
  %v2178 = vadd.f32 %v2122, %v2133
  %v2179 = vadd.f32 %v2123, %v2133
  %v2180 = vadd.f32 %v2124, %v2133
  %v2181 = vadd.f32 %v2125, %v2133
  %v2182 = vadd.f32 %v2126, %v2133
  %v2183 = vadd.f32 %v2127, %v2133
  %v2184 = vtanh.pop %v2135
  %v2185 = vtanh.pop %v2136
  %v2186 = vtanh.pop %v2137
  %v2187 = vtanh.pop %v2138
  %v2188 = vtanh.pop %v2139
  %v2189 = vtanh.pop %v2140
  %v2190 = vtanh.pop %v2141
  %v2191 = vtanh.pop %v2142
  %v2192 = vtanh.pop %v2143
  %v2193 = vtanh.pop %v2144
  %v2194 = vtanh.pop %v2145
  %v2195 = vtanh.pop %v2146
  %v2196 = vtanh.pop %v2147
  %v2197 = vtanh.pop %v2148
  %v2198 = vtanh.pop %v2149
  %v2199 = vtanh.pop %v2150
  %v2200 = vtanh.pop %v2151
  %v2201 = vtanh.pop %v2152
  %v2202 = vtanh.pop %v2153
  %v2203 = vtanh.pop %v2154
  %v2204 = vtanh.pop %v2155
  %v2205 = vtanh.pop %v2156
  %v2206 = vtanh.pop %v2157
  %v2207 = vtanh.pop %v2158
  %v2208 = vtanh.pop %v2159
  %v2209 = vtanh.pop %v2160
  %v2210 = vtanh.pop %v2161
  %v2211 = vtanh.pop %v2162
  %v2212 = vtanh.pop %v2163
  %v2213 = vtanh.pop %v2164
  %v2214 = vtanh.pop %v2165
  %v2215 = vtanh.pop %v2166
  %v2216 = vtanh.pop %v2167
  %v2217 = vtanh.pop %v2168
  %v2218 = vtanh.pop %v2169
  %v2219 = vtanh.pop %v2170
  %v2220 = vtanh.pop %v2171
  %v2221 = vtanh.pop %v2172
  %v2222 = vtanh.pop %v2173
  %v2223 = vtanh.pop %v2174
  %v2224 = vtanh.pop %v2175
  %v2225 = vtanh.pop %v2176
  %v2226 = vtanh.pop %v2177
  %v2227 = vtanh.pop %v2178
  %v2228 = vtanh.pop %v2179
  %v2229 = vtanh.pop %v2180
  %v2230 = vtanh.pop %v2181
  %v2231 = vtanh.pop %v2182
  %v2232 = vtanh.pop %v2183
  %v2233 = vpack.c.bf16 %v2185, %v2184
  %v2234 = vpack.c.bf16 %v2187, %v2186
  %v2235 = vpack.c.bf16 %v2189, %v2188
  %v2236 = vpack.c.bf16 %v2191, %v2190
  %v2237 = vpack.c.bf16 %v2193, %v2192
  %v2238 = vpack.c.bf16 %v2195, %v2194
  %v2239 = vpack.c.bf16 %v2197, %v2196
  %v2240 = vpack.c.bf16 %v2199, %v2198
  %v2241 = vpack.c.bf16 %v2201, %v2200
  %v2242 = vpack.c.bf16 %v2203, %v2202
  %v2243 = vpack.c.bf16 %v2205, %v2204
  %v2244 = vpack.c.bf16 %v2207, %v2206
  %v2245 = vpack.c.bf16 %v2209, %v2208
  %v2246 = vpack.c.bf16 %v2211, %v2210
  %v2247 = vpack.c.bf16 %v2213, %v2212
  %v2248 = vpack.c.bf16 %v2215, %v2214
  %v2249 = vpack.c.bf16 %v2217, %v2216
  %v2250 = vpack.c.bf16 %v2219, %v2218
  %v2251 = vpack.c.bf16 %v2221, %v2220
  %v2252 = vpack.c.bf16 %v2223, %v2222
  %v2253 = vpack.c.bf16 %v2225, %v2224
  %v2254 = vpack.c.bf16 %v2227, %v2226
  %v2255 = vpack.c.bf16 %v2229, %v2228
  %v2256 = vpack.c.bf16 %v2231, %v2230
  %v2257 = vpack.c.bf16 %v2232, %v2232
  %v2283 = vunpack.c.l.b16 %v2233
  %v2284 = vunpack.c.h.b16 %v2233
  %v2285 = vunpack.c.l.b16 %v2234
  %v2286 = vunpack.c.h.b16 %v2234
  %v2287 = vunpack.c.l.b16 %v2235
  %v2288 = vunpack.c.h.b16 %v2235
  %v2289 = vunpack.c.l.b16 %v2236
  %v2290 = vunpack.c.h.b16 %v2236
  %v2291 = vunpack.c.l.b16 %v2237
  %v2292 = vunpack.c.h.b16 %v2237
  %v2293 = vunpack.c.l.b16 %v2238
  %v2294 = vunpack.c.h.b16 %v2238
  %v2295 = vunpack.c.l.b16 %v2239
  %v2296 = vunpack.c.h.b16 %v2239
  %v2297 = vunpack.c.l.b16 %v2240
  %v2298 = vunpack.c.h.b16 %v2240
  %v2299 = vunpack.c.l.b16 %v2241
  %v2300 = vunpack.c.h.b16 %v2241
  %v2301 = vunpack.c.l.b16 %v2242
  %v2302 = vunpack.c.h.b16 %v2242
  %v2303 = vunpack.c.l.b16 %v2243
  %v2304 = vunpack.c.h.b16 %v2243
  %v2305 = vunpack.c.l.b16 %v2244
  %v2306 = vunpack.c.h.b16 %v2244
  %v2307 = vunpack.c.l.b16 %v2245
  %v2308 = vunpack.c.h.b16 %v2245
  %v2309 = vunpack.c.l.b16 %v2246
  %v2310 = vunpack.c.h.b16 %v2246
  %v2311 = vunpack.c.l.b16 %v2247
  %v2312 = vunpack.c.h.b16 %v2247
  %v2313 = vunpack.c.l.b16 %v2248
  %v2314 = vunpack.c.h.b16 %v2248
  %v2315 = vunpack.c.l.b16 %v2249
  %v2316 = vunpack.c.h.b16 %v2249
  %v2317 = vunpack.c.l.b16 %v2250
  %v2318 = vunpack.c.h.b16 %v2250
  %v2319 = vunpack.c.l.b16 %v2251
  %v2320 = vunpack.c.h.b16 %v2251
  %v2321 = vunpack.c.l.b16 %v2252
  %v2322 = vunpack.c.h.b16 %v2252
  %v2323 = vunpack.c.l.b16 %v2253
  %v2324 = vunpack.c.h.b16 %v2253
  %v2325 = vunpack.c.l.b16 %v2254
  %v2326 = vunpack.c.h.b16 %v2254
  %v2327 = vunpack.c.l.b16 %v2255
  %v2328 = vunpack.c.h.b16 %v2255
  %v2329 = vunpack.c.l.b16 %v2256
  %v2330 = vunpack.c.h.b16 %v2256
  %v2331 = vunpack.c.l.b16 %v2257
  %v2332 = vpack.c.b16 %v2283, %v2283
  %v2333 = vpack.c.b16 %v2284, %v2284
  %v2334 = vpack.c.b16 %v2285, %v2285
  %v2335 = vpack.c.b16 %v2286, %v2286
  %v2336 = vpack.c.b16 %v2287, %v2287
  %v2337 = vpack.c.b16 %v2288, %v2288
  %v2338 = vpack.c.b16 %v2289, %v2289
  %v2339 = vpack.c.b16 %v2290, %v2290
  %v2340 = vpack.c.b16 %v2291, %v2291
  %v2341 = vpack.c.b16 %v2292, %v2292
  %v2342 = vpack.c.b16 %v2293, %v2293
  %v2343 = vpack.c.b16 %v2294, %v2294
  %v2344 = vpack.c.b16 %v2295, %v2295
  %v2345 = vpack.c.b16 %v2296, %v2296
  %v2346 = vpack.c.b16 %v2297, %v2297
  %v2347 = vpack.c.b16 %v2298, %v2298
  %v2348 = vpack.c.b16 %v2299, %v2299
  %v2349 = vpack.c.b16 %v2300, %v2300
  %v2350 = vpack.c.b16 %v2301, %v2301
  %v2351 = vpack.c.b16 %v2302, %v2302
  %v2352 = vpack.c.b16 %v2303, %v2303
  %v2353 = vpack.c.b16 %v2304, %v2304
  %v2354 = vpack.c.b16 %v2305, %v2305
  %v2355 = vpack.c.b16 %v2306, %v2306
  %v2356 = vpack.c.b16 %v2307, %v2307
  %v2357 = vpack.c.b16 %v2308, %v2308
  %v2358 = vpack.c.b16 %v2309, %v2309
  %v2359 = vpack.c.b16 %v2310, %v2310
  %v2360 = vpack.c.b16 %v2311, %v2311
  %v2361 = vpack.c.b16 %v2312, %v2312
  %v2362 = vpack.c.b16 %v2313, %v2313
  %v2363 = vpack.c.b16 %v2314, %v2314
  %v2364 = vpack.c.b16 %v2315, %v2315
  %v2365 = vpack.c.b16 %v2316, %v2316
  %v2366 = vpack.c.b16 %v2317, %v2317
  %v2367 = vpack.c.b16 %v2318, %v2318
  %v2368 = vpack.c.b16 %v2319, %v2319
  %v2369 = vpack.c.b16 %v2320, %v2320
  %v2370 = vpack.c.b16 %v2321, %v2321
  %v2371 = vpack.c.b16 %v2322, %v2322
  %v2372 = vpack.c.b16 %v2323, %v2323
  %v2373 = vpack.c.b16 %v2324, %v2324
  %v2374 = vpack.c.b16 %v2325, %v2325
  %v2375 = vpack.c.b16 %v2326, %v2326
  %v2376 = vpack.c.b16 %v2327, %v2327
  %v2377 = vpack.c.b16 %v2328, %v2328
  %v2378 = vpack.c.b16 %v2329, %v2329
  %v2379 = vpack.c.b16 %v2330, %v2330
  %v2380 = vpack.c.b16 %v2331, %v2331
  %vm2430 = vcmask 44032
  %2431 = vst.msk [vmem:[%s3] sm:$0xf] %vm2430, %v2332
  %2432 = vst.msk [vmem:[%s3 + $0x4] sm:$0xf] %vm2430, %v2333
  %2433 = vst.msk [vmem:[%s3 + $0x8] sm:$0xf] %vm2430, %v2334
  %2434 = vst.msk [vmem:[%s3 + $0xc] sm:$0xf] %vm2430, %v2335
  %2435 = vst.msk [vmem:[%s3 + $0x10] sm:$0xf] %vm2430, %v2336
  %2436 = vst.msk [vmem:[%s3 + $0x14] sm:$0xf] %vm2430, %v2337
  %2437 = vst.msk [vmem:[%s3 + $0x18] sm:$0xf] %vm2430, %v2338
  %2438 = vst.msk [vmem:[%s3 + $0x1c] sm:$0xf] %vm2430, %v2339
  %2439 = vst.msk [vmem:[%s3 + $0x20] sm:$0xf] %vm2430, %v2340
  %2440 = vst.msk [vmem:[%s3 + $0x24] sm:$0xf] %vm2430, %v2341
  %2441 = vst.msk [vmem:[%s3 + $0x28] sm:$0xf] %vm2430, %v2342
  %2442 = vst.msk [vmem:[%s3 + $0x2c] sm:$0xf] %vm2430, %v2343
  %2443 = vst.msk [vmem:[%s3 + $0x30] sm:$0xf] %vm2430, %v2344
  %2444 = vst.msk [vmem:[%s3 + $0x34] sm:$0xf] %vm2430, %v2345
  %2445 = vst.msk [vmem:[%s3 + $0x38] sm:$0xf] %vm2430, %v2346
  %2446 = vst.msk [vmem:[%s3 + $0x3c] sm:$0xf] %vm2430, %v2347
  %2447 = vst.msk [vmem:[%s3 + $0x40] sm:$0xf] %vm2430, %v2348
  %2448 = vst.msk [vmem:[%s3 + $0x44] sm:$0xf] %vm2430, %v2349
  %2449 = vst.msk [vmem:[%s3 + $0x48] sm:$0xf] %vm2430, %v2350
  %2450 = vst.msk [vmem:[%s3 + $0x4c] sm:$0xf] %vm2430, %v2351
  %2451 = vst.msk [vmem:[%s3 + $0x50] sm:$0xf] %vm2430, %v2352
  %2452 = vst.msk [vmem:[%s3 + $0x54] sm:$0xf] %vm2430, %v2353
  %2453 = vst.msk [vmem:[%s3 + $0x58] sm:$0xf] %vm2430, %v2354
  %2454 = vst.msk [vmem:[%s3 + $0x5c] sm:$0xf] %vm2430, %v2355
  %2455 = vst.msk [vmem:[%s3 + $0x60] sm:$0xf] %vm2430, %v2356
  %2456 = vst.msk [vmem:[%s3 + $0x64] sm:$0xf] %vm2430, %v2357
  %2457 = vst.msk [vmem:[%s3 + $0x68] sm:$0xf] %vm2430, %v2358
  %2458 = vst.msk [vmem:[%s3 + $0x6c] sm:$0xf] %vm2430, %v2359
  %2459 = vst.msk [vmem:[%s3 + $0x70] sm:$0xf] %vm2430, %v2360
  %2460 = vst.msk [vmem:[%s3 + $0x74] sm:$0xf] %vm2430, %v2361
  %2461 = vst.msk [vmem:[%s3 + $0x78] sm:$0xf] %vm2430, %v2362
  %2462 = vst.msk [vmem:[%s3 + $0x7c] sm:$0xf] %vm2430, %v2363
  %2463 = vst.msk [vmem:[%s3 + $0x80] sm:$0xf] %vm2430, %v2364
  %2464 = vst.msk [vmem:[%s3 + $0x84] sm:$0xf] %vm2430, %v2365
  %2465 = vst.msk [vmem:[%s3 + $0x88] sm:$0xf] %vm2430, %v2366
  %2466 = vst.msk [vmem:[%s3 + $0x8c] sm:$0xf] %vm2430, %v2367
  %2467 = vst.msk [vmem:[%s3 + $0x90] sm:$0xf] %vm2430, %v2368
  %2468 = vst.msk [vmem:[%s3 + $0x94] sm:$0xf] %vm2430, %v2369
  %2469 = vst.msk [vmem:[%s3 + $0x98] sm:$0xf] %vm2430, %v2370
  %2470 = vst.msk [vmem:[%s3 + $0x9c] sm:$0xf] %vm2430, %v2371
  %2471 = vst.msk [vmem:[%s3 + $0xa0] sm:$0xf] %vm2430, %v2372
  %2472 = vst.msk [vmem:[%s3 + $0xa4] sm:$0xf] %vm2430, %v2373
  %2473 = vst.msk [vmem:[%s3 + $0xa8] sm:$0xf] %vm2430, %v2374
  %2474 = vst.msk [vmem:[%s3 + $0xac] sm:$0xf] %vm2430, %v2375
  %2475 = vst.msk [vmem:[%s3 + $0xb0] sm:$0xf] %vm2430, %v2376
  %2476 = vst.msk [vmem:[%s3 + $0xb4] sm:$0xf] %vm2430, %v2377
  %2477 = vst.msk [vmem:[%s3 + $0xb8] sm:$0xf] %vm2430, %v2378
  %2478 = vst.msk [vmem:[%s3 + $0xbc] sm:$0xf] %vm2430, %v2379
  %2479 = vst.msk [vmem:[%s3 + $0xc0] sm:$0xf] %vm2430, %v2380
  // Predicated region
  $region14: #{net_forward.3} parent=0 // pred_check
    _
  $region15: #{net_forward.3} parent=0 // pred_check_branch
    %2481 = sbr.rel (0) target = $region17
  $region16: #{net_forward.3} parent=0 // pred_region
    _
  $region17: #{net_forward.3} parent=0 // pred_fallthru
    _
  // Predicated region
  $region18: #{net_forward.3} parent=0 // pred_check
    _
  $region19: #{net_forward.3} parent=0 // pred_check_branch
    %2483 = sbr.rel (0) target = $region21
  $region20: #{net_forward.3} parent=0 // pred_region
    _
  $region21: #{net_forward.3} parent=0 // pred_fallthru
    _

// kernel: net_forward.4
$region0: #{net_forward.4}
  #allocation0 [shape = 'u32[]', space=smem, size = 0x4, offset = 0x4, fixed_abs, tag = 'smem constant byte address 0x4 - core index']
  #allocation1 [shape = 'u32[144,128]{1,0:T(1,128)}', space=vmem, size = 0x12000, scoped, tag = 'internal scratch']
  %s0 = inlined_call_operand.vmem [shape: bf16[4,50,150], index: 0, kind: input, shape index: {}]
  %s1 = inlined_call_operand.vmem [shape: bf16[150,16], index: 1, kind: input, shape index: {}]
  %s2 = inlined_call_operand.vmem [shape: f32[1,16], index: 2, kind: input, shape index: {}]
  %s3 = inlined_call_operand.vmem [shape: bf16[50,16], index: 3, kind: output, shape index: {}]
  %s4 = sld [smem:[#allocation0]]
  $region22: #{net_forward.4} parent=0
    _
  %s6 = ssub.s32 1, %s4
  %s7 = scalar_select 0, %s6, %s4
  // Predicated region
  $region2: #{net_forward.4} parent=0 // pred_check
    _
  $region3: #{net_forward.4} parent=0 // pred_check_branch
    %9 = sbr.rel (0) target = $region5
  $region4: #{net_forward.4} parent=0 // pred_region
    _
  $region5: #{net_forward.4} parent=0 // pred_fallthru
    _
  // Predicated region
  $region6: #{net_forward.4} parent=0 // pred_check
    _
  $region7: #{net_forward.4} parent=0 // pred_check_branch
    %11 = sbr.rel (0) target = $region9
  $region8: #{net_forward.4} parent=0 // pred_region
    _
  $region9: #{net_forward.4} parent=0 // pred_fallthru
    _
  // Predicated region
  $region10: #{net_forward.4} parent=0 // pred_check
    _
  $region11: #{net_forward.4} parent=0 // pred_check_branch
    %13 = sbr.rel (0) target = $region13
  $region12: #{net_forward.4} parent=0 // pred_region
    _
  $region13: #{net_forward.4} parent=0 // pred_fallthru
    _
  %v15 = vld [vmem:[%s1] sm:$0xf]
  %v16 = vld [vmem:[%s1 + $0x4] sm:$0xf]
  %v17 = vld [vmem:[%s1 + $0x8] sm:$0xf]
  %v18 = vld [vmem:[%s1 + $0xc] sm:$0xf]
  %v19 = vld [vmem:[%s1 + $0x10] sm:$0xf]
  %v20 = vld [vmem:[%s1 + $0x14] sm:$0xf]
  %v21 = vld [vmem:[%s1 + $0x18] sm:$0xf]
  %v22 = vld [vmem:[%s1 + $0x1c] sm:$0xf]
  %v23 = vld [vmem:[%s1 + $0x20] sm:$0xf]
  %v24 = vld [vmem:[%s1 + $0x24] sm:$0xf]
  %v25 = vld [vmem:[%s1 + $0x28] sm:$0xf]
  %v26 = vld [vmem:[%s1 + $0x2c] sm:$0xf]
  %v27 = vld [vmem:[%s1 + $0x30] sm:$0xf]
  %v28 = vld [vmem:[%s1 + $0x34] sm:$0xf]
  %v29 = vld [vmem:[%s1 + $0x38] sm:$0xf]
  %v30 = vld [vmem:[%s1 + $0x3c] sm:$0xf]
  %v31 = vld [vmem:[%s1 + $0x40] sm:$0xf]
  %v32 = vld [vmem:[%s1 + $0x44] sm:$0xf]
  %v33 = vld [vmem:[%s1 + $0x48] sm:$0x7]
  %v34 = vld [vmem:[%s0] sm:$0xff]
  %v35 = vld [vmem:[%s0 + $0x8] sm:$0xff]
  %v36 = vld [vmem:[%s0 + $0x10] sm:$0xff]
  %v37 = vld [vmem:[%s0 + $0x18] sm:$0xff]
  %v38 = vld [vmem:[%s0 + $0x20] sm:$0xff]
  %v39 = vld [vmem:[%s0 + $0x28] sm:$0xff]
  %v40 = vld [vmem:[%s0 + $0x30] sm:$0x11]
  %v48 = vunpack.c.l.b16 %v34
  %v49 = vunpack.c.h.b16 %v34
  %v50 = vunpack.c.l.b16 %v35
  %v51 = vunpack.c.h.b16 %v35
  %v52 = vunpack.c.l.b16 %v36
  %v53 = vunpack.c.h.b16 %v36
  %v54 = vunpack.c.l.b16 %v37
  %v55 = vunpack.c.h.b16 %v37
  %v56 = vunpack.c.l.b16 %v38
  %v57 = vunpack.c.h.b16 %v38
  %v58 = vunpack.c.l.b16 %v39
  %v59 = vunpack.c.h.b16 %v39
  %v60 = vunpack.c.l.b16 %v40
  %v61 = vunpack.c.h.b16 %v40
  %v62 = vpack.c.b16 %v50, %v48
  %v63 = vpack.c.b16 %v51, %v49
  %v64 = vpack.c.b16 %v54, %v52
  %v65 = vpack.c.b16 %v55, %v53
  %v66 = vpack.c.b16 %v58, %v56
  %v67 = vpack.c.b16 %v59, %v57
  %v68 = vpack.c.b16 %v60, %v60
  %v69 = vpack.c.b16 %v61, %v61
  %v93 = vunpack.c.l.b16 %v15
  %v94 = vunpack.c.l.b16 %v16
  %v95 = vunpack.c.l.b16 %v17
  %v96 = vunpack.c.l.b16 %v18
  %v97 = vunpack.c.l.b16 %v19
  %v98 = vunpack.c.l.b16 %v20
  %v99 = vunpack.c.l.b16 %v21
  %v100 = vunpack.c.l.b16 %v22
  %v101 = vunpack.c.l.b16 %v23
  %v102 = vunpack.c.l.b16 %v24
  %v103 = vunpack.c.l.b16 %v25
  %v104 = vunpack.c.l.b16 %v26
  %v105 = vunpack.c.l.b16 %v27
  %v106 = vunpack.c.l.b16 %v28
  %v107 = vunpack.c.l.b16 %v29
  %v108 = vunpack.c.l.b16 %v30
  %v109 = vunpack.c.l.b16 %v31
  %v110 = vunpack.c.l.b16 %v32
  %v111 = vunpack.c.l.b16 %v33
  %v112 = vpack.c.b16 %v94, %v93
  %v113 = vpack.c.b16 %v96, %v95
  %v114 = vpack.c.b16 %v98, %v97
  %v115 = vpack.c.b16 %v100, %v99
  %v116 = vpack.c.b16 %v102, %v101
  %v117 = vpack.c.b16 %v104, %v103
  %v118 = vpack.c.b16 %v106, %v105
  %v119 = vpack.c.b16 %v108, %v107
  %v120 = vpack.c.b16 %v110, %v109
  %v121 = vpack.c.b16 %v111, %v111
  %vm131 = vcmask 179200
  %v133 = vsel %vm131, %v63, 0
  %v136 = vsel %vm131, %v65, 0
  %v139 = vsel %vm131, %v67, 0
  %v142 = vsel %vm131, %v69, 0
  %vm144 = vcmask 1042432
  %v146 = vsel %vm144, %v121, 0
  %148 = vmatprep.subr.bf16.mxu0 0
  %149 = vmatpush1.bf16.msra.mxu0 %v112
  %150 = vmatprep.subr.bf16.mxu0 0
  %151 = vmatpush1.bf16.msra.mxu0 %v113
  %152 = vmatprep.subr.bf16.mxu0 0
  %153 = vmatpush1.bf16.msra.mxu0 %v114
  %154 = vmatprep.subr.bf16.mxu0 0
  %155 = vmatpush1.bf16.msra.mxu0 %v115
  %156 = vmatprep.subr.bf16.mxu0 0
  %157 = vmatpush1.bf16.msra.mxu0 %v116
  %158 = vmatprep.subr.bf16.mxu0 0
  %159 = vmatpush1.bf16.msra.mxu0 %v117
  %160 = vmatprep.subr.bf16.mxu0 0
  %161 = vmatpush1.bf16.msra.mxu0 %v118
  %162 = vmatprep.subr.bf16.mxu0 0
  %163 = vmatpush1.bf16.msra.mxu0 %v119
  %164 = vmatprep.subr.bf16.mxu0 0
  %165 = vmatpush1.bf16.msra.mxu0 %v120
  %166 = vmatprep.subr.bf16.mxu0 0
  %167 = vmatpush1.bf16.msra.mxu0 %v146
  %168 = vmatprep.subr.bf16.mxu0 0
  %169 = vmatpush1.bf16.msra.mxu0 0
  %170 = vmatprep.subr.bf16.mxu0 0
  %171 = vmatpush1.bf16.msra.mxu0 0
  %172 = vmatprep.subr.bf16.mxu0 0
  %173 = vmatpush1.bf16.msra.mxu0 0
  %174 = vmatprep.subr.bf16.mxu0 0
  %175 = vmatpush1.bf16.msra.mxu0 0
  %176 = vmatprep.subr.bf16.mxu0 0
  %177 = vmatpush1.bf16.msra.mxu0 0
  %178 = vmatprep.subr.bf16.mxu0 0
  %179 = vmatpush1.bf16.msra.mxu0 0
  %180 = vmatprep.mubr.bf16.mxu0 %v133
  %181 = vmatmul.mubr.bf16.gmra.mrb[0].mxu0 %v62
  %v182 = vpop.f32.mrb[0].mxu0
  %v183 = vadd.f32 0.0, %v182
  %v184 = vpop.f32.mrb[0].mxu0
  %v185 = vpop.f32.mrb[0].mxu0
  %v186 = vadd.f32 0.0, %v185
  %v187 = vpop.f32.mrb[0].mxu0
  %188 = vmatprep.mubr.bf16.mxu0 %v136
  %189 = vmatmul.mubr.bf16.gmra.mrb[0].mxu0 %v64
  %v190 = vpop.f32.mrb[0].mxu0
  %v191 = vadd.f32 0.0, %v190
  %v192 = vpop.f32.mrb[0].mxu0
  %v193 = vpop.f32.mrb[0].mxu0
  %v194 = vadd.f32 0.0, %v193
  %v195 = vpop.f32.mrb[0].mxu0
  %196 = vmatprep.mubr.bf16.mxu0 %v139
  %197 = vmatmul.mubr.bf16.gmra.mrb[0].mxu0 %v66
  %v198 = vpop.f32.mrb[0].mxu0
  %v199 = vadd.f32 0.0, %v198
  %v200 = vpop.f32.mrb[0].mxu0
  %v201 = vpop.f32.mrb[0].mxu0
  %v202 = vadd.f32 0.0, %v201
  %v203 = vpop.f32.mrb[0].mxu0
  %204 = vmatprep.mubr.bf16.mxu0 %v142
  %205 = vmatmul.mubr.bf16.gmra.mrb[0].mxu0 %v68
  %v206 = vpop.f32.mrb[0].mxu0
  %v207 = vadd.f32 0.0, %v206
  %v208 = vpop.f32.mrb[0].mxu0
  %v209 = vpop.f32.mrb[0].mxu0
  %v210 = vpop.f32.mrb[0].mxu0
  %211 = vdwg.mxu0
  %s212 = scalar_lea.vmem %s0, 56
  %v213 = vld [vmem:[%s212] sm:$0xff]
  %v214 = vld [vmem:[%s212 + $0x8] sm:$0xff]
  %v215 = vld [vmem:[%s212 + $0x10] sm:$0xff]
  %v216 = vld [vmem:[%s212 + $0x18] sm:$0xff]
  %v217 = vld [vmem:[%s212 + $0x20] sm:$0xff]
  %v218 = vld [vmem:[%s212 + $0x28] sm:$0xff]
  %v219 = vld [vmem:[%s212 + $0x30] sm:$0x11]
  %v227 = vunpack.c.l.b16 %v213
  %v228 = vunpack.c.h.b16 %v213
  %v229 = vunpack.c.l.b16 %v214
  %v230 = vunpack.c.h.b16 %v214
  %v231 = vunpack.c.l.b16 %v215
  %v232 = vunpack.c.h.b16 %v215
  %v233 = vunpack.c.l.b16 %v216
  %v234 = vunpack.c.h.b16 %v216
  %v235 = vunpack.c.l.b16 %v217
  %v236 = vunpack.c.h.b16 %v217
  %v237 = vunpack.c.l.b16 %v218
  %v238 = vunpack.c.h.b16 %v218
  %v239 = vunpack.c.l.b16 %v219
  %v240 = vunpack.c.h.b16 %v219
  %v241 = vpack.c.b16 %v229, %v227
  %v242 = vpack.c.b16 %v230, %v228
  %v243 = vpack.c.b16 %v233, %v231
  %v244 = vpack.c.b16 %v234, %v232
  %v245 = vpack.c.b16 %v237, %v235
  %v246 = vpack.c.b16 %v238, %v236
  %v247 = vpack.c.b16 %v239, %v239
  %v248 = vpack.c.b16 %v240, %v240
  %v254 = vsel %vm131, %v242, 0
  %v257 = vsel %vm131, %v244, 0
  %v260 = vsel %vm131, %v246, 0
  %v263 = vsel %vm131, %v248, 0
  %265 = vmatprep.subr.bf16.mxu0 0
  %266 = vmatpush1.bf16.msra.mxu0 %v112
  %267 = vmatprep.subr.bf16.mxu0 0
  %268 = vmatpush1.bf16.msra.mxu0 %v113
  %269 = vmatprep.subr.bf16.mxu0 0
  %270 = vmatpush1.bf16.msra.mxu0 %v114
  %271 = vmatprep.subr.bf16.mxu0 0
  %272 = vmatpush1.bf16.msra.mxu0 %v115
  %273 = vmatprep.subr.bf16.mxu0 0
  %274 = vmatpush1.bf16.msra.mxu0 %v116
  %275 = vmatprep.subr.bf16.mxu0 0
  %276 = vmatpush1.bf16.msra.mxu0 %v117
  %277 = vmatprep.subr.bf16.mxu0 0
  %278 = vmatpush1.bf16.msra.mxu0 %v118
  %279 = vmatprep.subr.bf16.mxu0 0
  %280 = vmatpush1.bf16.msra.mxu0 %v119
  %281 = vmatprep.subr.bf16.mxu0 0
  %282 = vmatpush1.bf16.msra.mxu0 %v120
  %283 = vmatprep.subr.bf16.mxu0 0
  %284 = vmatpush1.bf16.msra.mxu0 %v146
  %285 = vmatprep.subr.bf16.mxu0 0
  %286 = vmatpush1.bf16.msra.mxu0 0
  %287 = vmatprep.subr.bf16.mxu0 0
  %288 = vmatpush1.bf16.msra.mxu0 0
  %289 = vmatprep.subr.bf16.mxu0 0
  %290 = vmatpush1.bf16.msra.mxu0 0
  %291 = vmatprep.subr.bf16.mxu0 0
  %292 = vmatpush1.bf16.msra.mxu0 0
  %293 = vmatprep.subr.bf16.mxu0 0
  %294 = vmatpush1.bf16.msra.mxu0 0
  %295 = vmatprep.subr.bf16.mxu0 0
  %296 = vmatpush1.bf16.msra.mxu0 0
  %297 = vmatprep.mubr.bf16.mxu0 %v254
  %298 = vmatmul.mubr.bf16.gmra.mrb[0].mxu0 %v241
  %v299 = vpop.f32.mrb[0].mxu0
  %v300 = vadd.f32 0.0, %v299
  %v301 = vpop.f32.mrb[0].mxu0
  %v302 = vpop.f32.mrb[0].mxu0
  %v303 = vadd.f32 0.0, %v302
  %v304 = vpop.f32.mrb[0].mxu0
  %305 = vmatprep.mubr.bf16.mxu0 %v257
  %306 = vmatmul.mubr.bf16.gmra.mrb[0].mxu0 %v243
  %v307 = vpop.f32.mrb[0].mxu0
  %v308 = vadd.f32 0.0, %v307
  %v309 = vpop.f32.mrb[0].mxu0
  %v310 = vpop.f32.mrb[0].mxu0
  %v311 = vadd.f32 0.0, %v310
  %v312 = vpop.f32.mrb[0].mxu0
  %313 = vmatprep.mubr.bf16.mxu0 %v260
  %314 = vmatmul.mubr.bf16.gmra.mrb[0].mxu0 %v245
  %v315 = vpop.f32.mrb[0].mxu0
  %v316 = vadd.f32 0.0, %v315
  %v317 = vpop.f32.mrb[0].mxu0
  %v318 = vpop.f32.mrb[0].mxu0
  %v319 = vadd.f32 0.0, %v318
  %v320 = vpop.f32.mrb[0].mxu0
  %321 = vmatprep.mubr.bf16.mxu0 %v263
  %322 = vmatmul.mubr.bf16.gmra.mrb[0].mxu0 %v247
  %v323 = vpop.f32.mrb[0].mxu0
  %v324 = vadd.f32 0.0, %v323
  %v325 = vpop.f32.mrb[0].mxu0
  %v326 = vpop.f32.mrb[0].mxu0
  %v327 = vpop.f32.mrb[0].mxu0
  %328 = vdwg.mxu0
  %v329 = vmax.f32 %v183, %v300
  %v330 = vmax.f32 %v186, %v303
  %v331 = vmax.f32 %v191, %v308
  %v332 = vmax.f32 %v194, %v311
  %v333 = vmax.f32 %v199, %v316
  %v334 = vmax.f32 %v202, %v319
  %v335 = vmax.f32 %v207, %v324
  %s336 = scalar_lea.vmem %s0, 112
  %v337 = vld [vmem:[%s336] sm:$0xff]
  %v338 = vld [vmem:[%s336 + $0x8] sm:$0xff]
  %v339 = vld [vmem:[%s336 + $0x10] sm:$0xff]
  %v340 = vld [vmem:[%s336 + $0x18] sm:$0xff]
  %v341 = vld [vmem:[%s336 + $0x20] sm:$0xff]
  %v342 = vld [vmem:[%s336 + $0x28] sm:$0xff]
  %v343 = vld [vmem:[%s336 + $0x30] sm:$0x11]
  %v351 = vunpack.c.l.b16 %v337
  %v352 = vunpack.c.h.b16 %v337
  %v353 = vunpack.c.l.b16 %v338
  %v354 = vunpack.c.h.b16 %v338
  %v355 = vunpack.c.l.b16 %v339
  %v356 = vunpack.c.h.b16 %v339
  %v357 = vunpack.c.l.b16 %v340
  %v358 = vunpack.c.h.b16 %v340
  %v359 = vunpack.c.l.b16 %v341
  %v360 = vunpack.c.h.b16 %v341
  %v361 = vunpack.c.l.b16 %v342
  %v362 = vunpack.c.h.b16 %v342
  %v363 = vunpack.c.l.b16 %v343
  %v364 = vunpack.c.h.b16 %v343
  %v365 = vpack.c.b16 %v353, %v351
  %v366 = vpack.c.b16 %v354, %v352
  %v367 = vpack.c.b16 %v357, %v355
  %v368 = vpack.c.b16 %v358, %v356
  %v369 = vpack.c.b16 %v361, %v359
  %v370 = vpack.c.b16 %v362, %v360
  %v371 = vpack.c.b16 %v363, %v363
  %v372 = vpack.c.b16 %v364, %v364
  %v378 = vsel %vm131, %v366, 0
  %v381 = vsel %vm131, %v368, 0
  %v384 = vsel %vm131, %v370, 0
  %v387 = vsel %vm131, %v372, 0
  %389 = vmatprep.subr.bf16.mxu0 0
  %390 = vmatpush1.bf16.msra.mxu0 %v112
  %391 = vmatprep.subr.bf16.mxu0 0
  %392 = vmatpush1.bf16.msra.mxu0 %v113
  %393 = vmatprep.subr.bf16.mxu0 0
  %394 = vmatpush1.bf16.msra.mxu0 %v114
  %395 = vmatprep.subr.bf16.mxu0 0
  %396 = vmatpush1.bf16.msra.mxu0 %v115
  %397 = vmatprep.subr.bf16.mxu0 0
  %398 = vmatpush1.bf16.msra.mxu0 %v116
  %399 = vmatprep.subr.bf16.mxu0 0
  %400 = vmatpush1.bf16.msra.mxu0 %v117
  %401 = vmatprep.subr.bf16.mxu0 0
  %402 = vmatpush1.bf16.msra.mxu0 %v118
  %403 = vmatprep.subr.bf16.mxu0 0
  %404 = vmatpush1.bf16.msra.mxu0 %v119
  %405 = vmatprep.subr.bf16.mxu0 0
  %406 = vmatpush1.bf16.msra.mxu0 %v120
  %407 = vmatprep.subr.bf16.mxu0 0
  %408 = vmatpush1.bf16.msra.mxu0 %v146
  %409 = vmatprep.subr.bf16.mxu0 0
  %410 = vmatpush1.bf16.msra.mxu0 0
  %411 = vmatprep.subr.bf16.mxu0 0
  %412 = vmatpush1.bf16.msra.mxu0 0
  %413 = vmatprep.subr.bf16.mxu0 0
  %414 = vmatpush1.bf16.msra.mxu0 0
  %415 = vmatprep.subr.bf16.mxu0 0
  %416 = vmatpush1.bf16.msra.mxu0 0
  %417 = vmatprep.subr.bf16.mxu0 0
  %418 = vmatpush1.bf16.msra.mxu0 0
  %419 = vmatprep.subr.bf16.mxu0 0
  %420 = vmatpush1.bf16.msra.mxu0 0
  %421 = vmatprep.mubr.bf16.mxu0 %v378
  %422 = vmatmul.mubr.bf16.gmra.mrb[0].mxu0 %v365
  %v423 = vpop.f32.mrb[0].mxu0
  %v424 = vadd.f32 0.0, %v423
  %v425 = vpop.f32.mrb[0].mxu0
  %v426 = vpop.f32.mrb[0].mxu0
  %v427 = vadd.f32 0.0, %v426
  %v428 = vpop.f32.mrb[0].mxu0
  %429 = vmatprep.mubr.bf16.mxu0 %v381
  %430 = vmatmul.mubr.bf16.gmra.mrb[0].mxu0 %v367
  %v431 = vpop.f32.mrb[0].mxu0
  %v432 = vadd.f32 0.0, %v431
  %v433 = vpop.f32.mrb[0].mxu0
  %v434 = vpop.f32.mrb[0].mxu0
  %v435 = vadd.f32 0.0, %v434
  %v436 = vpop.f32.mrb[0].mxu0
  %437 = vmatprep.mubr.bf16.mxu0 %v384
  %438 = vmatmul.mubr.bf16.gmra.mrb[0].mxu0 %v369
  %v439 = vpop.f32.mrb[0].mxu0
  %v440 = vadd.f32 0.0, %v439
  %v441 = vpop.f32.mrb[0].mxu0
  %v442 = vpop.f32.mrb[0].mxu0
  %v443 = vadd.f32 0.0, %v442
  %v444 = vpop.f32.mrb[0].mxu0
  %445 = vmatprep.mubr.bf16.mxu0 %v387
  %446 = vmatmul.mubr.bf16.gmra.mrb[0].mxu0 %v371
  %v447 = vpop.f32.mrb[0].mxu0
  %v448 = vadd.f32 0.0, %v447
  %v449 = vpop.f32.mrb[0].mxu0
  %v450 = vpop.f32.mrb[0].mxu0
  %v451 = vpop.f32.mrb[0].mxu0
  %452 = vdwg.mxu0
  %v453 = vmax.f32 %v329, %v424
  %v454 = vmax.f32 %v330, %v427
  %v455 = vmax.f32 %v331, %v432
  %v456 = vmax.f32 %v332, %v435
  %v457 = vmax.f32 %v333, %v440
  %v458 = vmax.f32 %v334, %v443
  %v459 = vmax.f32 %v335, %v448
  %s460 = scalar_lea.vmem %s0, 168
  %v461 = vld [vmem:[%s460] sm:$0xff]
  %v462 = vld [vmem:[%s460 + $0x8] sm:$0xff]
  %v463 = vld [vmem:[%s460 + $0x10] sm:$0xff]
  %v464 = vld [vmem:[%s460 + $0x18] sm:$0xff]
  %v465 = vld [vmem:[%s460 + $0x20] sm:$0xff]
  %v466 = vld [vmem:[%s460 + $0x28] sm:$0xff]
  %v467 = vld [vmem:[%s460 + $0x30] sm:$0x11]
  %v475 = vunpack.c.l.b16 %v461
  %v476 = vunpack.c.h.b16 %v461
  %v477 = vunpack.c.l.b16 %v462
  %v478 = vunpack.c.h.b16 %v462
  %v479 = vunpack.c.l.b16 %v463
  %v480 = vunpack.c.h.b16 %v463
  %v481 = vunpack.c.l.b16 %v464
  %v482 = vunpack.c.h.b16 %v464
  %v483 = vunpack.c.l.b16 %v465
  %v484 = vunpack.c.h.b16 %v465
  %v485 = vunpack.c.l.b16 %v466
  %v486 = vunpack.c.h.b16 %v466
  %v487 = vunpack.c.l.b16 %v467
  %v488 = vunpack.c.h.b16 %v467
  %v489 = vpack.c.b16 %v477, %v475
  %v490 = vpack.c.b16 %v478, %v476
  %v491 = vpack.c.b16 %v481, %v479
  %v492 = vpack.c.b16 %v482, %v480
  %v493 = vpack.c.b16 %v485, %v483
  %v494 = vpack.c.b16 %v486, %v484
  %v495 = vpack.c.b16 %v487, %v487
  %v496 = vpack.c.b16 %v488, %v488
  %v502 = vsel %vm131, %v490, 0
  %v505 = vsel %vm131, %v492, 0
  %v508 = vsel %vm131, %v494, 0
  %v511 = vsel %vm131, %v496, 0
  %513 = vmatprep.subr.bf16.mxu0 0
  %514 = vmatpush1.bf16.msra.mxu0 %v112
  %515 = vmatprep.subr.bf16.mxu0 0
  %516 = vmatpush1.bf16.msra.mxu0 %v113
  %517 = vmatprep.subr.bf16.mxu0 0
  %518 = vmatpush1.bf16.msra.mxu0 %v114
  %519 = vmatprep.subr.bf16.mxu0 0
  %520 = vmatpush1.bf16.msra.mxu0 %v115
  %521 = vmatprep.subr.bf16.mxu0 0
  %522 = vmatpush1.bf16.msra.mxu0 %v116
  %523 = vmatprep.subr.bf16.mxu0 0
  %524 = vmatpush1.bf16.msra.mxu0 %v117
  %525 = vmatprep.subr.bf16.mxu0 0
  %526 = vmatpush1.bf16.msra.mxu0 %v118
  %527 = vmatprep.subr.bf16.mxu0 0
  %528 = vmatpush1.bf16.msra.mxu0 %v119
  %529 = vmatprep.subr.bf16.mxu0 0
  %530 = vmatpush1.bf16.msra.mxu0 %v120
  %531 = vmatprep.subr.bf16.mxu0 0
  %532 = vmatpush1.bf16.msra.mxu0 %v146
  %533 = vmatprep.subr.bf16.mxu0 0
  %534 = vmatpush1.bf16.msra.mxu0 0
  %535 = vmatprep.subr.bf16.mxu0 0
  %536 = vmatpush1.bf16.msra.mxu0 0
  %537 = vmatprep.subr.bf16.mxu0 0
  %538 = vmatpush1.bf16.msra.mxu0 0
  %539 = vmatprep.subr.bf16.mxu0 0
  %540 = vmatpush1.bf16.msra.mxu0 0
  %541 = vmatprep.subr.bf16.mxu0 0
  %542 = vmatpush1.bf16.msra.mxu0 0
  %543 = vmatprep.subr.bf16.mxu0 0
  %544 = vmatpush1.bf16.msra.mxu0 0
  %545 = vmatprep.mubr.bf16.mxu0 %v502
  %546 = vmatmul.mubr.bf16.gmra.mrb[0].mxu0 %v489
  %v547 = vpop.f32.mrb[0].mxu0
  %v548 = vadd.f32 0.0, %v547
  %v549 = vpop.f32.mrb[0].mxu0
  %v550 = vpop.f32.mrb[0].mxu0
  %v551 = vadd.f32 0.0, %v550
  %v552 = vpop.f32.mrb[0].mxu0
  %553 = vmatprep.mubr.bf16.mxu0 %v505
  %554 = vmatmul.mubr.bf16.gmra.mrb[0].mxu0 %v491
  %v555 = vpop.f32.mrb[0].mxu0
  %v556 = vadd.f32 0.0, %v555
  %v557 = vpop.f32.mrb[0].mxu0
  %v558 = vpop.f32.mrb[0].mxu0
  %v559 = vadd.f32 0.0, %v558
  %v560 = vpop.f32.mrb[0].mxu0
  %561 = vmatprep.mubr.bf16.mxu0 %v508
  %562 = vmatmul.mubr.bf16.gmra.mrb[0].mxu0 %v493
  %v563 = vpop.f32.mrb[0].mxu0
  %v564 = vadd.f32 0.0, %v563
  %v565 = vpop.f32.mrb[0].mxu0
  %v566 = vpop.f32.mrb[0].mxu0
  %v567 = vadd.f32 0.0, %v566
  %v568 = vpop.f32.mrb[0].mxu0
  %569 = vmatprep.mubr.bf16.mxu0 %v511
  %570 = vmatmul.mubr.bf16.gmra.mrb[0].mxu0 %v495
  %v571 = vpop.f32.mrb[0].mxu0
  %v572 = vadd.f32 0.0, %v571
  %v573 = vpop.f32.mrb[0].mxu0
  %v574 = vpop.f32.mrb[0].mxu0
  %v575 = vpop.f32.mrb[0].mxu0
  %576 = vdwg.mxu0
  %v577 = vmax.f32 %v453, %v548
  %v578 = vmax.f32 %v454, %v551
  %v579 = vmax.f32 %v455, %v556
  %v580 = vmax.f32 %v456, %v559
  %v581 = vmax.f32 %v457, %v564
  %v582 = vmax.f32 %v458, %v567
  %v583 = vmax.f32 %v459, %v572
  %v584 = vld [vmem:[%s2] sm:$0x1]
  %v586 = vlaneseq
  %v587 = vshrl.u32 %v586, 7
  %v588 = vsub.s32 0, %v587
  %v589 = vrot.slane %v584, %v588
  %v591 = vadd.f32 %v577, %v589
  %v592 = vadd.f32 %v578, %v589
  %v593 = vadd.f32 %v579, %v589
  %v594 = vadd.f32 %v580, %v589
  %v595 = vadd.f32 %v581, %v589
  %v596 = vadd.f32 %v582, %v589
  %v597 = vadd.f32 %v583, %v589
  %v598 = vtanh.pop %v591
  %v599 = vtanh.pop %v592
  %v600 = vtanh.pop %v593
  %v601 = vtanh.pop %v594
  %v602 = vtanh.pop %v595
  %v603 = vtanh.pop %v596
  %v604 = vtanh.pop %v597
  %v605 = vpack.c.bf16 %v599, %v598
  %v606 = vpack.c.bf16 %v601, %v600
  %v607 = vpack.c.bf16 %v603, %v602
  %v608 = vpack.c.bf16 %v604, %v604
  %v613 = vunpack.c.l.b16 %v605
  %v614 = vunpack.c.h.b16 %v605
  %v615 = vunpack.c.l.b16 %v606
  %v616 = vunpack.c.h.b16 %v606
  %v617 = vunpack.c.l.b16 %v607
  %v618 = vunpack.c.h.b16 %v607
  %v619 = vunpack.c.l.b16 %v608
  %v620 = vpack.c.b16 %v613, %v613
  %v621 = vpack.c.b16 %v614, %v614
  %v622 = vpack.c.b16 %v615, %v615
  %v623 = vpack.c.b16 %v616, %v616
  %v624 = vpack.c.b16 %v617, %v617
  %v625 = vpack.c.b16 %v618, %v618
  %v626 = vpack.c.b16 %v619, %v619
  %vm634 = vcmask 125952
  %635 = vst.msk [vmem:[%s3] sm:$0xf] %vm634, %v620
  %636 = vst.msk [vmem:[%s3 + $0x4] sm:$0xf] %vm634, %v621
  %637 = vst.msk [vmem:[%s3 + $0x8] sm:$0xf] %vm634, %v622
  %638 = vst.msk [vmem:[%s3 + $0xc] sm:$0xf] %vm634, %v623
  %639 = vst.msk [vmem:[%s3 + $0x10] sm:$0xf] %vm634, %v624
  %640 = vst.msk [vmem:[%s3 + $0x14] sm:$0xf] %vm634, %v625
  %vm641 = vcmask 122880
  %642 = vst.msk [vmem:[%s3 + $0x18] sm:$0x1] %vm641, %v626
  // Predicated region
  $region14: #{net_forward.4} parent=0 // pred_check
    _
  $region15: #{net_forward.4} parent=0 // pred_check_branch
    %644 = sbr.rel (0) target = $region17
  $region16: #{net_forward.4} parent=0 // pred_region
    _
  $region17: #{net_forward.4} parent=0 // pred_fallthru
    _
  // Predicated region
  $region18: #{net_forward.4} parent=0 // pred_check
    _
  $region19: #{net_forward.4} parent=0 // pred_check_branch
    %646 = sbr.rel (0) target = $region21
  $region20: #{net_forward.4} parent=0 // pred_region
    _
  $region21: #{net_forward.4} parent=0 // pred_fallthru
    _

// kernel: net_forward.5
$region0: #{net_forward.5}
  #allocation0 [shape = 'u32[]', space=smem, size = 0x4, offset = 0x4, fixed_abs, tag = 'smem constant byte address 0x4 - core index']
  #allocation1 [shape = 'u32[144,128]{1,0:T(1,128)}', space=vmem, size = 0x12000, scoped, tag = 'internal scratch']
  %s0 = inlined_call_operand.vmem [shape: bf16[2,400], index: 0, kind: input, shape index: {}]
  %s1 = inlined_call_operand.vmem [shape: bf16[400,128], index: 1, kind: input, shape index: {}]
  %s2 = inlined_call_operand.vmem [shape: f32[1,128], index: 2, kind: input, shape index: {}]
  %s3 = inlined_call_operand.vmem [shape: bf16[128,128], index: 3, kind: input, shape index: {}]
  %s4 = inlined_call_operand.vmem [shape: f32[1,128], index: 4, kind: input, shape index: {}]
  %s5 = inlined_call_operand.hbm [shape: f32[2,128], index: 5, kind: output, shape index: {0}]
  %s6 = inlined_call_operand.hbm [shape: f32[2,128], index: 6, kind: output, shape index: {1}]
  %7 = xla_tuple %s5, %s6
  %s8 = sld [smem:[#allocation0]]
  $region38: #{net_forward.5} parent=0
    _
  %s10 = ssub.s32 1, %s8
  %s11 = scalar_select 0, %s10, %s8
  $region1: #{net_forward.5} parent=0
    #allocation2 [shape = 'u8[1024]{0}', space=vmem, size = 0x400, scoped, tag = 'output window, operand 0, single buffered']
    #allocation3 [shape = 's32[1]{0}', space=sflag, size = 0x4, scoped, tag = 'scoped memory for net_forward.5']
    #allocation4 [shape = 'u8[1024]{0}', space=vmem, size = 0x400, scoped, tag = 'output window, operand 1, single buffered']
    #allocation5 [shape = 's32[1]{0}', space=sflag, size = 0x4, scoped, tag = 'scoped memory for net_forward.5']
    %12 = vsyncpa [#allocation3], 0
    %13 = vsyncpa [#allocation5], 0
    // Predicated region
    $region2: #{net_forward.5} parent=1 // pred_check
      _
    $region3: #{net_forward.5} parent=1 // pred_check_branch
      %15 = sbr.rel (0) target = $region5
    $region4: #{net_forward.5} parent=1 // pred_region
      _
    $region5: #{net_forward.5} parent=1 // pred_fallthru
      _
    // Predicated region
    $region6: #{net_forward.5} parent=1 // pred_check
      _
    $region7: #{net_forward.5} parent=1 // pred_check_branch
      %17 = sbr.rel (0) target = $region9
    $region8: #{net_forward.5} parent=1 // pred_region
      _
    $region9: #{net_forward.5} parent=1 // pred_fallthru
      _
    // Predicated region
    $region10: #{net_forward.5} parent=1 // pred_check
      _
    $region11: #{net_forward.5} parent=1 // pred_check_branch
      %19 = sbr.rel (0) target = $region13
    $region12: #{net_forward.5} parent=1 // pred_region
      _
    $region13: #{net_forward.5} parent=1 // pred_fallthru
      _
    // Predicated region
    $region14: #{net_forward.5} parent=1 // pred_check
      _
    $region15: #{net_forward.5} parent=1 // pred_check_branch
      %21 = sbr.rel (0) target = $region17
    $region16: #{net_forward.5} parent=1 // pred_region
      _
    $region17: #{net_forward.5} parent=1 // pred_fallthru
      _
    // Predicated region
    $region18: #{net_forward.5} parent=1 // pred_check
      _
    $region19: #{net_forward.5} parent=1 // pred_check_branch
      %23 = sbr.rel (0) target = $region21
    $region20: #{net_forward.5} parent=1 // pred_region
      _
    $region21: #{net_forward.5} parent=1 // pred_fallthru
      _
    %v25 = vld [vmem:[%s0] sm:$0xf]
    %v26 = vld [vmem:[%s1] sm:$0xf]
    %v27 = vld [vmem:[%s1 + $0x4] sm:$0xf]
    %v28 = vld [vmem:[%s1 + $0x8] sm:$0xf]
    %v29 = vld [vmem:[%s1 + $0xc] sm:$0xf]
    %v30 = vld [vmem:[%s1 + $0x10] sm:$0xf]
    %v31 = vld [vmem:[%s1 + $0x14] sm:$0xf]
    %v32 = vld [vmem:[%s1 + $0x18] sm:$0xf]
    %v33 = vld [vmem:[%s1 + $0x1c] sm:$0xf]
    %v34 = vld [vmem:[%s1 + $0x20] sm:$0xf]
    %v35 = vld [vmem:[%s1 + $0x24] sm:$0xf]
    %v36 = vld [vmem:[%s1 + $0x28] sm:$0xf]
    %v37 = vld [vmem:[%s1 + $0x2c] sm:$0xf]
    %v38 = vld [vmem:[%s1 + $0x30] sm:$0xf]
    %v39 = vld [vmem:[%s1 + $0x34] sm:$0xf]
    %v40 = vld [vmem:[%s1 + $0x38] sm:$0xf]
    %v41 = vld [vmem:[%s1 + $0x3c] sm:$0xf]
    %v42 = vld [vmem:[%s1 + $0x40] sm:$0xf]
    %v43 = vld [vmem:[%s1 + $0x44] sm:$0xf]
    %v44 = vld [vmem:[%s1 + $0x48] sm:$0xf]
    %v45 = vld [vmem:[%s1 + $0x4c] sm:$0xf]
    %v46 = vld [vmem:[%s1 + $0x50] sm:$0xf]
    %v47 = vld [vmem:[%s1 + $0x54] sm:$0xf]
    %v48 = vld [vmem:[%s1 + $0x58] sm:$0xf]
    %v49 = vld [vmem:[%s1 + $0x5c] sm:$0xf]
    %v50 = vld [vmem:[%s1 + $0x60] sm:$0xf]
    %v51 = vld [vmem:[%s1 + $0x64] sm:$0xf]
    %v52 = vld [vmem:[%s1 + $0x68] sm:$0xf]
    %v53 = vld [vmem:[%s1 + $0x6c] sm:$0xf]
    %v54 = vld [vmem:[%s1 + $0x70] sm:$0xf]
    %v55 = vld [vmem:[%s1 + $0x74] sm:$0xf]
    %v56 = vld [vmem:[%s1 + $0x78] sm:$0xf]
    %v57 = vld [vmem:[%s1 + $0x7c] sm:$0xf]
    %v58 = vld [vmem:[%s1 + $0x80] sm:$0xf]
    %v59 = vld [vmem:[%s1 + $0x84] sm:$0xf]
    %v60 = vld [vmem:[%s1 + $0x88] sm:$0xf]
    %v61 = vld [vmem:[%s1 + $0x8c] sm:$0xf]
    %v62 = vld [vmem:[%s1 + $0x90] sm:$0xf]
    %v63 = vld [vmem:[%s1 + $0x94] sm:$0xf]
    %v64 = vld [vmem:[%s1 + $0x98] sm:$0xf]
    %v65 = vld [vmem:[%s1 + $0x9c] sm:$0xf]
    %v66 = vld [vmem:[%s1 + $0xa0] sm:$0xf]
    %v67 = vld [vmem:[%s1 + $0xa4] sm:$0xf]
    %v68 = vld [vmem:[%s1 + $0xa8] sm:$0xf]
    %v69 = vld [vmem:[%s1 + $0xac] sm:$0xf]
    %v70 = vld [vmem:[%s1 + $0xb0] sm:$0xf]
    %v71 = vld [vmem:[%s1 + $0xb4] sm:$0xf]
    %v72 = vld [vmem:[%s1 + $0xb8] sm:$0xf]
    %v73 = vld [vmem:[%s1 + $0xbc] sm:$0xf]
    %v74 = vld [vmem:[%s1 + $0xc0] sm:$0xf]
    %v75 = vld [vmem:[%s1 + $0xc4] sm:$0xf]
    %v76 = vld [vmem:[%s2] sm:$0x1]
    %v78 = vlaneseq
    %v79 = vshrl.u32 %v78, 7
    %v80 = vsub.s32 0, %v79
    %v81 = vrot.slane %v76, %v80
    %v85 = vunpack.c.l.s4 1966171168
    %v86 = vunpack.c.0.s8 %v85
    %v87 = vlaneseq
    %v88 = vshrl.u32 %v87, 7
    %v89 = vsub.s32 %v86, %v88
    %v90 = vrot.slane %v25, %v89
    %v91 = vcombine.high %v90, %v90
    %v93 = vunpack.c.l.s4 1966171168
    %v94 = vunpack.c.0.s8 %v93
    %v95 = vlaneseq
    %v96 = vshrl.u32 %v95, 7
    %v97 = vsub.s32 %v94, %v96
    %v98 = vrot.slane %v90, %v97
    %v100 = vunpack.c.l.s4 1966171168
    %v101 = vunpack.c.0.s8 %v100
    %v102 = vlaneseq
    %v103 = vshrl.u32 %v102, 7
    %v104 = vsub.s32 %v101, %v103
    %v105 = vrot.slane %v91, %v104
    %v106 = vcombine.high %v98, %v98
    %v107 = vcombine.high %v105, %v105
    %v161 = vunpack.c.l.b16 %v26
    %v162 = vunpack.c.l.b16 %v27
    %v163 = vunpack.c.l.b16 %v28
    %v164 = vunpack.c.l.b16 %v29
    %v165 = vunpack.c.l.b16 %v30
    %v166 = vunpack.c.l.b16 %v31
    %v167 = vunpack.c.l.b16 %v32
    %v168 = vunpack.c.l.b16 %v33
    %v169 = vunpack.c.l.b16 %v34
    %v170 = vunpack.c.l.b16 %v35
    %v171 = vunpack.c.l.b16 %v36
    %v172 = vunpack.c.l.b16 %v37
    %v173 = vunpack.c.l.b16 %v38
    %v174 = vunpack.c.l.b16 %v39
    %v175 = vunpack.c.l.b16 %v40
    %v176 = vunpack.c.l.b16 %v41
    %v177 = vunpack.c.l.b16 %v42
    %v178 = vunpack.c.l.b16 %v43
    %v179 = vunpack.c.l.b16 %v44
    %v180 = vunpack.c.l.b16 %v45
    %v181 = vunpack.c.l.b16 %v46
    %v182 = vunpack.c.l.b16 %v47
    %v183 = vunpack.c.l.b16 %v48
    %v184 = vunpack.c.l.b16 %v49
    %v185 = vunpack.c.l.b16 %v50
    %v186 = vunpack.c.l.b16 %v51
    %v187 = vunpack.c.l.b16 %v52
    %v188 = vunpack.c.l.b16 %v53
    %v189 = vunpack.c.l.b16 %v54
    %v190 = vunpack.c.l.b16 %v55
    %v191 = vunpack.c.l.b16 %v56
    %v192 = vunpack.c.l.b16 %v57
    %v193 = vunpack.c.l.b16 %v58
    %v194 = vunpack.c.l.b16 %v59
    %v195 = vunpack.c.l.b16 %v60
    %v196 = vunpack.c.l.b16 %v61
    %v197 = vunpack.c.l.b16 %v62
    %v198 = vunpack.c.l.b16 %v63
    %v199 = vunpack.c.l.b16 %v64
    %v200 = vunpack.c.l.b16 %v65
    %v201 = vunpack.c.l.b16 %v66
    %v202 = vunpack.c.l.b16 %v67
    %v203 = vunpack.c.l.b16 %v68
    %v204 = vunpack.c.l.b16 %v69
    %v205 = vunpack.c.l.b16 %v70
    %v206 = vunpack.c.l.b16 %v71
    %v207 = vunpack.c.l.b16 %v72
    %v208 = vunpack.c.l.b16 %v73
    %v209 = vunpack.c.l.b16 %v74
    %v210 = vunpack.c.l.b16 %v75
    %v211 = vpack.c.b16 %v162, %v161
    %v212 = vpack.c.b16 %v164, %v163
    %v213 = vpack.c.b16 %v166, %v165
    %v214 = vpack.c.b16 %v168, %v167
    %v215 = vpack.c.b16 %v170, %v169
    %v216 = vpack.c.b16 %v172, %v171
    %v217 = vpack.c.b16 %v174, %v173
    %v218 = vpack.c.b16 %v176, %v175
    %v219 = vpack.c.b16 %v178, %v177
    %v220 = vpack.c.b16 %v180, %v179
    %v221 = vpack.c.b16 %v182, %v181
    %v222 = vpack.c.b16 %v184, %v183
    %v223 = vpack.c.b16 %v186, %v185
    %v224 = vpack.c.b16 %v188, %v187
    %v225 = vpack.c.b16 %v190, %v189
    %v226 = vpack.c.b16 %v192, %v191
    %v227 = vpack.c.b16 %v194, %v193
    %v228 = vpack.c.b16 %v196, %v195
    %v229 = vpack.c.b16 %v198, %v197
    %v230 = vpack.c.b16 %v200, %v199
    %v231 = vpack.c.b16 %v202, %v201
    %v232 = vpack.c.b16 %v204, %v203
    %v233 = vpack.c.b16 %v206, %v205
    %v234 = vpack.c.b16 %v208, %v207
    %v235 = vpack.c.b16 %v210, %v209
    %vm261 = vcmask 130048
    %v263 = vsel %vm261, %v107, 0
    %265 = vmatprep.subr.bf16.mxu0 0
    %266 = vmatpush1.bf16.msra.mxu0 %v211
    %267 = vmatprep.subr.bf16.mxu0 0
    %268 = vmatpush1.bf16.msra.mxu0 %v212
    %269 = vmatprep.subr.bf16.mxu0 0
    %270 = vmatpush1.bf16.msra.mxu0 %v213
    %271 = vmatprep.subr.bf16.mxu0 0
    %272 = vmatpush1.bf16.msra.mxu0 %v214
    %273 = vmatprep.subr.bf16.mxu0 0
    %274 = vmatpush1.bf16.msra.mxu0 %v215
    %275 = vmatprep.subr.bf16.mxu0 0
    %276 = vmatpush1.bf16.msra.mxu0 %v216
    %277 = vmatprep.subr.bf16.mxu0 0
    %278 = vmatpush1.bf16.msra.mxu0 %v217
    %279 = vmatprep.subr.bf16.mxu0 0
    %280 = vmatpush1.bf16.msra.mxu0 %v218
    %281 = vmatprep.subr.bf16.mxu0 0
    %282 = vmatpush1.bf16.msra.mxu0 %v219
    %283 = vmatprep.subr.bf16.mxu0 0
    %284 = vmatpush1.bf16.msra.mxu0 %v220
    %285 = vmatprep.subr.bf16.mxu0 0
    %286 = vmatpush1.bf16.msra.mxu0 %v221
    %287 = vmatprep.subr.bf16.mxu0 0
    %288 = vmatpush1.bf16.msra.mxu0 %v222
    %289 = vmatprep.subr.bf16.mxu0 0
    %290 = vmatpush1.bf16.msra.mxu0 %v223
    %291 = vmatprep.subr.bf16.mxu0 0
    %292 = vmatpush1.bf16.msra.mxu0 %v224
    %293 = vmatprep.subr.bf16.mxu0 0
    %294 = vmatpush1.bf16.msra.mxu0 %v225
    %295 = vmatprep.subr.bf16.mxu0 0
    %296 = vmatpush1.bf16.msra.mxu0 %v226
    %297 = vmatprep.mubr.bf16.mxu0 %v105
    %298 = vmatmul.mubr.bf16.gmra.mrb[0].mxu0 %v98
    %v299 = vpop.f32.mrb[0].mxu0
    %v300 = vadd.f32 %v81, %v299
    %v301 = vpop.f32.mrb[0].mxu0
    %v302 = vpop.f32.mrb[0].mxu0
    %v303 = vpop.f32.mrb[0].mxu0
    %304 = vdwg.mxu0
    %305 = vmatprep.subr.bf16.mxu0 0
    %306 = vmatpush1.bf16.msra.mxu0 %v227
    %307 = vmatprep.subr.bf16.mxu0 0
    %308 = vmatpush1.bf16.msra.mxu0 %v228
    %309 = vmatprep.subr.bf16.mxu0 0
    %310 = vmatpush1.bf16.msra.mxu0 %v229
    %311 = vmatprep.subr.bf16.mxu0 0
    %312 = vmatpush1.bf16.msra.mxu0 %v230
    %313 = vmatprep.subr.bf16.mxu0 0
    %314 = vmatpush1.bf16.msra.mxu0 %v231
    %315 = vmatprep.subr.bf16.mxu0 0
    %316 = vmatpush1.bf16.msra.mxu0 %v232
    %317 = vmatprep.subr.bf16.mxu0 0
    %318 = vmatpush1.bf16.msra.mxu0 %v233
    %319 = vmatprep.subr.bf16.mxu0 0
    %320 = vmatpush1.bf16.msra.mxu0 %v234
    %321 = vmatprep.subr.bf16.mxu0 0
    %322 = vmatpush1.bf16.msra.mxu0 %v235
    %323 = vmatprep.subr.bf16.mxu0 0
    %324 = vmatpush1.bf16.msra.mxu0 0
    %325 = vmatprep.subr.bf16.mxu0 0
    %326 = vmatpush1.bf16.msra.mxu0 0
    %327 = vmatprep.subr.bf16.mxu0 0
    %328 = vmatpush1.bf16.msra.mxu0 0
    %329 = vmatprep.subr.bf16.mxu0 0
    %330 = vmatpush1.bf16.msra.mxu0 0
    %331 = vmatprep.subr.bf16.mxu0 0
    %332 = vmatpush1.bf16.msra.mxu0 0
    %333 = vmatprep.subr.bf16.mxu0 0
    %334 = vmatpush1.bf16.msra.mxu0 0
    %335 = vmatprep.subr.bf16.mxu0 0
    %336 = vmatpush1.bf16.msra.mxu0 0
    %337 = vmatprep.mubr.bf16.mxu0 %v263
    %338 = vmatmul.mubr.bf16.gmra.mrb[0].mxu0 %v106
    %v339 = vpop.f32.mrb[0].mxu0
    %v340 = vadd.f32 %v300, %v339
    %v341 = vpop.f32.mrb[0].mxu0
    %v342 = vpop.f32.mrb[0].mxu0
    %v343 = vpop.f32.mrb[0].mxu0
    %344 = vdwg.mxu0
    %v345 = vtanh.pop %v340
    %346 = vst [vmem:[#allocation4] sm:$0x3] %v345
    %v347 = vpack.c.bf16 %v345, %v345
    %v348 = vld [vmem:[%s3] sm:$0xf]
    %v349 = vld [vmem:[%s3 + $0x4] sm:$0xf]
    %v350 = vld [vmem:[%s3 + $0x8] sm:$0xf]
    %v351 = vld [vmem:[%s3 + $0xc] sm:$0xf]
    %v352 = vld [vmem:[%s3 + $0x10] sm:$0xf]
    %v353 = vld [vmem:[%s3 + $0x14] sm:$0xf]
    %v354 = vld [vmem:[%s3 + $0x18] sm:$0xf]
    %v355 = vld [vmem:[%s3 + $0x1c] sm:$0xf]
    %v356 = vld [vmem:[%s3 + $0x20] sm:$0xf]
    %v357 = vld [vmem:[%s3 + $0x24] sm:$0xf]
    %v358 = vld [vmem:[%s3 + $0x28] sm:$0xf]
    %v359 = vld [vmem:[%s3 + $0x2c] sm:$0xf]
    %v360 = vld [vmem:[%s3 + $0x30] sm:$0xf]
    %v361 = vld [vmem:[%s3 + $0x34] sm:$0xf]
    %v362 = vld [vmem:[%s3 + $0x38] sm:$0xf]
    %v363 = vld [vmem:[%s3 + $0x3c] sm:$0xf]
    %v364 = vld [vmem:[%s4] sm:$0x1]
    %v366 = vlaneseq
    %v367 = vshrl.u32 %v366, 7
    %v368 = vsub.s32 0, %v367
    %v369 = vrot.slane %v364, %v368
    %v387 = vunpack.c.l.b16 %v348
    %v388 = vunpack.c.l.b16 %v349
    %v389 = vunpack.c.l.b16 %v350
    %v390 = vunpack.c.l.b16 %v351
    %v391 = vunpack.c.l.b16 %v352
    %v392 = vunpack.c.l.b16 %v353
    %v393 = vunpack.c.l.b16 %v354
    %v394 = vunpack.c.l.b16 %v355
    %v395 = vunpack.c.l.b16 %v356
    %v396 = vunpack.c.l.b16 %v357
    %v397 = vunpack.c.l.b16 %v358
    %v398 = vunpack.c.l.b16 %v359
    %v399 = vunpack.c.l.b16 %v360
    %v400 = vunpack.c.l.b16 %v361
    %v401 = vunpack.c.l.b16 %v362
    %v402 = vunpack.c.l.b16 %v363
    %v403 = vpack.c.b16 %v388, %v387
    %v404 = vpack.c.b16 %v390, %v389
    %v405 = vpack.c.b16 %v392, %v391
    %v406 = vpack.c.b16 %v394, %v393
    %v407 = vpack.c.b16 %v396, %v395
    %v408 = vpack.c.b16 %v398, %v397
    %v409 = vpack.c.b16 %v400, %v399
    %v410 = vpack.c.b16 %v402, %v401
    %419 = vmatprep.subr.bf16.mxu0 0
    %420 = vmatpush1.bf16.msra.mxu0 %v403
    %421 = vmatprep.subr.bf16.mxu0 0
    %422 = vmatpush1.bf16.msra.mxu0 %v404
    %423 = vmatprep.subr.bf16.mxu0 0
    %424 = vmatpush1.bf16.msra.mxu0 %v405
    %425 = vmatprep.subr.bf16.mxu0 0
    %426 = vmatpush1.bf16.msra.mxu0 %v406
    %427 = vmatprep.subr.bf16.mxu0 0
    %428 = vmatpush1.bf16.msra.mxu0 %v407
    %429 = vmatprep.subr.bf16.mxu0 0
    %430 = vmatpush1.bf16.msra.mxu0 %v408
    %431 = vmatprep.subr.bf16.mxu0 0
    %432 = vmatpush1.bf16.msra.mxu0 %v409
    %433 = vmatprep.subr.bf16.mxu0 0
    %434 = vmatpush1.bf16.msra.mxu0 %v410
    %435 = vmatprep.subr.bf16.mxu0 0
    %436 = vmatpush1.bf16.msra.mxu0 0
    %437 = vmatprep.subr.bf16.mxu0 0
    %438 = vmatpush1.bf16.msra.mxu0 0
    %439 = vmatprep.subr.bf16.mxu0 0
    %440 = vmatpush1.bf16.msra.mxu0 0
    %441 = vmatprep.subr.bf16.mxu0 0
    %442 = vmatpush1.bf16.msra.mxu0 0
    %443 = vmatprep.subr.bf16.mxu0 0
    %444 = vmatpush1.bf16.msra.mxu0 0
    %445 = vmatprep.subr.bf16.mxu0 0
    %446 = vmatpush1.bf16.msra.mxu0 0
    %447 = vmatprep.subr.bf16.mxu0 0
    %448 = vmatpush1.bf16.msra.mxu0 0
    %449 = vmatprep.subr.bf16.mxu0 0
    %450 = vmatpush1.bf16.msra.mxu0 0
    %451 = vmatprep.mubr.bf16.mxu0 0
    %452 = vmatmul.mubr.bf16.gmra.mrb[0].mxu0 %v347
    %v453 = vpop.f32.mrb[0].mxu0
    %v454 = vadd.f32 %v369, %v453
    %v455 = vpop.f32.mrb[0].mxu0
    %v456 = vpop.f32.mrb[0].mxu0
    %v457 = vpop.f32.mrb[0].mxu0
    %458 = vdwg.mxu0
    %459 = vst [vmem:[#allocation2] sm:$0x3] %v454
    // Predicated region
    $region22: #{net_forward.5} parent=1 // pred_check
      _
    $region23: #{net_forward.5} parent=1 // pred_check_branch
      %461 = sbr.rel (0) target = $region25
    $region24: #{net_forward.5} parent=1 // pred_region
      %s463 = ssub.s32 32, 32
      %464 = vsyncadd [#allocation3], %s463
      %s466 = sshll.u32 [#allocation2], 4
      %s467 = int_to_ptr.vmem [resolvable:$true] %s466
      %469 = dma.vmem_to_hbm [thread:$0]  %s467, 32, %s5, [#allocation3]
    $region25: #{net_forward.5} parent=1 // pred_fallthru
      _
    // Predicated region
    $region26: #{net_forward.5} parent=1 // pred_check
      _
    $region27: #{net_forward.5} parent=1 // pred_check_branch
      %471 = sbr.rel (0) target = $region29
    $region28: #{net_forward.5} parent=1 // pred_region
      %s473 = ssub.s32 32, 32
      %474 = vsyncadd [#allocation5], %s473
      %s476 = sshll.u32 [#allocation4], 4
      %s477 = int_to_ptr.vmem [resolvable:$true] %s476
      %479 = dma.vmem_to_hbm [thread:$0]  %s477, 32, %s6, [#allocation5]
    $region29: #{net_forward.5} parent=1 // pred_fallthru
      _
    // Predicated region
    $region30: #{net_forward.5} parent=1 // pred_check
      _
    $region31: #{net_forward.5} parent=1 // pred_check_branch
      %481 = sbr.rel (0) target = $region33
    $region32: #{net_forward.5} parent=1 // pred_region
      %482 = dma.done [#allocation3], 32
    $region33: #{net_forward.5} parent=1 // pred_fallthru
      _
    // Predicated region
    $region34: #{net_forward.5} parent=1 // pred_check
      _
    $region35: #{net_forward.5} parent=1 // pred_check_branch
      %484 = sbr.rel (0) target = $region37
    $region36: #{net_forward.5} parent=1 // pred_region
      %485 = dma.done [#allocation5], 32
    $region37: #{net_forward.5} parent=1 // pred_fallthru
      _
    %486 = vsyncpa [#allocation3], 1
    %487 = vsyncpa [#allocation5], 1

</llo_original>
